<compile_context>
chip_gen: v7x
topology: tpu7x:2x2x1
jax: 0.10.0
libtpu: 0.0.40
codegen_flags: <defaults>
</compile_context>

<pallas_src>
import jax
import jax.numpy as jnp
from jax.experimental import pallas as pl
from jax.experimental.pallas import tpu as pltpu


def _pool_scale_bias_kernel(x_ref, p_ref, scale_ref, bias_ref, o_ref):
    # x_ref:     (R, k*H*W)        packed rows (m whole samples each), native dtype
    # p_ref:     (k*H*W, k*Ho*Wo)  block-diagonal pooling matrix (0.25 entries)
    # scale_ref: (1, k*Ho*Wo)      f32 per-output-column scale (channel = col % C)
    # bias_ref:  (1, k*Ho*Wo)      f32 per-output-column bias
    # o_ref:     (R, k*Ho*Wo)
    pooled = jnp.dot(
        x_ref[...],
        p_ref[...],
        preferred_element_type=jnp.float32,
        precision=jax.lax.Precision.HIGHEST,
    )
    o_ref[...] = (pooled * scale_ref[...] + bias_ref[...]).astype(o_ref.dtype)


def custom_avg_pool(x, scale, bias, *, block_bytes=8 * 1024 * 1024):
    """x: (N, C, H, W); scale, bias: (1, C, 1, 1) -> (N, C, H//2, W//2)."""
    N, C, H, W = x.shape
    Ho, Wo = H // 2, W // 2
    HW, HoWo = H * W, Ho * Wo

    # --- row packing factor ---------------------------------------------------
    # Each kernel row holds m whole samples (all C channels), so the output last
    # dim is m*C*HoWo.  m > 1 only when C*HoWo < 128 lanes.
    m = 1
    if C * HoWo < 128:
        m = -(-128 // (C * HoWo))          # ceil(128 / (C*HoWo))
        while m > 1 and N % m != 0:        # packing reshape needs m | N
            m -= 1
    k = m * C
    rows_total = N // m
    in_cols, out_cols = k * HW, k * HoWo

    # --- pooling matrix (block-diagonal over the k packed slices) --------------
    #   P0[h*W + w, ho*Wo + wo] = 0.25  iff  h//2 == ho and w//2 == wo
    # Odd trailing rows/cols get no matching column -> dropped (floor behavior).
    # TODO(synk): for large spatial dims (H, W >= ~64) switch to a separable
    # Ph @ x @ Pw form; the dense block-diagonal P stops fitting VMEM there.
    hw = jnp.arange(HW)
    h_idx, w_idx = hw // W, hw % W
    ow = jnp.arange(HoWo)
    ho_idx, wo_idx = ow // Wo, ow % Wo
    p0 = jnp.where(
        (h_idx[:, None] // 2 == ho_idx[None, :])
        & (w_idx[:, None] // 2 == wo_idx[None, :]),
        0.25,
        0.0,
    )
    p = jnp.kron(jnp.eye(k, dtype=p0.dtype), p0).astype(x.dtype)

    # --- per-output-column scale/bias rows (channel of column j is j % C) ------
    scale_row = (
        jnp.tile(jnp.repeat(scale.reshape(C), HoWo), m)
        .reshape(1, out_cols)
        .astype(jnp.float32)
    )
    bias_row = (
        jnp.tile(jnp.repeat(bias.reshape(C), HoWo), m)
        .reshape(1, out_cols)
        .astype(jnp.float32)
    )

    # --- row-block size ---------------------------------------------------------
    itemsize = jnp.dtype(x.dtype).itemsize
    target_rows = max(8, block_bytes // max(1, in_cols * itemsize))
    if rows_total <= 8:
        R = rows_total                         # full dim -> satisfies (8,128) rule
    else:
        R = min(rows_total, max(8, (target_rows // 8) * 8))
        # Keep >= ~8 grid steps on large problems so both v7x cores pipeline.
        min_steps = 8
        if rows_total >= min_steps * 8 and pl.cdiv(rows_total, R) < min_steps:
            R = min(R, max(8, (pl.cdiv(rows_total, min_steps) + 7) // 8 * 8))
    grid = (pl.cdiv(rows_total, R),)           # partial last block handled by Pallas

    x_packed = x.reshape(rows_total, in_cols)  # row-major contiguous -> free reshape

    out_flat = pl.pallas_call(
        _pool_scale_bias_kernel,
        out_shape=jax.ShapeDtypeStruct((rows_total, out_cols), x.dtype),
        grid=grid,
        in_specs=[
            pl.BlockSpec((R, in_cols), lambda i: (i, 0)),         # packed input rows
            pl.BlockSpec((in_cols, out_cols), lambda i: (0, 0)),  # pooling matrix (constant)
            pl.BlockSpec((1, out_cols), lambda i: (0, 0)),        # per-column scale (~1 KiB)
            pl.BlockSpec((1, out_cols), lambda i: (0, 0)),        # per-column bias  (~1 KiB)
        ],
        out_specs=pl.BlockSpec((R, out_cols), lambda i: (i, 0)),
        compiler_params=pltpu.CompilerParams(
            dimension_semantics=("parallel",),        # megacore-shardable on v7x
            vmem_limit_bytes=48 * 1024 * 1024,        # ~22 MiB used; safe on v5e/v6e/v7x
        ),
    )(x_packed, p, scale_row, bias_row)

    return out_flat.reshape(N, C, Ho, Wo)


def reference(x, scale, bias):
    N, C, H, W = x.shape
    pooled = x.reshape(N, C, H // 2, 2, W // 2, 2).mean(axis=(3, 5))
    return pooled * scale + bias


if __name__ == "__main__":
    key = jax.random.PRNGKey(0)
    kx, ks, kb = jax.random.split(key, 3)

    N, C, H, W = 2, 4, 16, 16
    x = jax.random.normal(kx, (N, C, H, W), dtype=jnp.float32)
    # Parameter shapes per the module __init__: (1, C, 1, 1); random so the
    # scale/bias path is actually exercised.
    scale = jax.random.normal(ks, (1, C, 1, 1), dtype=jnp.float32)
    bias = jax.random.normal(kb, (1, C, 1, 1), dtype=jnp.float32)

    out = jax.block_until_ready(custom_avg_pool(x, scale, bias))
    ref = reference(x, scale, bias)

    assert out.shape == (N, C, H // 2, W // 2), out.shape
    assert jnp.allclose(out, ref, atol=1e-5, rtol=1e-5), float(jnp.max(jnp.abs(out - ref)))
    print("KERNEL_OK")
</pallas_src>

<mosaic_0001>
module attributes {stable_mosaic.version = 11 : i64} {
  func.func @_pool_scale_bias_kernel(%arg0: i32, %arg1: memref<2x1024xf32, #tpu.memory_space<vmem>>, %arg2: memref<1024x256xf32, #tpu.memory_space<vmem>>, %arg3: memref<1x256xf32, #tpu.memory_space<vmem>>, %arg4: memref<1x256xf32, #tpu.memory_space<vmem>>, %arg5: memref<2x256xf32, #tpu.memory_space<vmem>>) attributes {dimension_semantics = [#tpu.dimension_semantics<parallel>], iteration_bounds = array<i64: 1>, scalar_prefetch = 0 : i64, scratch_operands = 0 : i64, tpu.core_type = #tpu.core_type<tc>, window_params = [{transform_indices = @transform_0, window_bounds = array<i64: 2, 1024>}, {pipeline_mode = #tpu.pipeline_mode<synchronous>, transform_indices = @transform_1, window_bounds = array<i64: 1024, 256>}, {pipeline_mode = #tpu.pipeline_mode<synchronous>, transform_indices = @transform_2, window_bounds = array<i64: 1, 256>}, {pipeline_mode = #tpu.pipeline_mode<synchronous>, transform_indices = @transform_3, window_bounds = array<i64: 1, 256>}, {transform_indices = @transform_4, window_bounds = array<i64: 2, 256>}]} {
    %c0 = arith.constant 0 : index
    %c0_0 = arith.constant 0 : index
    %0 = vector.load %arg1[%c0, %c0_0] : memref<2x1024xf32, #tpu.memory_space<vmem>>, vector<2x1024xf32>
    %c0_1 = arith.constant 0 : index
    %c0_2 = arith.constant 0 : index
    %1 = vector.load %arg2[%c0_1, %c0_2] : memref<1024x256xf32, #tpu.memory_space<vmem>>, vector<1024x256xf32>
    %cst = arith.constant dense<0.000000e+00> : vector<2x256xf32>
    %2 = tpu.matmul %0, %1, %cst {dimension_numbers = #tpu.dot_dimension_numbers<[1], [0], [0], [1], [0, 0, 1, 1], [], []>, precision = #tpu.contract_precision<fp32>} : vector<2x1024xf32>, vector<1024x256xf32>, vector<2x256xf32> -> vector<2x256xf32>
    %c0_3 = arith.constant 0 : index
    %c0_4 = arith.constant 0 : index
    %3 = vector.load %arg3[%c0_3, %c0_4] : memref<1x256xf32, #tpu.memory_space<vmem>>, vector<1x256xf32>
    %4 = vector.broadcast %3 : vector<1x256xf32> to vector<2x256xf32>
    %5 = arith.mulf %2, %4 : vector<2x256xf32>
    %c0_5 = arith.constant 0 : index
    %c0_6 = arith.constant 0 : index
    %6 = vector.load %arg4[%c0_5, %c0_6] : memref<1x256xf32, #tpu.memory_space<vmem>>, vector<1x256xf32>
    %7 = vector.broadcast %6 : vector<1x256xf32> to vector<2x256xf32>
    %8 = arith.addf %5, %7 : vector<2x256xf32>
    %c0_7 = arith.constant 0 : index
    %c0_8 = arith.constant 0 : index
    %9 = vector.load %arg5[%c0_7, %c0_8] : memref<2x256xf32, #tpu.memory_space<vmem>>, vector<2x256xf32>
    tpu.vector_store %arg5[%c0_7, %c0_8], %8 {strides = array<i32>} : memref<2x256xf32, #tpu.memory_space<vmem>>, vector<2x256xf32>,
    return
  }
  func.func @transform_0(%arg0: i32) -> (i32, i32) {
    %c0_i32 = arith.constant 0 : i32
    %c0_i32_0 = arith.constant 0 : i32
    return %arg0, %c0_i32 : i32, i32
  }
  func.func @transform_1(%arg0: i32) -> (i32, i32) {
    %c0_i32 = arith.constant 0 : i32
    %c0_i32_0 = arith.constant 0 : i32
    %c0_i32_1 = arith.constant 0 : i32
    return %c0_i32, %c0_i32_0 : i32, i32
  }
  func.func @transform_2(%arg0: i32) -> (i32, i32) {
    %c0_i32 = arith.constant 0 : i32
    %c0_i32_0 = arith.constant 0 : i32
    %c0_i32_1 = arith.constant 0 : i32
    return %c0_i32, %c0_i32_0 : i32, i32
  }
  func.func @transform_3(%arg0: i32) -> (i32, i32) {
    %c0_i32 = arith.constant 0 : i32
    %c0_i32_0 = arith.constant 0 : i32
    %c0_i32_1 = arith.constant 0 : i32
    return %c0_i32, %c0_i32_0 : i32, i32
  }
  func.func @transform_4(%arg0: i32) -> (i32, i32) {
    %c0_i32 = arith.constant 0 : i32
    %c0_i32_0 = arith.constant 0 : i32
    return %arg0, %c0_i32 : i32, i32
  }
}

</mosaic_0001>

<llo_original>
// kernel: tpu_custom_call.1
$region0: #{tpu_custom_call.1}
  #allocation0 [shape = 'u32[]', space=smem, size = 0x4, offset = 0x4, fixed_abs, tag = 'smem constant byte address 0x4 - core index']
  #allocation1 [shape = 'u32[144,128]{1,0:T(1,128)}', space=vmem, size = 0x12000, scoped, tag = 'internal scratch']
  %s0 = inlined_call_operand.hbm [shape: f32[2,1024], index: 0, kind: input, shape index: {}]
  %s1 = inlined_call_operand.hbm [shape: f32[1024,256], index: 1, kind: input, shape index: {}]
  %s2 = inlined_call_operand.vmem [shape: f32[1,256], index: 2, kind: input, shape index: {}]
  %s3 = inlined_call_operand.vmem [shape: f32[1,256], index: 3, kind: input, shape index: {}]
  %s4 = inlined_call_operand.hbm [shape: f32[2,256], index: 4, kind: output, shape index: {}]
  %s5 = sld [smem:[#allocation0]]
  $region34: #{tpu_custom_call.1} parent=0
    _
  %s7 = ssub.s32 1, %s5
  %s8 = scalar_select 0, %s7, %s5
  $region1: #{tpu_custom_call.1} parent=0
    #allocation2 [shape = 'u8[8192]{0}', space=vmem, size = 0x2000, scoped, tag = 'input window, operand 0, single buffered']
    #allocation3 [shape = 's32[1]{0}', space=sflag, size = 0x4, scoped, tag = 'scoped memory for tpu_custom_call.1']
    #allocation4 [shape = 's32[1]{0}', space=sflag, size = 0x4, scoped, tag = 'scoped memory for tpu_custom_call.1']
    #allocation5 [shape = 'u8[1048576]{0}', space=vmem, size = 0x100000, scoped, tag = 'input window, operand 1, single buffered']
    #allocation6 [shape = 's32[1]{0}', space=sflag, size = 0x4, scoped, tag = 'scoped memory for tpu_custom_call.1']
    #allocation7 [shape = 'u8[2048]{0}', space=vmem, size = 0x800, scoped, tag = 'output window, operand 0, single buffered']
    %9 = vsyncpa [#allocation3], 0
    %10 = vsyncpa [#allocation6], 0
    %11 = vsyncpa [#allocation4], 0
    // Predicated region
    $region2: #{tpu_custom_call.1} parent=1 // pred_check
      _
    $region3: #{tpu_custom_call.1} parent=1 // pred_check_branch
      %13 = sbr.rel (0) target = $region5
    $region4: #{tpu_custom_call.1} parent=1 // pred_region
      %s15 = ssub.s32 256, 256
      %16 = vsyncadd [#allocation3], %s15
      %s18 = sshll.u32 [#allocation2], 4
      %s19 = int_to_ptr.vmem [resolvable:$true] %s18
      %21 = dma.hbm_to_vmem [thread:$0]  %s0, 256, %s19, [#allocation3]
    $region5: #{tpu_custom_call.1} parent=1 // pred_fallthru
      _
    // Predicated region
    $region6: #{tpu_custom_call.1} parent=1 // pred_check
      _
    $region7: #{tpu_custom_call.1} parent=1 // pred_check_branch
      %23 = sbr.rel (0) target = $region9
    $region8: #{tpu_custom_call.1} parent=1 // pred_region
      %s25 = ssub.s32 32768, 32768
      %26 = vsyncadd [#allocation6], %s25
      %s27 = sshll.u32 [#allocation5], 4
      %s28 = int_to_ptr.vmem [resolvable:$true] %s27
      %33 = dma.hbm_to_vmem [thread:$0]  %s1, 32768, %s28, [#allocation6], 256, 256, 16
    $region9: #{tpu_custom_call.1} parent=1 // pred_fallthru
      _
    // Predicated region
    $region10: #{tpu_custom_call.1} parent=1 // pred_check
      _
    $region11: #{tpu_custom_call.1} parent=1 // pred_check_branch
      %35 = sbr.rel (0) target = $region13
    $region12: #{tpu_custom_call.1} parent=1 // pred_region
      _
    $region13: #{tpu_custom_call.1} parent=1 // pred_fallthru
      _
    // Predicated region
    $region14: #{tpu_custom_call.1} parent=1 // pred_check
      _
    $region15: #{tpu_custom_call.1} parent=1 // pred_check_branch
      %37 = sbr.rel (0) target = $region17
    $region16: #{tpu_custom_call.1} parent=1 // pred_region
      _
    $region17: #{tpu_custom_call.1} parent=1 // pred_fallthru
      _
    // Predicated region
    $region18: #{tpu_custom_call.1} parent=1 // pred_check
      _
    $region19: #{tpu_custom_call.1} parent=1 // pred_check_branch
      %39 = sbr.rel (0) target = $region21
    $region20: #{tpu_custom_call.1} parent=1 // pred_region
      %40 = dma.done [#allocation3], 256
    $region21: #{tpu_custom_call.1} parent=1 // pred_fallthru
      _
    // Predicated region
    $region22: #{tpu_custom_call.1} parent=1 // pred_check
      _
    $region23: #{tpu_custom_call.1} parent=1 // pred_check_branch
      %42 = sbr.rel (0) target = $region25
    $region24: #{tpu_custom_call.1} parent=1 // pred_region
      %43 = dma.done [#allocation6], 32768
    $region25: #{tpu_custom_call.1} parent=1 // pred_fallthru
      _
    %v44 = vld [vmem:[#allocation2] sm:$0xff]
    %v45 = vld [vmem:[#allocation2 + $0x8] sm:$0xff]
    %v46 = vld [vmem:[#allocation5] sm:$0xff]
    %v47 = vld [vmem:[#allocation5 + $0x8] sm:$0xff]
    %v48 = vld [vmem:[#allocation5 + $0x10] sm:$0xff]
    %v49 = vld [vmem:[#allocation5 + $0x18] sm:$0xff]
    %v50 = vld [vmem:[#allocation5 + $0x20] sm:$0xff]
    %v51 = vld [vmem:[#allocation5 + $0x28] sm:$0xff]
    %v52 = vld [vmem:[#allocation5 + $0x30] sm:$0xff]
    %v53 = vld [vmem:[#allocation5 + $0x38] sm:$0xff]
    %v54 = vld [vmem:[#allocation5 + $0x40] sm:$0xff]
    %v55 = vld [vmem:[#allocation5 + $0x48] sm:$0xff]
    %v56 = vld [vmem:[#allocation5 + $0x50] sm:$0xff]
    %v57 = vld [vmem:[#allocation5 + $0x58] sm:$0xff]
    %v58 = vld [vmem:[#allocation5 + $0x60] sm:$0xff]
    %v59 = vld [vmem:[#allocation5 + $0x68] sm:$0xff]
    %v60 = vld [vmem:[#allocation5 + $0x70] sm:$0xff]
    %v61 = vld [vmem:[#allocation5 + $0x78] sm:$0xff]
    %v62 = vld [vmem:[#allocation5 + $0x80] sm:$0xff]
    %v63 = vld [vmem:[#allocation5 + $0x88] sm:$0xff]
    %v64 = vld [vmem:[#allocation5 + $0x90] sm:$0xff]
    %v65 = vld [vmem:[#allocation5 + $0x98] sm:$0xff]
    %v66 = vld [vmem:[#allocation5 + $0xa0] sm:$0xff]
    %v67 = vld [vmem:[#allocation5 + $0xa8] sm:$0xff]
    %v68 = vld [vmem:[#allocation5 + $0xb0] sm:$0xff]
    %v69 = vld [vmem:[#allocation5 + $0xb8] sm:$0xff]
    %v70 = vld [vmem:[#allocation5 + $0xc0] sm:$0xff]
    %v71 = vld [vmem:[#allocation5 + $0xc8] sm:$0xff]
    %v72 = vld [vmem:[#allocation5 + $0xd0] sm:$0xff]
    %v73 = vld [vmem:[#allocation5 + $0xd8] sm:$0xff]
    %v74 = vld [vmem:[#allocation5 + $0xe0] sm:$0xff]
    %v75 = vld [vmem:[#allocation5 + $0xe8] sm:$0xff]
    %v76 = vld [vmem:[#allocation5 + $0xf0] sm:$0xff]
    %v77 = vld [vmem:[#allocation5 + $0xf8] sm:$0xff]
    %v78 = vld [vmem:[#allocation5 + $0x100] sm:$0xff]
    %v79 = vld [vmem:[#allocation5 + $0x108] sm:$0xff]
    %v80 = vld [vmem:[#allocation5 + $0x110] sm:$0xff]
    %v81 = vld [vmem:[#allocation5 + $0x118] sm:$0xff]
    %v82 = vld [vmem:[#allocation5 + $0x120] sm:$0xff]
    %v83 = vld [vmem:[#allocation5 + $0x128] sm:$0xff]
    %v84 = vld [vmem:[#allocation5 + $0x130] sm:$0xff]
    %v85 = vld [vmem:[#allocation5 + $0x138] sm:$0xff]
    %v86 = vld [vmem:[#allocation5 + $0x140] sm:$0xff]
    %v87 = vld [vmem:[#allocation5 + $0x148] sm:$0xff]
    %v88 = vld [vmem:[#allocation5 + $0x150] sm:$0xff]
    %v89 = vld [vmem:[#allocation5 + $0x158] sm:$0xff]
    %v90 = vld [vmem:[#allocation5 + $0x160] sm:$0xff]
    %v91 = vld [vmem:[#allocation5 + $0x168] sm:$0xff]
    %v92 = vld [vmem:[#allocation5 + $0x170] sm:$0xff]
    %v93 = vld [vmem:[#allocation5 + $0x178] sm:$0xff]
    %v94 = vld [vmem:[#allocation5 + $0x180] sm:$0xff]
    %v95 = vld [vmem:[#allocation5 + $0x188] sm:$0xff]
    %v96 = vld [vmem:[#allocation5 + $0x190] sm:$0xff]
    %v97 = vld [vmem:[#allocation5 + $0x198] sm:$0xff]
    %v98 = vld [vmem:[#allocation5 + $0x1a0] sm:$0xff]
    %v99 = vld [vmem:[#allocation5 + $0x1a8] sm:$0xff]
    %v100 = vld [vmem:[#allocation5 + $0x1b0] sm:$0xff]
    %v101 = vld [vmem:[#allocation5 + $0x1b8] sm:$0xff]
    %v102 = vld [vmem:[#allocation5 + $0x1c0] sm:$0xff]
    %v103 = vld [vmem:[#allocation5 + $0x1c8] sm:$0xff]
    %v104 = vld [vmem:[#allocation5 + $0x1d0] sm:$0xff]
    %v105 = vld [vmem:[#allocation5 + $0x1d8] sm:$0xff]
    %v106 = vld [vmem:[#allocation5 + $0x1e0] sm:$0xff]
    %v107 = vld [vmem:[#allocation5 + $0x1e8] sm:$0xff]
    %v108 = vld [vmem:[#allocation5 + $0x1f0] sm:$0xff]
    %v109 = vld [vmem:[#allocation5 + $0x1f8] sm:$0xff]
    %v110 = vld [vmem:[#allocation5 + $0x200] sm:$0xff]
    %v111 = vld [vmem:[#allocation5 + $0x208] sm:$0xff]
    %v112 = vld [vmem:[#allocation5 + $0x210] sm:$0xff]
    %v113 = vld [vmem:[#allocation5 + $0x218] sm:$0xff]
    %v114 = vld [vmem:[#allocation5 + $0x220] sm:$0xff]
    %v115 = vld [vmem:[#allocation5 + $0x228] sm:$0xff]
    %v116 = vld [vmem:[#allocation5 + $0x230] sm:$0xff]
    %v117 = vld [vmem:[#allocation5 + $0x238] sm:$0xff]
    %v118 = vld [vmem:[#allocation5 + $0x240] sm:$0xff]
    %v119 = vld [vmem:[#allocation5 + $0x248] sm:$0xff]
    %v120 = vld [vmem:[#allocation5 + $0x250] sm:$0xff]
    %v121 = vld [vmem:[#allocation5 + $0x258] sm:$0xff]
    %v122 = vld [vmem:[#allocation5 + $0x260] sm:$0xff]
    %v123 = vld [vmem:[#allocation5 + $0x268] sm:$0xff]
    %v124 = vld [vmem:[#allocation5 + $0x270] sm:$0xff]
    %v125 = vld [vmem:[#allocation5 + $0x278] sm:$0xff]
    %v126 = vld [vmem:[#allocation5 + $0x280] sm:$0xff]
    %v127 = vld [vmem:[#allocation5 + $0x288] sm:$0xff]
    %v128 = vld [vmem:[#allocation5 + $0x290] sm:$0xff]
    %v129 = vld [vmem:[#allocation5 + $0x298] sm:$0xff]
    %v130 = vld [vmem:[#allocation5 + $0x2a0] sm:$0xff]
    %v131 = vld [vmem:[#allocation5 + $0x2a8] sm:$0xff]
    %v132 = vld [vmem:[#allocation5 + $0x2b0] sm:$0xff]
    %v133 = vld [vmem:[#allocation5 + $0x2b8] sm:$0xff]
    %v134 = vld [vmem:[#allocation5 + $0x2c0] sm:$0xff]
    %v135 = vld [vmem:[#allocation5 + $0x2c8] sm:$0xff]
    %v136 = vld [vmem:[#allocation5 + $0x2d0] sm:$0xff]
    %v137 = vld [vmem:[#allocation5 + $0x2d8] sm:$0xff]
    %v138 = vld [vmem:[#allocation5 + $0x2e0] sm:$0xff]
    %v139 = vld [vmem:[#allocation5 + $0x2e8] sm:$0xff]
    %v140 = vld [vmem:[#allocation5 + $0x2f0] sm:$0xff]
    %v141 = vld [vmem:[#allocation5 + $0x2f8] sm:$0xff]
    %v142 = vld [vmem:[#allocation5 + $0x300] sm:$0xff]
    %v143 = vld [vmem:[#allocation5 + $0x308] sm:$0xff]
    %v144 = vld [vmem:[#allocation5 + $0x310] sm:$0xff]
    %v145 = vld [vmem:[#allocation5 + $0x318] sm:$0xff]
    %v146 = vld [vmem:[#allocation5 + $0x320] sm:$0xff]
    %v147 = vld [vmem:[#allocation5 + $0x328] sm:$0xff]
    %v148 = vld [vmem:[#allocation5 + $0x330] sm:$0xff]
    %v149 = vld [vmem:[#allocation5 + $0x338] sm:$0xff]
    %v150 = vld [vmem:[#allocation5 + $0x340] sm:$0xff]
    %v151 = vld [vmem:[#allocation5 + $0x348] sm:$0xff]
    %v152 = vld [vmem:[#allocation5 + $0x350] sm:$0xff]
    %v153 = vld [vmem:[#allocation5 + $0x358] sm:$0xff]
    %v154 = vld [vmem:[#allocation5 + $0x360] sm:$0xff]
    %v155 = vld [vmem:[#allocation5 + $0x368] sm:$0xff]
    %v156 = vld [vmem:[#allocation5 + $0x370] sm:$0xff]
    %v157 = vld [vmem:[#allocation5 + $0x378] sm:$0xff]
    %v158 = vld [vmem:[#allocation5 + $0x380] sm:$0xff]
    %v159 = vld [vmem:[#allocation5 + $0x388] sm:$0xff]
    %v160 = vld [vmem:[#allocation5 + $0x390] sm:$0xff]
    %v161 = vld [vmem:[#allocation5 + $0x398] sm:$0xff]
    %v162 = vld [vmem:[#allocation5 + $0x3a0] sm:$0xff]
    %v163 = vld [vmem:[#allocation5 + $0x3a8] sm:$0xff]
    %v164 = vld [vmem:[#allocation5 + $0x3b0] sm:$0xff]
    %v165 = vld [vmem:[#allocation5 + $0x3b8] sm:$0xff]
    %v166 = vld [vmem:[#allocation5 + $0x3c0] sm:$0xff]
    %v167 = vld [vmem:[#allocation5 + $0x3c8] sm:$0xff]
    %v168 = vld [vmem:[#allocation5 + $0x3d0] sm:$0xff]
    %v169 = vld [vmem:[#allocation5 + $0x3d8] sm:$0xff]
    %v170 = vld [vmem:[#allocation5 + $0x3e0] sm:$0xff]
    %v171 = vld [vmem:[#allocation5 + $0x3e8] sm:$0xff]
    %v172 = vld [vmem:[#allocation5 + $0x3f0] sm:$0xff]
    %v173 = vld [vmem:[#allocation5 + $0x3f8] sm:$0xff]
    %v174 = vld [vmem:[#allocation5 + $0x400] sm:$0xff]
    %v175 = vld [vmem:[#allocation5 + $0x408] sm:$0xff]
    %v176 = vld [vmem:[#allocation5 + $0x410] sm:$0xff]
    %v177 = vld [vmem:[#allocation5 + $0x418] sm:$0xff]
    %v178 = vld [vmem:[#allocation5 + $0x420] sm:$0xff]
    %v179 = vld [vmem:[#allocation5 + $0x428] sm:$0xff]
    %v180 = vld [vmem:[#allocation5 + $0x430] sm:$0xff]
    %v181 = vld [vmem:[#allocation5 + $0x438] sm:$0xff]
    %v182 = vld [vmem:[#allocation5 + $0x440] sm:$0xff]
    %v183 = vld [vmem:[#allocation5 + $0x448] sm:$0xff]
    %v184 = vld [vmem:[#allocation5 + $0x450] sm:$0xff]
    %v185 = vld [vmem:[#allocation5 + $0x458] sm:$0xff]
    %v186 = vld [vmem:[#allocation5 + $0x460] sm:$0xff]
    %v187 = vld [vmem:[#allocation5 + $0x468] sm:$0xff]
    %v188 = vld [vmem:[#allocation5 + $0x470] sm:$0xff]
    %v189 = vld [vmem:[#allocation5 + $0x478] sm:$0xff]
    %v190 = vld [vmem:[#allocation5 + $0x480] sm:$0xff]
    %v191 = vld [vmem:[#allocation5 + $0x488] sm:$0xff]
    %v192 = vld [vmem:[#allocation5 + $0x490] sm:$0xff]
    %v193 = vld [vmem:[#allocation5 + $0x498] sm:$0xff]
    %v194 = vld [vmem:[#allocation5 + $0x4a0] sm:$0xff]
    %v195 = vld [vmem:[#allocation5 + $0x4a8] sm:$0xff]
    %v196 = vld [vmem:[#allocation5 + $0x4b0] sm:$0xff]
    %v197 = vld [vmem:[#allocation5 + $0x4b8] sm:$0xff]
    %v198 = vld [vmem:[#allocation5 + $0x4c0] sm:$0xff]
    %v199 = vld [vmem:[#allocation5 + $0x4c8] sm:$0xff]
    %v200 = vld [vmem:[#allocation5 + $0x4d0] sm:$0xff]
    %v201 = vld [vmem:[#allocation5 + $0x4d8] sm:$0xff]
    %v202 = vld [vmem:[#allocation5 + $0x4e0] sm:$0xff]
    %v203 = vld [vmem:[#allocation5 + $0x4e8] sm:$0xff]
    %v204 = vld [vmem:[#allocation5 + $0x4f0] sm:$0xff]
    %v205 = vld [vmem:[#allocation5 + $0x4f8] sm:$0xff]
    %v206 = vld [vmem:[#allocation5 + $0x500] sm:$0xff]
    %v207 = vld [vmem:[#allocation5 + $0x508] sm:$0xff]
    %v208 = vld [vmem:[#allocation5 + $0x510] sm:$0xff]
    %v209 = vld [vmem:[#allocation5 + $0x518] sm:$0xff]
    %v210 = vld [vmem:[#allocation5 + $0x520] sm:$0xff]
    %v211 = vld [vmem:[#allocation5 + $0x528] sm:$0xff]
    %v212 = vld [vmem:[#allocation5 + $0x530] sm:$0xff]
    %v213 = vld [vmem:[#allocation5 + $0x538] sm:$0xff]
    %v214 = vld [vmem:[#allocation5 + $0x540] sm:$0xff]
    %v215 = vld [vmem:[#allocation5 + $0x548] sm:$0xff]
    %v216 = vld [vmem:[#allocation5 + $0x550] sm:$0xff]
    %v217 = vld [vmem:[#allocation5 + $0x558] sm:$0xff]
    %v218 = vld [vmem:[#allocation5 + $0x560] sm:$0xff]
    %v219 = vld [vmem:[#allocation5 + $0x568] sm:$0xff]
    %v220 = vld [vmem:[#allocation5 + $0x570] sm:$0xff]
    %v221 = vld [vmem:[#allocation5 + $0x578] sm:$0xff]
    %v222 = vld [vmem:[#allocation5 + $0x580] sm:$0xff]
    %v223 = vld [vmem:[#allocation5 + $0x588] sm:$0xff]
    %v224 = vld [vmem:[#allocation5 + $0x590] sm:$0xff]
    %v225 = vld [vmem:[#allocation5 + $0x598] sm:$0xff]
    %v226 = vld [vmem:[#allocation5 + $0x5a0] sm:$0xff]
    %v227 = vld [vmem:[#allocation5 + $0x5a8] sm:$0xff]
    %v228 = vld [vmem:[#allocation5 + $0x5b0] sm:$0xff]
    %v229 = vld [vmem:[#allocation5 + $0x5b8] sm:$0xff]
    %v230 = vld [vmem:[#allocation5 + $0x5c0] sm:$0xff]
    %v231 = vld [vmem:[#allocation5 + $0x5c8] sm:$0xff]
    %v232 = vld [vmem:[#allocation5 + $0x5d0] sm:$0xff]
    %v233 = vld [vmem:[#allocation5 + $0x5d8] sm:$0xff]
    %v234 = vld [vmem:[#allocation5 + $0x5e0] sm:$0xff]
    %v235 = vld [vmem:[#allocation5 + $0x5e8] sm:$0xff]
    %v236 = vld [vmem:[#allocation5 + $0x5f0] sm:$0xff]
    %v237 = vld [vmem:[#allocation5 + $0x5f8] sm:$0xff]
    %v238 = vld [vmem:[#allocation5 + $0x600] sm:$0xff]
    %v239 = vld [vmem:[#allocation5 + $0x608] sm:$0xff]
    %v240 = vld [vmem:[#allocation5 + $0x610] sm:$0xff]
    %v241 = vld [vmem:[#allocation5 + $0x618] sm:$0xff]
    %v242 = vld [vmem:[#allocation5 + $0x620] sm:$0xff]
    %v243 = vld [vmem:[#allocation5 + $0x628] sm:$0xff]
    %v244 = vld [vmem:[#allocation5 + $0x630] sm:$0xff]
    %v245 = vld [vmem:[#allocation5 + $0x638] sm:$0xff]
    %v246 = vld [vmem:[#allocation5 + $0x640] sm:$0xff]
    %v247 = vld [vmem:[#allocation5 + $0x648] sm:$0xff]
    %v248 = vld [vmem:[#allocation5 + $0x650] sm:$0xff]
    %v249 = vld [vmem:[#allocation5 + $0x658] sm:$0xff]
    %v250 = vld [vmem:[#allocation5 + $0x660] sm:$0xff]
    %v251 = vld [vmem:[#allocation5 + $0x668] sm:$0xff]
    %v252 = vld [vmem:[#allocation5 + $0x670] sm:$0xff]
    %v253 = vld [vmem:[#allocation5 + $0x678] sm:$0xff]
    %v254 = vld [vmem:[#allocation5 + $0x680] sm:$0xff]
    %v255 = vld [vmem:[#allocation5 + $0x688] sm:$0xff]
    %v256 = vld [vmem:[#allocation5 + $0x690] sm:$0xff]
    %v257 = vld [vmem:[#allocation5 + $0x698] sm:$0xff]
    %v258 = vld [vmem:[#allocation5 + $0x6a0] sm:$0xff]
    %v259 = vld [vmem:[#allocation5 + $0x6a8] sm:$0xff]
    %v260 = vld [vmem:[#allocation5 + $0x6b0] sm:$0xff]
    %v261 = vld [vmem:[#allocation5 + $0x6b8] sm:$0xff]
    %v262 = vld [vmem:[#allocation5 + $0x6c0] sm:$0xff]
    %v263 = vld [vmem:[#allocation5 + $0x6c8] sm:$0xff]
    %v264 = vld [vmem:[#allocation5 + $0x6d0] sm:$0xff]
    %v265 = vld [vmem:[#allocation5 + $0x6d8] sm:$0xff]
    %v266 = vld [vmem:[#allocation5 + $0x6e0] sm:$0xff]
    %v267 = vld [vmem:[#allocation5 + $0x6e8] sm:$0xff]
    %v268 = vld [vmem:[#allocation5 + $0x6f0] sm:$0xff]
    %v269 = vld [vmem:[#allocation5 + $0x6f8] sm:$0xff]
    %v270 = vld [vmem:[#allocation5 + $0x700] sm:$0xff]
    %v271 = vld [vmem:[#allocation5 + $0x708] sm:$0xff]
    %v272 = vld [vmem:[#allocation5 + $0x710] sm:$0xff]
    %v273 = vld [vmem:[#allocation5 + $0x718] sm:$0xff]
    %v274 = vld [vmem:[#allocation5 + $0x720] sm:$0xff]
    %v275 = vld [vmem:[#allocation5 + $0x728] sm:$0xff]
    %v276 = vld [vmem:[#allocation5 + $0x730] sm:$0xff]
    %v277 = vld [vmem:[#allocation5 + $0x738] sm:$0xff]
    %v278 = vld [vmem:[#allocation5 + $0x740] sm:$0xff]
    %v279 = vld [vmem:[#allocation5 + $0x748] sm:$0xff]
    %v280 = vld [vmem:[#allocation5 + $0x750] sm:$0xff]
    %v281 = vld [vmem:[#allocation5 + $0x758] sm:$0xff]
    %v282 = vld [vmem:[#allocation5 + $0x760] sm:$0xff]
    %v283 = vld [vmem:[#allocation5 + $0x768] sm:$0xff]
    %v284 = vld [vmem:[#allocation5 + $0x770] sm:$0xff]
    %v285 = vld [vmem:[#allocation5 + $0x778] sm:$0xff]
    %v286 = vld [vmem:[#allocation5 + $0x780] sm:$0xff]
    %v287 = vld [vmem:[#allocation5 + $0x788] sm:$0xff]
    %v288 = vld [vmem:[#allocation5 + $0x790] sm:$0xff]
    %v289 = vld [vmem:[#allocation5 + $0x798] sm:$0xff]
    %v290 = vld [vmem:[#allocation5 + $0x7a0] sm:$0xff]
    %v291 = vld [vmem:[#allocation5 + $0x7a8] sm:$0xff]
    %v292 = vld [vmem:[#allocation5 + $0x7b0] sm:$0xff]
    %v293 = vld [vmem:[#allocation5 + $0x7b8] sm:$0xff]
    %v294 = vld [vmem:[#allocation5 + $0x7c0] sm:$0xff]
    %v295 = vld [vmem:[#allocation5 + $0x7c8] sm:$0xff]
    %v296 = vld [vmem:[#allocation5 + $0x7d0] sm:$0xff]
    %v297 = vld [vmem:[#allocation5 + $0x7d8] sm:$0xff]
    %v298 = vld [vmem:[#allocation5 + $0x7e0] sm:$0xff]
    %v299 = vld [vmem:[#allocation5 + $0x7e8] sm:$0xff]
    %v300 = vld [vmem:[#allocation5 + $0x7f0] sm:$0xff]
    %v301 = vld [vmem:[#allocation5 + $0x7f8] sm:$0xff]
    %v304 = vcombine.high %v44, %v44
    %v306 = vunpack.c.l.s4 1983009808
    %v307 = vunpack.c.0.s8 %v306
    %v308 = vlaneseq
    %v309 = vshrl.u32 %v308, 7
    %v310 = vsub.s32 %v307, %v309
    %v311 = vrot.slane %v44, %v310
    %v313 = vunpack.c.l.s4 1983009808
    %v314 = vunpack.c.0.s8 %v313
    %v315 = vlaneseq
    %v316 = vshrl.u32 %v315, 7
    %v317 = vsub.s32 %v314, %v316
    %v318 = vrot.slane %v304, %v317
    %v319 = vcombine.high %v311, %v311
    %v320 = vcombine.high %v318, %v318
    %v321 = vcombine.high %v45, %v45
    %v323 = vunpack.c.l.s4 1983009808
    %v324 = vunpack.c.0.s8 %v323
    %v325 = vlaneseq
    %v326 = vshrl.u32 %v325, 7
    %v327 = vsub.s32 %v324, %v326
    %v328 = vrot.slane %v45, %v327
    %v330 = vunpack.c.l.s4 1983009808
    %v331 = vunpack.c.0.s8 %v330
    %v332 = vlaneseq
    %v333 = vshrl.u32 %v332, 7
    %v334 = vsub.s32 %v331, %v333
    %v335 = vrot.slane %v321, %v334
    %v336 = vcombine.high %v328, %v328
    %v337 = vcombine.high %v335, %v335
    %v346 = vand.u32 %v47, 4294901760
    %347 = vmatprep.subr.mxu0 %v346
    %v348 = vand.u32 %v46, 4294901760
    %349 = vmatpush1.msra.mxu0 %v348
    %v350 = vand.u32 %v49, 4294901760
    %351 = vmatprep.subr.mxu0 %v350
    %v352 = vand.u32 %v48, 4294901760
    %353 = vmatpush1.msra.mxu0 %v352
    %v354 = vand.u32 %v51, 4294901760
    %355 = vmatprep.subr.mxu0 %v354
    %v356 = vand.u32 %v50, 4294901760
    %357 = vmatpush1.msra.mxu0 %v356
    %v358 = vand.u32 %v53, 4294901760
    %359 = vmatprep.subr.mxu0 %v358
    %v360 = vand.u32 %v52, 4294901760
    %361 = vmatpush1.msra.mxu0 %v360
    %v362 = vand.u32 %v55, 4294901760
    %363 = vmatprep.subr.mxu0 %v362
    %v364 = vand.u32 %v54, 4294901760
    %365 = vmatpush1.msra.mxu0 %v364
    %v366 = vand.u32 %v57, 4294901760
    %367 = vmatprep.subr.mxu0 %v366
    %v368 = vand.u32 %v56, 4294901760
    %369 = vmatpush1.msra.mxu0 %v368
    %v370 = vand.u32 %v59, 4294901760
    %371 = vmatprep.subr.mxu0 %v370
    %v372 = vand.u32 %v58, 4294901760
    %373 = vmatpush1.msra.mxu0 %v372
    %v374 = vand.u32 %v61, 4294901760
    %375 = vmatprep.subr.mxu0 %v374
    %v376 = vand.u32 %v60, 4294901760
    %377 = vmatpush1.msra.mxu0 %v376
    %v378 = vand.u32 %v63, 4294901760
    %379 = vmatprep.subr.mxu0 %v378
    %v380 = vand.u32 %v62, 4294901760
    %381 = vmatpush1.msra.mxu0 %v380
    %v382 = vand.u32 %v65, 4294901760
    %383 = vmatprep.subr.mxu0 %v382
    %v384 = vand.u32 %v64, 4294901760
    %385 = vmatpush1.msra.mxu0 %v384
    %v386 = vand.u32 %v67, 4294901760
    %387 = vmatprep.subr.mxu0 %v386
    %v388 = vand.u32 %v66, 4294901760
    %389 = vmatpush1.msra.mxu0 %v388
    %v390 = vand.u32 %v69, 4294901760
    %391 = vmatprep.subr.mxu0 %v390
    %v392 = vand.u32 %v68, 4294901760
    %393 = vmatpush1.msra.mxu0 %v392
    %v394 = vand.u32 %v71, 4294901760
    %395 = vmatprep.subr.mxu0 %v394
    %v396 = vand.u32 %v70, 4294901760
    %397 = vmatpush1.msra.mxu0 %v396
    %v398 = vand.u32 %v73, 4294901760
    %399 = vmatprep.subr.mxu0 %v398
    %v400 = vand.u32 %v72, 4294901760
    %401 = vmatpush1.msra.mxu0 %v400
    %v402 = vand.u32 %v75, 4294901760
    %403 = vmatprep.subr.mxu0 %v402
    %v404 = vand.u32 %v74, 4294901760
    %405 = vmatpush1.msra.mxu0 %v404
    %v406 = vand.u32 %v77, 4294901760
    %407 = vmatprep.subr.mxu0 %v406
    %v408 = vand.u32 %v76, 4294901760
    %409 = vmatpush1.msra.mxu0 %v408
    %v410 = vand.u32 %v79, 4294901760
    %411 = vmatprep.subr.mxu0 %v410
    %v412 = vand.u32 %v78, 4294901760
    %413 = vmatpush1.msra.mxu0 %v412
    %v414 = vand.u32 %v81, 4294901760
    %415 = vmatprep.subr.mxu0 %v414
    %v416 = vand.u32 %v80, 4294901760
    %417 = vmatpush1.msra.mxu0 %v416
    %v418 = vand.u32 %v83, 4294901760
    %419 = vmatprep.subr.mxu0 %v418
    %v420 = vand.u32 %v82, 4294901760
    %421 = vmatpush1.msra.mxu0 %v420
    %v422 = vand.u32 %v85, 4294901760
    %423 = vmatprep.subr.mxu0 %v422
    %v424 = vand.u32 %v84, 4294901760
    %425 = vmatpush1.msra.mxu0 %v424
    %v426 = vand.u32 %v87, 4294901760
    %427 = vmatprep.subr.mxu0 %v426
    %v428 = vand.u32 %v86, 4294901760
    %429 = vmatpush1.msra.mxu0 %v428
    %v430 = vand.u32 %v89, 4294901760
    %431 = vmatprep.subr.mxu0 %v430
    %v432 = vand.u32 %v88, 4294901760
    %433 = vmatpush1.msra.mxu0 %v432
    %v434 = vand.u32 %v91, 4294901760
    %435 = vmatprep.subr.mxu0 %v434
    %v436 = vand.u32 %v90, 4294901760
    %437 = vmatpush1.msra.mxu0 %v436
    %v438 = vand.u32 %v93, 4294901760
    %439 = vmatprep.subr.mxu0 %v438
    %v440 = vand.u32 %v92, 4294901760
    %441 = vmatpush1.msra.mxu0 %v440
    %v442 = vand.u32 %v95, 4294901760
    %443 = vmatprep.subr.mxu0 %v442
    %v444 = vand.u32 %v94, 4294901760
    %445 = vmatpush1.msra.mxu0 %v444
    %v446 = vand.u32 %v97, 4294901760
    %447 = vmatprep.subr.mxu0 %v446
    %v448 = vand.u32 %v96, 4294901760
    %449 = vmatpush1.msra.mxu0 %v448
    %v450 = vand.u32 %v99, 4294901760
    %451 = vmatprep.subr.mxu0 %v450
    %v452 = vand.u32 %v98, 4294901760
    %453 = vmatpush1.msra.mxu0 %v452
    %v454 = vand.u32 %v101, 4294901760
    %455 = vmatprep.subr.mxu0 %v454
    %v456 = vand.u32 %v100, 4294901760
    %457 = vmatpush1.msra.mxu0 %v456
    %v458 = vand.u32 %v103, 4294901760
    %459 = vmatprep.subr.mxu0 %v458
    %v460 = vand.u32 %v102, 4294901760
    %461 = vmatpush1.msra.mxu0 %v460
    %v462 = vand.u32 %v105, 4294901760
    %463 = vmatprep.subr.mxu0 %v462
    %v464 = vand.u32 %v104, 4294901760
    %465 = vmatpush1.msra.mxu0 %v464
    %v466 = vand.u32 %v107, 4294901760
    %467 = vmatprep.subr.mxu0 %v466
    %v468 = vand.u32 %v106, 4294901760
    %469 = vmatpush1.msra.mxu0 %v468
    %v470 = vand.u32 %v109, 4294901760
    %471 = vmatprep.subr.mxu0 %v470
    %v472 = vand.u32 %v108, 4294901760
    %473 = vmatpush1.msra.mxu0 %v472
    %v474 = vand.u32 %v319, 4294901760
    %v475 = vsub.f32 %v319, %v474
    %v476 = vand.u32 %v475, 4294901760
    %v477 = vsub.f32 %v475, %v476
    %v478 = vand.u32 %v477, 4294901760
    %479 = vmatprep.mubr.f32.mxu0 %v478
    %v480 = vand.u32 %v311, 4294901760
    %v481 = vsub.f32 %v311, %v480
    %v482 = vand.u32 %v481, 4294901760
    %v483 = vsub.f32 %v481, %v482
    %v484 = vand.u32 %v483, 4294901760
    %485 = vmatmul.mubr.f32.gmra.mrb[0].mxu0 %v484
    %v486 = vpop.f32.mrb[0].mxu0
    %v487 = vadd.f32 0.0, %v486
    %v488 = vpop.f32.mrb[0].mxu0
    %v489 = vadd.f32 0.0, %v488
    %490 = vdwg.mxu0
    %v491 = vand.u32 %v47, 4294901760
    %v492 = vsub.f32 %v47, %v491
    %v493 = vand.u32 %v492, 4294901760
    %v494 = vsub.f32 %v492, %v493
    %v495 = vand.u32 %v494, 4294901760
    %496 = vmatprep.subr.mxu0 %v495
    %v497 = vand.u32 %v46, 4294901760
    %v498 = vsub.f32 %v46, %v497
    %v499 = vand.u32 %v498, 4294901760
    %v500 = vsub.f32 %v498, %v499
    %v501 = vand.u32 %v500, 4294901760
    %502 = vmatpush1.msra.mxu0 %v501
    %v503 = vand.u32 %v49, 4294901760
    %v504 = vsub.f32 %v49, %v503
    %v505 = vand.u32 %v504, 4294901760
    %v506 = vsub.f32 %v504, %v505
    %v507 = vand.u32 %v506, 4294901760
    %508 = vmatprep.subr.mxu0 %v507
    %v509 = vand.u32 %v48, 4294901760
    %v510 = vsub.f32 %v48, %v509
    %v511 = vand.u32 %v510, 4294901760
    %v512 = vsub.f32 %v510, %v511
    %v513 = vand.u32 %v512, 4294901760
    %514 = vmatpush1.msra.mxu0 %v513
    %v515 = vand.u32 %v51, 4294901760
    %v516 = vsub.f32 %v51, %v515
    %v517 = vand.u32 %v516, 4294901760
    %v518 = vsub.f32 %v516, %v517
    %v519 = vand.u32 %v518, 4294901760
    %520 = vmatprep.subr.mxu0 %v519
    %v521 = vand.u32 %v50, 4294901760
    %v522 = vsub.f32 %v50, %v521
    %v523 = vand.u32 %v522, 4294901760
    %v524 = vsub.f32 %v522, %v523
    %v525 = vand.u32 %v524, 4294901760
    %526 = vmatpush1.msra.mxu0 %v525
    %v527 = vand.u32 %v53, 4294901760
    %v528 = vsub.f32 %v53, %v527
    %v529 = vand.u32 %v528, 4294901760
    %v530 = vsub.f32 %v528, %v529
    %v531 = vand.u32 %v530, 4294901760
    %532 = vmatprep.subr.mxu0 %v531
    %v533 = vand.u32 %v52, 4294901760
    %v534 = vsub.f32 %v52, %v533
    %v535 = vand.u32 %v534, 4294901760
    %v536 = vsub.f32 %v534, %v535
    %v537 = vand.u32 %v536, 4294901760
    %538 = vmatpush1.msra.mxu0 %v537
    %v539 = vand.u32 %v55, 4294901760
    %v540 = vsub.f32 %v55, %v539
    %v541 = vand.u32 %v540, 4294901760
    %v542 = vsub.f32 %v540, %v541
    %v543 = vand.u32 %v542, 4294901760
    %544 = vmatprep.subr.mxu0 %v543
    %v545 = vand.u32 %v54, 4294901760
    %v546 = vsub.f32 %v54, %v545
    %v547 = vand.u32 %v546, 4294901760
    %v548 = vsub.f32 %v546, %v547
    %v549 = vand.u32 %v548, 4294901760
    %550 = vmatpush1.msra.mxu0 %v549
    %v551 = vand.u32 %v57, 4294901760
    %v552 = vsub.f32 %v57, %v551
    %v553 = vand.u32 %v552, 4294901760
    %v554 = vsub.f32 %v552, %v553
    %v555 = vand.u32 %v554, 4294901760
    %556 = vmatprep.subr.mxu0 %v555
    %v557 = vand.u32 %v56, 4294901760
    %v558 = vsub.f32 %v56, %v557
    %v559 = vand.u32 %v558, 4294901760
    %v560 = vsub.f32 %v558, %v559
    %v561 = vand.u32 %v560, 4294901760
    %562 = vmatpush1.msra.mxu0 %v561
    %v563 = vand.u32 %v59, 4294901760
    %v564 = vsub.f32 %v59, %v563
    %v565 = vand.u32 %v564, 4294901760
    %v566 = vsub.f32 %v564, %v565
    %v567 = vand.u32 %v566, 4294901760
    %568 = vmatprep.subr.mxu0 %v567
    %v569 = vand.u32 %v58, 4294901760
    %v570 = vsub.f32 %v58, %v569
    %v571 = vand.u32 %v570, 4294901760
    %v572 = vsub.f32 %v570, %v571
    %v573 = vand.u32 %v572, 4294901760
    %574 = vmatpush1.msra.mxu0 %v573
    %v575 = vand.u32 %v61, 4294901760
    %v576 = vsub.f32 %v61, %v575
    %v577 = vand.u32 %v576, 4294901760
    %v578 = vsub.f32 %v576, %v577
    %v579 = vand.u32 %v578, 4294901760
    %580 = vmatprep.subr.mxu0 %v579
    %v581 = vand.u32 %v60, 4294901760
    %v582 = vsub.f32 %v60, %v581
    %v583 = vand.u32 %v582, 4294901760
    %v584 = vsub.f32 %v582, %v583
    %v585 = vand.u32 %v584, 4294901760
    %586 = vmatpush1.msra.mxu0 %v585
    %v587 = vand.u32 %v63, 4294901760
    %v588 = vsub.f32 %v63, %v587
    %v589 = vand.u32 %v588, 4294901760
    %v590 = vsub.f32 %v588, %v589
    %v591 = vand.u32 %v590, 4294901760
    %592 = vmatprep.subr.mxu0 %v591
    %v593 = vand.u32 %v62, 4294901760
    %v594 = vsub.f32 %v62, %v593
    %v595 = vand.u32 %v594, 4294901760
    %v596 = vsub.f32 %v594, %v595
    %v597 = vand.u32 %v596, 4294901760
    %598 = vmatpush1.msra.mxu0 %v597
    %v599 = vand.u32 %v65, 4294901760
    %v600 = vsub.f32 %v65, %v599
    %v601 = vand.u32 %v600, 4294901760
    %v602 = vsub.f32 %v600, %v601
    %v603 = vand.u32 %v602, 4294901760
    %604 = vmatprep.subr.mxu0 %v603
    %v605 = vand.u32 %v64, 4294901760
    %v606 = vsub.f32 %v64, %v605
    %v607 = vand.u32 %v606, 4294901760
    %v608 = vsub.f32 %v606, %v607
    %v609 = vand.u32 %v608, 4294901760
    %610 = vmatpush1.msra.mxu0 %v609
    %v611 = vand.u32 %v67, 4294901760
    %v612 = vsub.f32 %v67, %v611
    %v613 = vand.u32 %v612, 4294901760
    %v614 = vsub.f32 %v612, %v613
    %v615 = vand.u32 %v614, 4294901760
    %616 = vmatprep.subr.mxu0 %v615
    %v617 = vand.u32 %v66, 4294901760
    %v618 = vsub.f32 %v66, %v617
    %v619 = vand.u32 %v618, 4294901760
    %v620 = vsub.f32 %v618, %v619
    %v621 = vand.u32 %v620, 4294901760
    %622 = vmatpush1.msra.mxu0 %v621
    %v623 = vand.u32 %v69, 4294901760
    %v624 = vsub.f32 %v69, %v623
    %v625 = vand.u32 %v624, 4294901760
    %v626 = vsub.f32 %v624, %v625
    %v627 = vand.u32 %v626, 4294901760
    %628 = vmatprep.subr.mxu0 %v627
    %v629 = vand.u32 %v68, 4294901760
    %v630 = vsub.f32 %v68, %v629
    %v631 = vand.u32 %v630, 4294901760
    %v632 = vsub.f32 %v630, %v631
    %v633 = vand.u32 %v632, 4294901760
    %634 = vmatpush1.msra.mxu0 %v633
    %v635 = vand.u32 %v71, 4294901760
    %v636 = vsub.f32 %v71, %v635
    %v637 = vand.u32 %v636, 4294901760
    %v638 = vsub.f32 %v636, %v637
    %v639 = vand.u32 %v638, 4294901760
    %640 = vmatprep.subr.mxu0 %v639
    %v641 = vand.u32 %v70, 4294901760
    %v642 = vsub.f32 %v70, %v641
    %v643 = vand.u32 %v642, 4294901760
    %v644 = vsub.f32 %v642, %v643
    %v645 = vand.u32 %v644, 4294901760
    %646 = vmatpush1.msra.mxu0 %v645
    %v647 = vand.u32 %v73, 4294901760
    %v648 = vsub.f32 %v73, %v647
    %v649 = vand.u32 %v648, 4294901760
    %v650 = vsub.f32 %v648, %v649
    %v651 = vand.u32 %v650, 4294901760
    %652 = vmatprep.subr.mxu0 %v651
    %v653 = vand.u32 %v72, 4294901760
    %v654 = vsub.f32 %v72, %v653
    %v655 = vand.u32 %v654, 4294901760
    %v656 = vsub.f32 %v654, %v655
    %v657 = vand.u32 %v656, 4294901760
    %658 = vmatpush1.msra.mxu0 %v657
    %v659 = vand.u32 %v75, 4294901760
    %v660 = vsub.f32 %v75, %v659
    %v661 = vand.u32 %v660, 4294901760
    %v662 = vsub.f32 %v660, %v661
    %v663 = vand.u32 %v662, 4294901760
    %664 = vmatprep.subr.mxu0 %v663
    %v665 = vand.u32 %v74, 4294901760
    %v666 = vsub.f32 %v74, %v665
    %v667 = vand.u32 %v666, 4294901760
    %v668 = vsub.f32 %v666, %v667
    %v669 = vand.u32 %v668, 4294901760
    %670 = vmatpush1.msra.mxu0 %v669
    %v671 = vand.u32 %v77, 4294901760
    %v672 = vsub.f32 %v77, %v671
    %v673 = vand.u32 %v672, 4294901760
    %v674 = vsub.f32 %v672, %v673
    %v675 = vand.u32 %v674, 4294901760
    %676 = vmatprep.subr.mxu0 %v675
    %v677 = vand.u32 %v76, 4294901760
    %v678 = vsub.f32 %v76, %v677
    %v679 = vand.u32 %v678, 4294901760
    %v680 = vsub.f32 %v678, %v679
    %v681 = vand.u32 %v680, 4294901760
    %682 = vmatpush1.msra.mxu0 %v681
    %v683 = vand.u32 %v79, 4294901760
    %v684 = vsub.f32 %v79, %v683
    %v685 = vand.u32 %v684, 4294901760
    %v686 = vsub.f32 %v684, %v685
    %v687 = vand.u32 %v686, 4294901760
    %688 = vmatprep.subr.mxu0 %v687
    %v689 = vand.u32 %v78, 4294901760
    %v690 = vsub.f32 %v78, %v689
    %v691 = vand.u32 %v690, 4294901760
    %v692 = vsub.f32 %v690, %v691
    %v693 = vand.u32 %v692, 4294901760
    %694 = vmatpush1.msra.mxu0 %v693
    %v695 = vand.u32 %v81, 4294901760
    %v696 = vsub.f32 %v81, %v695
    %v697 = vand.u32 %v696, 4294901760
    %v698 = vsub.f32 %v696, %v697
    %v699 = vand.u32 %v698, 4294901760
    %700 = vmatprep.subr.mxu0 %v699
    %v701 = vand.u32 %v80, 4294901760
    %v702 = vsub.f32 %v80, %v701
    %v703 = vand.u32 %v702, 4294901760
    %v704 = vsub.f32 %v702, %v703
    %v705 = vand.u32 %v704, 4294901760
    %706 = vmatpush1.msra.mxu0 %v705
    %v707 = vand.u32 %v83, 4294901760
    %v708 = vsub.f32 %v83, %v707
    %v709 = vand.u32 %v708, 4294901760
    %v710 = vsub.f32 %v708, %v709
    %v711 = vand.u32 %v710, 4294901760
    %712 = vmatprep.subr.mxu0 %v711
    %v713 = vand.u32 %v82, 4294901760
    %v714 = vsub.f32 %v82, %v713
    %v715 = vand.u32 %v714, 4294901760
    %v716 = vsub.f32 %v714, %v715
    %v717 = vand.u32 %v716, 4294901760
    %718 = vmatpush1.msra.mxu0 %v717
    %v719 = vand.u32 %v85, 4294901760
    %v720 = vsub.f32 %v85, %v719
    %v721 = vand.u32 %v720, 4294901760
    %v722 = vsub.f32 %v720, %v721
    %v723 = vand.u32 %v722, 4294901760
    %724 = vmatprep.subr.mxu0 %v723
    %v725 = vand.u32 %v84, 4294901760
    %v726 = vsub.f32 %v84, %v725
    %v727 = vand.u32 %v726, 4294901760
    %v728 = vsub.f32 %v726, %v727
    %v729 = vand.u32 %v728, 4294901760
    %730 = vmatpush1.msra.mxu0 %v729
    %v731 = vand.u32 %v87, 4294901760
    %v732 = vsub.f32 %v87, %v731
    %v733 = vand.u32 %v732, 4294901760
    %v734 = vsub.f32 %v732, %v733
    %v735 = vand.u32 %v734, 4294901760
    %736 = vmatprep.subr.mxu0 %v735
    %v737 = vand.u32 %v86, 4294901760
    %v738 = vsub.f32 %v86, %v737
    %v739 = vand.u32 %v738, 4294901760
    %v740 = vsub.f32 %v738, %v739
    %v741 = vand.u32 %v740, 4294901760
    %742 = vmatpush1.msra.mxu0 %v741
    %v743 = vand.u32 %v89, 4294901760
    %v744 = vsub.f32 %v89, %v743
    %v745 = vand.u32 %v744, 4294901760
    %v746 = vsub.f32 %v744, %v745
    %v747 = vand.u32 %v746, 4294901760
    %748 = vmatprep.subr.mxu0 %v747
    %v749 = vand.u32 %v88, 4294901760
    %v750 = vsub.f32 %v88, %v749
    %v751 = vand.u32 %v750, 4294901760
    %v752 = vsub.f32 %v750, %v751
    %v753 = vand.u32 %v752, 4294901760
    %754 = vmatpush1.msra.mxu0 %v753
    %v755 = vand.u32 %v91, 4294901760
    %v756 = vsub.f32 %v91, %v755
    %v757 = vand.u32 %v756, 4294901760
    %v758 = vsub.f32 %v756, %v757
    %v759 = vand.u32 %v758, 4294901760
    %760 = vmatprep.subr.mxu0 %v759
    %v761 = vand.u32 %v90, 4294901760
    %v762 = vsub.f32 %v90, %v761
    %v763 = vand.u32 %v762, 4294901760
    %v764 = vsub.f32 %v762, %v763
    %v765 = vand.u32 %v764, 4294901760
    %766 = vmatpush1.msra.mxu0 %v765
    %v767 = vand.u32 %v93, 4294901760
    %v768 = vsub.f32 %v93, %v767
    %v769 = vand.u32 %v768, 4294901760
    %v770 = vsub.f32 %v768, %v769
    %v771 = vand.u32 %v770, 4294901760
    %772 = vmatprep.subr.mxu0 %v771
    %v773 = vand.u32 %v92, 4294901760
    %v774 = vsub.f32 %v92, %v773
    %v775 = vand.u32 %v774, 4294901760
    %v776 = vsub.f32 %v774, %v775
    %v777 = vand.u32 %v776, 4294901760
    %778 = vmatpush1.msra.mxu0 %v777
    %v779 = vand.u32 %v95, 4294901760
    %v780 = vsub.f32 %v95, %v779
    %v781 = vand.u32 %v780, 4294901760
    %v782 = vsub.f32 %v780, %v781
    %v783 = vand.u32 %v782, 4294901760
    %784 = vmatprep.subr.mxu0 %v783
    %v785 = vand.u32 %v94, 4294901760
    %v786 = vsub.f32 %v94, %v785
    %v787 = vand.u32 %v786, 4294901760
    %v788 = vsub.f32 %v786, %v787
    %v789 = vand.u32 %v788, 4294901760
    %790 = vmatpush1.msra.mxu0 %v789
    %v791 = vand.u32 %v97, 4294901760
    %v792 = vsub.f32 %v97, %v791
    %v793 = vand.u32 %v792, 4294901760
    %v794 = vsub.f32 %v792, %v793
    %v795 = vand.u32 %v794, 4294901760
    %796 = vmatprep.subr.mxu0 %v795
    %v797 = vand.u32 %v96, 4294901760
    %v798 = vsub.f32 %v96, %v797
    %v799 = vand.u32 %v798, 4294901760
    %v800 = vsub.f32 %v798, %v799
    %v801 = vand.u32 %v800, 4294901760
    %802 = vmatpush1.msra.mxu0 %v801
    %v803 = vand.u32 %v99, 4294901760
    %v804 = vsub.f32 %v99, %v803
    %v805 = vand.u32 %v804, 4294901760
    %v806 = vsub.f32 %v804, %v805
    %v807 = vand.u32 %v806, 4294901760
    %808 = vmatprep.subr.mxu0 %v807
    %v809 = vand.u32 %v98, 4294901760
    %v810 = vsub.f32 %v98, %v809
    %v811 = vand.u32 %v810, 4294901760
    %v812 = vsub.f32 %v810, %v811
    %v813 = vand.u32 %v812, 4294901760
    %814 = vmatpush1.msra.mxu0 %v813
    %v815 = vand.u32 %v101, 4294901760
    %v816 = vsub.f32 %v101, %v815
    %v817 = vand.u32 %v816, 4294901760
    %v818 = vsub.f32 %v816, %v817
    %v819 = vand.u32 %v818, 4294901760
    %820 = vmatprep.subr.mxu0 %v819
    %v821 = vand.u32 %v100, 4294901760
    %v822 = vsub.f32 %v100, %v821
    %v823 = vand.u32 %v822, 4294901760
    %v824 = vsub.f32 %v822, %v823
    %v825 = vand.u32 %v824, 4294901760
    %826 = vmatpush1.msra.mxu0 %v825
    %v827 = vand.u32 %v103, 4294901760
    %v828 = vsub.f32 %v103, %v827
    %v829 = vand.u32 %v828, 4294901760
    %v830 = vsub.f32 %v828, %v829
    %v831 = vand.u32 %v830, 4294901760
    %832 = vmatprep.subr.mxu0 %v831
    %v833 = vand.u32 %v102, 4294901760
    %v834 = vsub.f32 %v102, %v833
    %v835 = vand.u32 %v834, 4294901760
    %v836 = vsub.f32 %v834, %v835
    %v837 = vand.u32 %v836, 4294901760
    %838 = vmatpush1.msra.mxu0 %v837
    %v839 = vand.u32 %v105, 4294901760
    %v840 = vsub.f32 %v105, %v839
    %v841 = vand.u32 %v840, 4294901760
    %v842 = vsub.f32 %v840, %v841
    %v843 = vand.u32 %v842, 4294901760
    %844 = vmatprep.subr.mxu0 %v843
    %v845 = vand.u32 %v104, 4294901760
    %v846 = vsub.f32 %v104, %v845
    %v847 = vand.u32 %v846, 4294901760
    %v848 = vsub.f32 %v846, %v847
    %v849 = vand.u32 %v848, 4294901760
    %850 = vmatpush1.msra.mxu0 %v849
    %v851 = vand.u32 %v107, 4294901760
    %v852 = vsub.f32 %v107, %v851
    %v853 = vand.u32 %v852, 4294901760
    %v854 = vsub.f32 %v852, %v853
    %v855 = vand.u32 %v854, 4294901760
    %856 = vmatprep.subr.mxu0 %v855
    %v857 = vand.u32 %v106, 4294901760
    %v858 = vsub.f32 %v106, %v857
    %v859 = vand.u32 %v858, 4294901760
    %v860 = vsub.f32 %v858, %v859
    %v861 = vand.u32 %v860, 4294901760
    %862 = vmatpush1.msra.mxu0 %v861
    %v863 = vand.u32 %v109, 4294901760
    %v864 = vsub.f32 %v109, %v863
    %v865 = vand.u32 %v864, 4294901760
    %v866 = vsub.f32 %v864, %v865
    %v867 = vand.u32 %v866, 4294901760
    %868 = vmatprep.subr.mxu0 %v867
    %v869 = vand.u32 %v108, 4294901760
    %v870 = vsub.f32 %v108, %v869
    %v871 = vand.u32 %v870, 4294901760
    %v872 = vsub.f32 %v870, %v871
    %v873 = vand.u32 %v872, 4294901760
    %874 = vmatpush1.msra.mxu0 %v873
    %v875 = vand.u32 %v319, 4294901760
    %876 = vmatprep.mubr.f32.mxu0 %v875
    %v877 = vand.u32 %v311, 4294901760
    %878 = vmatmul.mubr.f32.gmra.mrb[0].mxu0 %v877
    %v879 = vpop.f32.mrb[0].mxu0
    %v880 = vadd.f32 %v487, %v879
    %v881 = vpop.f32.mrb[0].mxu0
    %v882 = vadd.f32 %v489, %v881
    %883 = vdwg.mxu0
    %v884 = vand.u32 %v47, 4294901760
    %v885 = vsub.f32 %v47, %v884
    %886 = vmatprep.subr.mxu0 %v885
    %v887 = vand.u32 %v46, 4294901760
    %v888 = vsub.f32 %v46, %v887
    %889 = vmatpush1.msra.mxu0 %v888
    %v890 = vand.u32 %v49, 4294901760
    %v891 = vsub.f32 %v49, %v890
    %892 = vmatprep.subr.mxu0 %v891
    %v893 = vand.u32 %v48, 4294901760
    %v894 = vsub.f32 %v48, %v893
    %895 = vmatpush1.msra.mxu0 %v894
    %v896 = vand.u32 %v51, 4294901760
    %v897 = vsub.f32 %v51, %v896
    %898 = vmatprep.subr.mxu0 %v897
    %v899 = vand.u32 %v50, 4294901760
    %v900 = vsub.f32 %v50, %v899
    %901 = vmatpush1.msra.mxu0 %v900
    %v902 = vand.u32 %v53, 4294901760
    %v903 = vsub.f32 %v53, %v902
    %904 = vmatprep.subr.mxu0 %v903
    %v905 = vand.u32 %v52, 4294901760
    %v906 = vsub.f32 %v52, %v905
    %907 = vmatpush1.msra.mxu0 %v906
    %v908 = vand.u32 %v55, 4294901760
    %v909 = vsub.f32 %v55, %v908
    %910 = vmatprep.subr.mxu0 %v909
    %v911 = vand.u32 %v54, 4294901760
    %v912 = vsub.f32 %v54, %v911
    %913 = vmatpush1.msra.mxu0 %v912
    %v914 = vand.u32 %v57, 4294901760
    %v915 = vsub.f32 %v57, %v914
    %916 = vmatprep.subr.mxu0 %v915
    %v917 = vand.u32 %v56, 4294901760
    %v918 = vsub.f32 %v56, %v917
    %919 = vmatpush1.msra.mxu0 %v918
    %v920 = vand.u32 %v59, 4294901760
    %v921 = vsub.f32 %v59, %v920
    %922 = vmatprep.subr.mxu0 %v921
    %v923 = vand.u32 %v58, 4294901760
    %v924 = vsub.f32 %v58, %v923
    %925 = vmatpush1.msra.mxu0 %v924
    %v926 = vand.u32 %v61, 4294901760
    %v927 = vsub.f32 %v61, %v926
    %928 = vmatprep.subr.mxu0 %v927
    %v929 = vand.u32 %v60, 4294901760
    %v930 = vsub.f32 %v60, %v929
    %931 = vmatpush1.msra.mxu0 %v930
    %v932 = vand.u32 %v63, 4294901760
    %v933 = vsub.f32 %v63, %v932
    %934 = vmatprep.subr.mxu0 %v933
    %v935 = vand.u32 %v62, 4294901760
    %v936 = vsub.f32 %v62, %v935
    %937 = vmatpush1.msra.mxu0 %v936
    %v938 = vand.u32 %v65, 4294901760
    %v939 = vsub.f32 %v65, %v938
    %940 = vmatprep.subr.mxu0 %v939
    %v941 = vand.u32 %v64, 4294901760
    %v942 = vsub.f32 %v64, %v941
    %943 = vmatpush1.msra.mxu0 %v942
    %v944 = vand.u32 %v67, 4294901760
    %v945 = vsub.f32 %v67, %v944
    %946 = vmatprep.subr.mxu0 %v945
    %v947 = vand.u32 %v66, 4294901760
    %v948 = vsub.f32 %v66, %v947
    %949 = vmatpush1.msra.mxu0 %v948
    %v950 = vand.u32 %v69, 4294901760
    %v951 = vsub.f32 %v69, %v950
    %952 = vmatprep.subr.mxu0 %v951
    %v953 = vand.u32 %v68, 4294901760
    %v954 = vsub.f32 %v68, %v953
    %955 = vmatpush1.msra.mxu0 %v954
    %v956 = vand.u32 %v71, 4294901760
    %v957 = vsub.f32 %v71, %v956
    %958 = vmatprep.subr.mxu0 %v957
    %v959 = vand.u32 %v70, 4294901760
    %v960 = vsub.f32 %v70, %v959
    %961 = vmatpush1.msra.mxu0 %v960
    %v962 = vand.u32 %v73, 4294901760
    %v963 = vsub.f32 %v73, %v962
    %964 = vmatprep.subr.mxu0 %v963
    %v965 = vand.u32 %v72, 4294901760
    %v966 = vsub.f32 %v72, %v965
    %967 = vmatpush1.msra.mxu0 %v966
    %v968 = vand.u32 %v75, 4294901760
    %v969 = vsub.f32 %v75, %v968
    %970 = vmatprep.subr.mxu0 %v969
    %v971 = vand.u32 %v74, 4294901760
    %v972 = vsub.f32 %v74, %v971
    %973 = vmatpush1.msra.mxu0 %v972
    %v974 = vand.u32 %v77, 4294901760
    %v975 = vsub.f32 %v77, %v974
    %976 = vmatprep.subr.mxu0 %v975
    %v977 = vand.u32 %v76, 4294901760
    %v978 = vsub.f32 %v76, %v977
    %979 = vmatpush1.msra.mxu0 %v978
    %v980 = vand.u32 %v79, 4294901760
    %v981 = vsub.f32 %v79, %v980
    %982 = vmatprep.subr.mxu0 %v981
    %v983 = vand.u32 %v78, 4294901760
    %v984 = vsub.f32 %v78, %v983
    %985 = vmatpush1.msra.mxu0 %v984
    %v986 = vand.u32 %v81, 4294901760
    %v987 = vsub.f32 %v81, %v986
    %988 = vmatprep.subr.mxu0 %v987
    %v989 = vand.u32 %v80, 4294901760
    %v990 = vsub.f32 %v80, %v989
    %991 = vmatpush1.msra.mxu0 %v990
    %v992 = vand.u32 %v83, 4294901760
    %v993 = vsub.f32 %v83, %v992
    %994 = vmatprep.subr.mxu0 %v993
    %v995 = vand.u32 %v82, 4294901760
    %v996 = vsub.f32 %v82, %v995
    %997 = vmatpush1.msra.mxu0 %v996
    %v998 = vand.u32 %v85, 4294901760
    %v999 = vsub.f32 %v85, %v998
    %1000 = vmatprep.subr.mxu0 %v999
    %v1001 = vand.u32 %v84, 4294901760
    %v1002 = vsub.f32 %v84, %v1001
    %1003 = vmatpush1.msra.mxu0 %v1002
    %v1004 = vand.u32 %v87, 4294901760
    %v1005 = vsub.f32 %v87, %v1004
    %1006 = vmatprep.subr.mxu0 %v1005
    %v1007 = vand.u32 %v86, 4294901760
    %v1008 = vsub.f32 %v86, %v1007
    %1009 = vmatpush1.msra.mxu0 %v1008
    %v1010 = vand.u32 %v89, 4294901760
    %v1011 = vsub.f32 %v89, %v1010
    %1012 = vmatprep.subr.mxu0 %v1011
    %v1013 = vand.u32 %v88, 4294901760
    %v1014 = vsub.f32 %v88, %v1013
    %1015 = vmatpush1.msra.mxu0 %v1014
    %v1016 = vand.u32 %v91, 4294901760
    %v1017 = vsub.f32 %v91, %v1016
    %1018 = vmatprep.subr.mxu0 %v1017
    %v1019 = vand.u32 %v90, 4294901760
    %v1020 = vsub.f32 %v90, %v1019
    %1021 = vmatpush1.msra.mxu0 %v1020
    %v1022 = vand.u32 %v93, 4294901760
    %v1023 = vsub.f32 %v93, %v1022
    %1024 = vmatprep.subr.mxu0 %v1023
    %v1025 = vand.u32 %v92, 4294901760
    %v1026 = vsub.f32 %v92, %v1025
    %1027 = vmatpush1.msra.mxu0 %v1026
    %v1028 = vand.u32 %v95, 4294901760
    %v1029 = vsub.f32 %v95, %v1028
    %1030 = vmatprep.subr.mxu0 %v1029
    %v1031 = vand.u32 %v94, 4294901760
    %v1032 = vsub.f32 %v94, %v1031
    %1033 = vmatpush1.msra.mxu0 %v1032
    %v1034 = vand.u32 %v97, 4294901760
    %v1035 = vsub.f32 %v97, %v1034
    %1036 = vmatprep.subr.mxu0 %v1035
    %v1037 = vand.u32 %v96, 4294901760
    %v1038 = vsub.f32 %v96, %v1037
    %1039 = vmatpush1.msra.mxu0 %v1038
    %v1040 = vand.u32 %v99, 4294901760
    %v1041 = vsub.f32 %v99, %v1040
    %1042 = vmatprep.subr.mxu0 %v1041
    %v1043 = vand.u32 %v98, 4294901760
    %v1044 = vsub.f32 %v98, %v1043
    %1045 = vmatpush1.msra.mxu0 %v1044
    %v1046 = vand.u32 %v101, 4294901760
    %v1047 = vsub.f32 %v101, %v1046
    %1048 = vmatprep.subr.mxu0 %v1047
    %v1049 = vand.u32 %v100, 4294901760
    %v1050 = vsub.f32 %v100, %v1049
    %1051 = vmatpush1.msra.mxu0 %v1050
    %v1052 = vand.u32 %v103, 4294901760
    %v1053 = vsub.f32 %v103, %v1052
    %1054 = vmatprep.subr.mxu0 %v1053
    %v1055 = vand.u32 %v102, 4294901760
    %v1056 = vsub.f32 %v102, %v1055
    %1057 = vmatpush1.msra.mxu0 %v1056
    %v1058 = vand.u32 %v105, 4294901760
    %v1059 = vsub.f32 %v105, %v1058
    %1060 = vmatprep.subr.mxu0 %v1059
    %v1061 = vand.u32 %v104, 4294901760
    %v1062 = vsub.f32 %v104, %v1061
    %1063 = vmatpush1.msra.mxu0 %v1062
    %v1064 = vand.u32 %v107, 4294901760
    %v1065 = vsub.f32 %v107, %v1064
    %1066 = vmatprep.subr.mxu0 %v1065
    %v1067 = vand.u32 %v106, 4294901760
    %v1068 = vsub.f32 %v106, %v1067
    %1069 = vmatpush1.msra.mxu0 %v1068
    %v1070 = vand.u32 %v109, 4294901760
    %v1071 = vsub.f32 %v109, %v1070
    %1072 = vmatprep.subr.mxu0 %v1071
    %v1073 = vand.u32 %v108, 4294901760
    %v1074 = vsub.f32 %v108, %v1073
    %1075 = vmatpush1.msra.mxu0 %v1074
    %v1076 = vand.u32 %v319, 4294901760
    %v1077 = vsub.f32 %v319, %v1076
    %1078 = vmatprep.mubr.f32.mxu0 %v1077
    %v1079 = vand.u32 %v311, 4294901760
    %v1080 = vsub.f32 %v311, %v1079
    %1081 = vmatmul.mubr.f32.gmra.mrb[0].mxu0 %v1080
    %v1082 = vpop.f32.mrb[0].mxu0
    %v1083 = vadd.f32 %v880, %v1082
    %v1084 = vpop.f32.mrb[0].mxu0
    %v1085 = vadd.f32 %v882, %v1084
    %1086 = vdwg.mxu0
    %v1087 = vand.u32 %v47, 4294901760
    %1088 = vmatprep.subr.mxu0 %v1087
    %v1089 = vand.u32 %v46, 4294901760
    %1090 = vmatpush1.msra.mxu0 %v1089
    %v1091 = vand.u32 %v49, 4294901760
    %1092 = vmatprep.subr.mxu0 %v1091
    %v1093 = vand.u32 %v48, 4294901760
    %1094 = vmatpush1.msra.mxu0 %v1093
    %v1095 = vand.u32 %v51, 4294901760
    %1096 = vmatprep.subr.mxu0 %v1095
    %v1097 = vand.u32 %v50, 4294901760
    %1098 = vmatpush1.msra.mxu0 %v1097
    %v1099 = vand.u32 %v53, 4294901760
    %1100 = vmatprep.subr.mxu0 %v1099
    %v1101 = vand.u32 %v52, 4294901760
    %1102 = vmatpush1.msra.mxu0 %v1101
    %v1103 = vand.u32 %v55, 4294901760
    %1104 = vmatprep.subr.mxu0 %v1103
    %v1105 = vand.u32 %v54, 4294901760
    %1106 = vmatpush1.msra.mxu0 %v1105
    %v1107 = vand.u32 %v57, 4294901760
    %1108 = vmatprep.subr.mxu0 %v1107
    %v1109 = vand.u32 %v56, 4294901760
    %1110 = vmatpush1.msra.mxu0 %v1109
    %v1111 = vand.u32 %v59, 4294901760
    %1112 = vmatprep.subr.mxu0 %v1111
    %v1113 = vand.u32 %v58, 4294901760
    %1114 = vmatpush1.msra.mxu0 %v1113
    %v1115 = vand.u32 %v61, 4294901760
    %1116 = vmatprep.subr.mxu0 %v1115
    %v1117 = vand.u32 %v60, 4294901760
    %1118 = vmatpush1.msra.mxu0 %v1117
    %v1119 = vand.u32 %v63, 4294901760
    %1120 = vmatprep.subr.mxu0 %v1119
    %v1121 = vand.u32 %v62, 4294901760
    %1122 = vmatpush1.msra.mxu0 %v1121
    %v1123 = vand.u32 %v65, 4294901760
    %1124 = vmatprep.subr.mxu0 %v1123
    %v1125 = vand.u32 %v64, 4294901760
    %1126 = vmatpush1.msra.mxu0 %v1125
    %v1127 = vand.u32 %v67, 4294901760
    %1128 = vmatprep.subr.mxu0 %v1127
    %v1129 = vand.u32 %v66, 4294901760
    %1130 = vmatpush1.msra.mxu0 %v1129
    %v1131 = vand.u32 %v69, 4294901760
    %1132 = vmatprep.subr.mxu0 %v1131
    %v1133 = vand.u32 %v68, 4294901760
    %1134 = vmatpush1.msra.mxu0 %v1133
    %v1135 = vand.u32 %v71, 4294901760
    %1136 = vmatprep.subr.mxu0 %v1135
    %v1137 = vand.u32 %v70, 4294901760
    %1138 = vmatpush1.msra.mxu0 %v1137
    %v1139 = vand.u32 %v73, 4294901760
    %1140 = vmatprep.subr.mxu0 %v1139
    %v1141 = vand.u32 %v72, 4294901760
    %1142 = vmatpush1.msra.mxu0 %v1141
    %v1143 = vand.u32 %v75, 4294901760
    %1144 = vmatprep.subr.mxu0 %v1143
    %v1145 = vand.u32 %v74, 4294901760
    %1146 = vmatpush1.msra.mxu0 %v1145
    %v1147 = vand.u32 %v77, 4294901760
    %1148 = vmatprep.subr.mxu0 %v1147
    %v1149 = vand.u32 %v76, 4294901760
    %1150 = vmatpush1.msra.mxu0 %v1149
    %v1151 = vand.u32 %v79, 4294901760
    %1152 = vmatprep.subr.mxu0 %v1151
    %v1153 = vand.u32 %v78, 4294901760
    %1154 = vmatpush1.msra.mxu0 %v1153
    %v1155 = vand.u32 %v81, 4294901760
    %1156 = vmatprep.subr.mxu0 %v1155
    %v1157 = vand.u32 %v80, 4294901760
    %1158 = vmatpush1.msra.mxu0 %v1157
    %v1159 = vand.u32 %v83, 4294901760
    %1160 = vmatprep.subr.mxu0 %v1159
    %v1161 = vand.u32 %v82, 4294901760
    %1162 = vmatpush1.msra.mxu0 %v1161
    %v1163 = vand.u32 %v85, 4294901760
    %1164 = vmatprep.subr.mxu0 %v1163
    %v1165 = vand.u32 %v84, 4294901760
    %1166 = vmatpush1.msra.mxu0 %v1165
    %v1167 = vand.u32 %v87, 4294901760
    %1168 = vmatprep.subr.mxu0 %v1167
    %v1169 = vand.u32 %v86, 4294901760
    %1170 = vmatpush1.msra.mxu0 %v1169
    %v1171 = vand.u32 %v89, 4294901760
    %1172 = vmatprep.subr.mxu0 %v1171
    %v1173 = vand.u32 %v88, 4294901760
    %1174 = vmatpush1.msra.mxu0 %v1173
    %v1175 = vand.u32 %v91, 4294901760
    %1176 = vmatprep.subr.mxu0 %v1175
    %v1177 = vand.u32 %v90, 4294901760
    %1178 = vmatpush1.msra.mxu0 %v1177
    %v1179 = vand.u32 %v93, 4294901760
    %1180 = vmatprep.subr.mxu0 %v1179
    %v1181 = vand.u32 %v92, 4294901760
    %1182 = vmatpush1.msra.mxu0 %v1181
    %v1183 = vand.u32 %v95, 4294901760
    %1184 = vmatprep.subr.mxu0 %v1183
    %v1185 = vand.u32 %v94, 4294901760
    %1186 = vmatpush1.msra.mxu0 %v1185
    %v1187 = vand.u32 %v97, 4294901760
    %1188 = vmatprep.subr.mxu0 %v1187
    %v1189 = vand.u32 %v96, 4294901760
    %1190 = vmatpush1.msra.mxu0 %v1189
    %v1191 = vand.u32 %v99, 4294901760
    %1192 = vmatprep.subr.mxu0 %v1191
    %v1193 = vand.u32 %v98, 4294901760
    %1194 = vmatpush1.msra.mxu0 %v1193
    %v1195 = vand.u32 %v101, 4294901760
    %1196 = vmatprep.subr.mxu0 %v1195
    %v1197 = vand.u32 %v100, 4294901760
    %1198 = vmatpush1.msra.mxu0 %v1197
    %v1199 = vand.u32 %v103, 4294901760
    %1200 = vmatprep.subr.mxu0 %v1199
    %v1201 = vand.u32 %v102, 4294901760
    %1202 = vmatpush1.msra.mxu0 %v1201
    %v1203 = vand.u32 %v105, 4294901760
    %1204 = vmatprep.subr.mxu0 %v1203
    %v1205 = vand.u32 %v104, 4294901760
    %1206 = vmatpush1.msra.mxu0 %v1205
    %v1207 = vand.u32 %v107, 4294901760
    %1208 = vmatprep.subr.mxu0 %v1207
    %v1209 = vand.u32 %v106, 4294901760
    %1210 = vmatpush1.msra.mxu0 %v1209
    %v1211 = vand.u32 %v109, 4294901760
    %1212 = vmatprep.subr.mxu0 %v1211
    %v1213 = vand.u32 %v108, 4294901760
    %1214 = vmatpush1.msra.mxu0 %v1213
    %v1215 = vand.u32 %v319, 4294901760
    %v1216 = vsub.f32 %v319, %v1215
    %v1217 = vand.u32 %v1216, 4294901760
    %1218 = vmatprep.mubr.f32.mxu0 %v1217
    %v1219 = vand.u32 %v311, 4294901760
    %v1220 = vsub.f32 %v311, %v1219
    %v1221 = vand.u32 %v1220, 4294901760
    %1222 = vmatmul.mubr.f32.gmra.mrb[0].mxu0 %v1221
    %v1223 = vpop.f32.mrb[0].mxu0
    %v1224 = vadd.f32 %v1083, %v1223
    %v1225 = vpop.f32.mrb[0].mxu0
    %v1226 = vadd.f32 %v1085, %v1225
    %1227 = vdwg.mxu0
    %v1228 = vand.u32 %v47, 4294901760
    %v1229 = vsub.f32 %v47, %v1228
    %v1230 = vand.u32 %v1229, 4294901760
    %1231 = vmatprep.subr.mxu0 %v1230
    %v1232 = vand.u32 %v46, 4294901760
    %v1233 = vsub.f32 %v46, %v1232
    %v1234 = vand.u32 %v1233, 4294901760
    %1235 = vmatpush1.msra.mxu0 %v1234
    %v1236 = vand.u32 %v49, 4294901760
    %v1237 = vsub.f32 %v49, %v1236
    %v1238 = vand.u32 %v1237, 4294901760
    %1239 = vmatprep.subr.mxu0 %v1238
    %v1240 = vand.u32 %v48, 4294901760
    %v1241 = vsub.f32 %v48, %v1240
    %v1242 = vand.u32 %v1241, 4294901760
    %1243 = vmatpush1.msra.mxu0 %v1242
    %v1244 = vand.u32 %v51, 4294901760
    %v1245 = vsub.f32 %v51, %v1244
    %v1246 = vand.u32 %v1245, 4294901760
    %1247 = vmatprep.subr.mxu0 %v1246
    %v1248 = vand.u32 %v50, 4294901760
    %v1249 = vsub.f32 %v50, %v1248
    %v1250 = vand.u32 %v1249, 4294901760
    %1251 = vmatpush1.msra.mxu0 %v1250
    %v1252 = vand.u32 %v53, 4294901760
    %v1253 = vsub.f32 %v53, %v1252
    %v1254 = vand.u32 %v1253, 4294901760
    %1255 = vmatprep.subr.mxu0 %v1254
    %v1256 = vand.u32 %v52, 4294901760
    %v1257 = vsub.f32 %v52, %v1256
    %v1258 = vand.u32 %v1257, 4294901760
    %1259 = vmatpush1.msra.mxu0 %v1258
    %v1260 = vand.u32 %v55, 4294901760
    %v1261 = vsub.f32 %v55, %v1260
    %v1262 = vand.u32 %v1261, 4294901760
    %1263 = vmatprep.subr.mxu0 %v1262
    %v1264 = vand.u32 %v54, 4294901760
    %v1265 = vsub.f32 %v54, %v1264
    %v1266 = vand.u32 %v1265, 4294901760
    %1267 = vmatpush1.msra.mxu0 %v1266
    %v1268 = vand.u32 %v57, 4294901760
    %v1269 = vsub.f32 %v57, %v1268
    %v1270 = vand.u32 %v1269, 4294901760
    %1271 = vmatprep.subr.mxu0 %v1270
    %v1272 = vand.u32 %v56, 4294901760
    %v1273 = vsub.f32 %v56, %v1272
    %v1274 = vand.u32 %v1273, 4294901760
    %1275 = vmatpush1.msra.mxu0 %v1274
    %v1276 = vand.u32 %v59, 4294901760
    %v1277 = vsub.f32 %v59, %v1276
    %v1278 = vand.u32 %v1277, 4294901760
    %1279 = vmatprep.subr.mxu0 %v1278
    %v1280 = vand.u32 %v58, 4294901760
    %v1281 = vsub.f32 %v58, %v1280
    %v1282 = vand.u32 %v1281, 4294901760
    %1283 = vmatpush1.msra.mxu0 %v1282
    %v1284 = vand.u32 %v61, 4294901760
    %v1285 = vsub.f32 %v61, %v1284
    %v1286 = vand.u32 %v1285, 4294901760
    %1287 = vmatprep.subr.mxu0 %v1286
    %v1288 = vand.u32 %v60, 4294901760
    %v1289 = vsub.f32 %v60, %v1288
    %v1290 = vand.u32 %v1289, 4294901760
    %1291 = vmatpush1.msra.mxu0 %v1290
    %v1292 = vand.u32 %v63, 4294901760
    %v1293 = vsub.f32 %v63, %v1292
    %v1294 = vand.u32 %v1293, 4294901760
    %1295 = vmatprep.subr.mxu0 %v1294
    %v1296 = vand.u32 %v62, 4294901760
    %v1297 = vsub.f32 %v62, %v1296
    %v1298 = vand.u32 %v1297, 4294901760
    %1299 = vmatpush1.msra.mxu0 %v1298
    %v1300 = vand.u32 %v65, 4294901760
    %v1301 = vsub.f32 %v65, %v1300
    %v1302 = vand.u32 %v1301, 4294901760
    %1303 = vmatprep.subr.mxu0 %v1302
    %v1304 = vand.u32 %v64, 4294901760
    %v1305 = vsub.f32 %v64, %v1304
    %v1306 = vand.u32 %v1305, 4294901760
    %1307 = vmatpush1.msra.mxu0 %v1306
    %v1308 = vand.u32 %v67, 4294901760
    %v1309 = vsub.f32 %v67, %v1308
    %v1310 = vand.u32 %v1309, 4294901760
    %1311 = vmatprep.subr.mxu0 %v1310
    %v1312 = vand.u32 %v66, 4294901760
    %v1313 = vsub.f32 %v66, %v1312
    %v1314 = vand.u32 %v1313, 4294901760
    %1315 = vmatpush1.msra.mxu0 %v1314
    %v1316 = vand.u32 %v69, 4294901760
    %v1317 = vsub.f32 %v69, %v1316
    %v1318 = vand.u32 %v1317, 4294901760
    %1319 = vmatprep.subr.mxu0 %v1318
    %v1320 = vand.u32 %v68, 4294901760
    %v1321 = vsub.f32 %v68, %v1320
    %v1322 = vand.u32 %v1321, 4294901760
    %1323 = vmatpush1.msra.mxu0 %v1322
    %v1324 = vand.u32 %v71, 4294901760
    %v1325 = vsub.f32 %v71, %v1324
    %v1326 = vand.u32 %v1325, 4294901760
    %1327 = vmatprep.subr.mxu0 %v1326
    %v1328 = vand.u32 %v70, 4294901760
    %v1329 = vsub.f32 %v70, %v1328
    %v1330 = vand.u32 %v1329, 4294901760
    %1331 = vmatpush1.msra.mxu0 %v1330
    %v1332 = vand.u32 %v73, 4294901760
    %v1333 = vsub.f32 %v73, %v1332
    %v1334 = vand.u32 %v1333, 4294901760
    %1335 = vmatprep.subr.mxu0 %v1334
    %v1336 = vand.u32 %v72, 4294901760
    %v1337 = vsub.f32 %v72, %v1336
    %v1338 = vand.u32 %v1337, 4294901760
    %1339 = vmatpush1.msra.mxu0 %v1338
    %v1340 = vand.u32 %v75, 4294901760
    %v1341 = vsub.f32 %v75, %v1340
    %v1342 = vand.u32 %v1341, 4294901760
    %1343 = vmatprep.subr.mxu0 %v1342
    %v1344 = vand.u32 %v74, 4294901760
    %v1345 = vsub.f32 %v74, %v1344
    %v1346 = vand.u32 %v1345, 4294901760
    %1347 = vmatpush1.msra.mxu0 %v1346
    %v1348 = vand.u32 %v77, 4294901760
    %v1349 = vsub.f32 %v77, %v1348
    %v1350 = vand.u32 %v1349, 4294901760
    %1351 = vmatprep.subr.mxu0 %v1350
    %v1352 = vand.u32 %v76, 4294901760
    %v1353 = vsub.f32 %v76, %v1352
    %v1354 = vand.u32 %v1353, 4294901760
    %1355 = vmatpush1.msra.mxu0 %v1354
    %v1356 = vand.u32 %v79, 4294901760
    %v1357 = vsub.f32 %v79, %v1356
    %v1358 = vand.u32 %v1357, 4294901760
    %1359 = vmatprep.subr.mxu0 %v1358
    %v1360 = vand.u32 %v78, 4294901760
    %v1361 = vsub.f32 %v78, %v1360
    %v1362 = vand.u32 %v1361, 4294901760
    %1363 = vmatpush1.msra.mxu0 %v1362
    %v1364 = vand.u32 %v81, 4294901760
    %v1365 = vsub.f32 %v81, %v1364
    %v1366 = vand.u32 %v1365, 4294901760
    %1367 = vmatprep.subr.mxu0 %v1366
    %v1368 = vand.u32 %v80, 4294901760
    %v1369 = vsub.f32 %v80, %v1368
    %v1370 = vand.u32 %v1369, 4294901760
    %1371 = vmatpush1.msra.mxu0 %v1370
    %v1372 = vand.u32 %v83, 4294901760
    %v1373 = vsub.f32 %v83, %v1372
    %v1374 = vand.u32 %v1373, 4294901760
    %1375 = vmatprep.subr.mxu0 %v1374
    %v1376 = vand.u32 %v82, 4294901760
    %v1377 = vsub.f32 %v82, %v1376
    %v1378 = vand.u32 %v1377, 4294901760
    %1379 = vmatpush1.msra.mxu0 %v1378
    %v1380 = vand.u32 %v85, 4294901760
    %v1381 = vsub.f32 %v85, %v1380
    %v1382 = vand.u32 %v1381, 4294901760
    %1383 = vmatprep.subr.mxu0 %v1382
    %v1384 = vand.u32 %v84, 4294901760
    %v1385 = vsub.f32 %v84, %v1384
    %v1386 = vand.u32 %v1385, 4294901760
    %1387 = vmatpush1.msra.mxu0 %v1386
    %v1388 = vand.u32 %v87, 4294901760
    %v1389 = vsub.f32 %v87, %v1388
    %v1390 = vand.u32 %v1389, 4294901760
    %1391 = vmatprep.subr.mxu0 %v1390
    %v1392 = vand.u32 %v86, 4294901760
    %v1393 = vsub.f32 %v86, %v1392
    %v1394 = vand.u32 %v1393, 4294901760
    %1395 = vmatpush1.msra.mxu0 %v1394
    %v1396 = vand.u32 %v89, 4294901760
    %v1397 = vsub.f32 %v89, %v1396
    %v1398 = vand.u32 %v1397, 4294901760
    %1399 = vmatprep.subr.mxu0 %v1398
    %v1400 = vand.u32 %v88, 4294901760
    %v1401 = vsub.f32 %v88, %v1400
    %v1402 = vand.u32 %v1401, 4294901760
    %1403 = vmatpush1.msra.mxu0 %v1402
    %v1404 = vand.u32 %v91, 4294901760
    %v1405 = vsub.f32 %v91, %v1404
    %v1406 = vand.u32 %v1405, 4294901760
    %1407 = vmatprep.subr.mxu0 %v1406
    %v1408 = vand.u32 %v90, 4294901760
    %v1409 = vsub.f32 %v90, %v1408
    %v1410 = vand.u32 %v1409, 4294901760
    %1411 = vmatpush1.msra.mxu0 %v1410
    %v1412 = vand.u32 %v93, 4294901760
    %v1413 = vsub.f32 %v93, %v1412
    %v1414 = vand.u32 %v1413, 4294901760
    %1415 = vmatprep.subr.mxu0 %v1414
    %v1416 = vand.u32 %v92, 4294901760
    %v1417 = vsub.f32 %v92, %v1416
    %v1418 = vand.u32 %v1417, 4294901760
    %1419 = vmatpush1.msra.mxu0 %v1418
    %v1420 = vand.u32 %v95, 4294901760
    %v1421 = vsub.f32 %v95, %v1420
    %v1422 = vand.u32 %v1421, 4294901760
    %1423 = vmatprep.subr.mxu0 %v1422
    %v1424 = vand.u32 %v94, 4294901760
    %v1425 = vsub.f32 %v94, %v1424
    %v1426 = vand.u32 %v1425, 4294901760
    %1427 = vmatpush1.msra.mxu0 %v1426
    %v1428 = vand.u32 %v97, 4294901760
    %v1429 = vsub.f32 %v97, %v1428
    %v1430 = vand.u32 %v1429, 4294901760
    %1431 = vmatprep.subr.mxu0 %v1430
    %v1432 = vand.u32 %v96, 4294901760
    %v1433 = vsub.f32 %v96, %v1432
    %v1434 = vand.u32 %v1433, 4294901760
    %1435 = vmatpush1.msra.mxu0 %v1434
    %v1436 = vand.u32 %v99, 4294901760
    %v1437 = vsub.f32 %v99, %v1436
    %v1438 = vand.u32 %v1437, 4294901760
    %1439 = vmatprep.subr.mxu0 %v1438
    %v1440 = vand.u32 %v98, 4294901760
    %v1441 = vsub.f32 %v98, %v1440
    %v1442 = vand.u32 %v1441, 4294901760
    %1443 = vmatpush1.msra.mxu0 %v1442
    %v1444 = vand.u32 %v101, 4294901760
    %v1445 = vsub.f32 %v101, %v1444
    %v1446 = vand.u32 %v1445, 4294901760
    %1447 = vmatprep.subr.mxu0 %v1446
    %v1448 = vand.u32 %v100, 4294901760
    %v1449 = vsub.f32 %v100, %v1448
    %v1450 = vand.u32 %v1449, 4294901760
    %1451 = vmatpush1.msra.mxu0 %v1450
    %v1452 = vand.u32 %v103, 4294901760
    %v1453 = vsub.f32 %v103, %v1452
    %v1454 = vand.u32 %v1453, 4294901760
    %1455 = vmatprep.subr.mxu0 %v1454
    %v1456 = vand.u32 %v102, 4294901760
    %v1457 = vsub.f32 %v102, %v1456
    %v1458 = vand.u32 %v1457, 4294901760
    %1459 = vmatpush1.msra.mxu0 %v1458
    %v1460 = vand.u32 %v105, 4294901760
    %v1461 = vsub.f32 %v105, %v1460
    %v1462 = vand.u32 %v1461, 4294901760
    %1463 = vmatprep.subr.mxu0 %v1462
    %v1464 = vand.u32 %v104, 4294901760
    %v1465 = vsub.f32 %v104, %v1464
    %v1466 = vand.u32 %v1465, 4294901760
    %1467 = vmatpush1.msra.mxu0 %v1466
    %v1468 = vand.u32 %v107, 4294901760
    %v1469 = vsub.f32 %v107, %v1468
    %v1470 = vand.u32 %v1469, 4294901760
    %1471 = vmatprep.subr.mxu0 %v1470
    %v1472 = vand.u32 %v106, 4294901760
    %v1473 = vsub.f32 %v106, %v1472
    %v1474 = vand.u32 %v1473, 4294901760
    %1475 = vmatpush1.msra.mxu0 %v1474
    %v1476 = vand.u32 %v109, 4294901760
    %v1477 = vsub.f32 %v109, %v1476
    %v1478 = vand.u32 %v1477, 4294901760
    %1479 = vmatprep.subr.mxu0 %v1478
    %v1480 = vand.u32 %v108, 4294901760
    %v1481 = vsub.f32 %v108, %v1480
    %v1482 = vand.u32 %v1481, 4294901760
    %1483 = vmatpush1.msra.mxu0 %v1482
    %v1484 = vand.u32 %v319, 4294901760
    %1485 = vmatprep.mubr.f32.mxu0 %v1484
    %v1486 = vand.u32 %v311, 4294901760
    %1487 = vmatmul.mubr.f32.gmra.mrb[0].mxu0 %v1486
    %v1488 = vpop.f32.mrb[0].mxu0
    %v1489 = vadd.f32 %v1224, %v1488
    %v1490 = vpop.f32.mrb[0].mxu0
    %v1491 = vadd.f32 %v1226, %v1490
    %1492 = vdwg.mxu0
    %v1493 = vand.u32 %v47, 4294901760
    %1494 = vmatprep.subr.mxu0 %v1493
    %v1495 = vand.u32 %v46, 4294901760
    %1496 = vmatpush1.msra.mxu0 %v1495
    %v1497 = vand.u32 %v49, 4294901760
    %1498 = vmatprep.subr.mxu0 %v1497
    %v1499 = vand.u32 %v48, 4294901760
    %1500 = vmatpush1.msra.mxu0 %v1499
    %v1501 = vand.u32 %v51, 4294901760
    %1502 = vmatprep.subr.mxu0 %v1501
    %v1503 = vand.u32 %v50, 4294901760
    %1504 = vmatpush1.msra.mxu0 %v1503
    %v1505 = vand.u32 %v53, 4294901760
    %1506 = vmatprep.subr.mxu0 %v1505
    %v1507 = vand.u32 %v52, 4294901760
    %1508 = vmatpush1.msra.mxu0 %v1507
    %v1509 = vand.u32 %v55, 4294901760
    %1510 = vmatprep.subr.mxu0 %v1509
    %v1511 = vand.u32 %v54, 4294901760
    %1512 = vmatpush1.msra.mxu0 %v1511
    %v1513 = vand.u32 %v57, 4294901760
    %1514 = vmatprep.subr.mxu0 %v1513
    %v1515 = vand.u32 %v56, 4294901760
    %1516 = vmatpush1.msra.mxu0 %v1515
    %v1517 = vand.u32 %v59, 4294901760
    %1518 = vmatprep.subr.mxu0 %v1517
    %v1519 = vand.u32 %v58, 4294901760
    %1520 = vmatpush1.msra.mxu0 %v1519
    %v1521 = vand.u32 %v61, 4294901760
    %1522 = vmatprep.subr.mxu0 %v1521
    %v1523 = vand.u32 %v60, 4294901760
    %1524 = vmatpush1.msra.mxu0 %v1523
    %v1525 = vand.u32 %v63, 4294901760
    %1526 = vmatprep.subr.mxu0 %v1525
    %v1527 = vand.u32 %v62, 4294901760
    %1528 = vmatpush1.msra.mxu0 %v1527
    %v1529 = vand.u32 %v65, 4294901760
    %1530 = vmatprep.subr.mxu0 %v1529
    %v1531 = vand.u32 %v64, 4294901760
    %1532 = vmatpush1.msra.mxu0 %v1531
    %v1533 = vand.u32 %v67, 4294901760
    %1534 = vmatprep.subr.mxu0 %v1533
    %v1535 = vand.u32 %v66, 4294901760
    %1536 = vmatpush1.msra.mxu0 %v1535
    %v1537 = vand.u32 %v69, 4294901760
    %1538 = vmatprep.subr.mxu0 %v1537
    %v1539 = vand.u32 %v68, 4294901760
    %1540 = vmatpush1.msra.mxu0 %v1539
    %v1541 = vand.u32 %v71, 4294901760
    %1542 = vmatprep.subr.mxu0 %v1541
    %v1543 = vand.u32 %v70, 4294901760
    %1544 = vmatpush1.msra.mxu0 %v1543
    %v1545 = vand.u32 %v73, 4294901760
    %1546 = vmatprep.subr.mxu0 %v1545
    %v1547 = vand.u32 %v72, 4294901760
    %1548 = vmatpush1.msra.mxu0 %v1547
    %v1549 = vand.u32 %v75, 4294901760
    %1550 = vmatprep.subr.mxu0 %v1549
    %v1551 = vand.u32 %v74, 4294901760
    %1552 = vmatpush1.msra.mxu0 %v1551
    %v1553 = vand.u32 %v77, 4294901760
    %1554 = vmatprep.subr.mxu0 %v1553
    %v1555 = vand.u32 %v76, 4294901760
    %1556 = vmatpush1.msra.mxu0 %v1555
    %v1557 = vand.u32 %v79, 4294901760
    %1558 = vmatprep.subr.mxu0 %v1557
    %v1559 = vand.u32 %v78, 4294901760
    %1560 = vmatpush1.msra.mxu0 %v1559
    %v1561 = vand.u32 %v81, 4294901760
    %1562 = vmatprep.subr.mxu0 %v1561
    %v1563 = vand.u32 %v80, 4294901760
    %1564 = vmatpush1.msra.mxu0 %v1563
    %v1565 = vand.u32 %v83, 4294901760
    %1566 = vmatprep.subr.mxu0 %v1565
    %v1567 = vand.u32 %v82, 4294901760
    %1568 = vmatpush1.msra.mxu0 %v1567
    %v1569 = vand.u32 %v85, 4294901760
    %1570 = vmatprep.subr.mxu0 %v1569
    %v1571 = vand.u32 %v84, 4294901760
    %1572 = vmatpush1.msra.mxu0 %v1571
    %v1573 = vand.u32 %v87, 4294901760
    %1574 = vmatprep.subr.mxu0 %v1573
    %v1575 = vand.u32 %v86, 4294901760
    %1576 = vmatpush1.msra.mxu0 %v1575
    %v1577 = vand.u32 %v89, 4294901760
    %1578 = vmatprep.subr.mxu0 %v1577
    %v1579 = vand.u32 %v88, 4294901760
    %1580 = vmatpush1.msra.mxu0 %v1579
    %v1581 = vand.u32 %v91, 4294901760
    %1582 = vmatprep.subr.mxu0 %v1581
    %v1583 = vand.u32 %v90, 4294901760
    %1584 = vmatpush1.msra.mxu0 %v1583
    %v1585 = vand.u32 %v93, 4294901760
    %1586 = vmatprep.subr.mxu0 %v1585
    %v1587 = vand.u32 %v92, 4294901760
    %1588 = vmatpush1.msra.mxu0 %v1587
    %v1589 = vand.u32 %v95, 4294901760
    %1590 = vmatprep.subr.mxu0 %v1589
    %v1591 = vand.u32 %v94, 4294901760
    %1592 = vmatpush1.msra.mxu0 %v1591
    %v1593 = vand.u32 %v97, 4294901760
    %1594 = vmatprep.subr.mxu0 %v1593
    %v1595 = vand.u32 %v96, 4294901760
    %1596 = vmatpush1.msra.mxu0 %v1595
    %v1597 = vand.u32 %v99, 4294901760
    %1598 = vmatprep.subr.mxu0 %v1597
    %v1599 = vand.u32 %v98, 4294901760
    %1600 = vmatpush1.msra.mxu0 %v1599
    %v1601 = vand.u32 %v101, 4294901760
    %1602 = vmatprep.subr.mxu0 %v1601
    %v1603 = vand.u32 %v100, 4294901760
    %1604 = vmatpush1.msra.mxu0 %v1603
    %v1605 = vand.u32 %v103, 4294901760
    %1606 = vmatprep.subr.mxu0 %v1605
    %v1607 = vand.u32 %v102, 4294901760
    %1608 = vmatpush1.msra.mxu0 %v1607
    %v1609 = vand.u32 %v105, 4294901760
    %1610 = vmatprep.subr.mxu0 %v1609
    %v1611 = vand.u32 %v104, 4294901760
    %1612 = vmatpush1.msra.mxu0 %v1611
    %v1613 = vand.u32 %v107, 4294901760
    %1614 = vmatprep.subr.mxu0 %v1613
    %v1615 = vand.u32 %v106, 4294901760
    %1616 = vmatpush1.msra.mxu0 %v1615
    %v1617 = vand.u32 %v109, 4294901760
    %1618 = vmatprep.subr.mxu0 %v1617
    %v1619 = vand.u32 %v108, 4294901760
    %1620 = vmatpush1.msra.mxu0 %v1619
    %v1621 = vand.u32 %v319, 4294901760
    %1622 = vmatprep.mubr.f32.mxu0 %v1621
    %v1623 = vand.u32 %v311, 4294901760
    %1624 = vmatmul.mubr.f32.gmra.mrb[0].mxu0 %v1623
    %v1625 = vpop.f32.mrb[0].mxu0
    %v1626 = vadd.f32 %v1489, %v1625
    %v1627 = vpop.f32.mrb[0].mxu0
    %v1628 = vadd.f32 %v1491, %v1627
    %1629 = vdwg.mxu0
    %v1630 = vand.u32 %v111, 4294901760
    %1631 = vmatprep.subr.mxu0 %v1630
    %v1632 = vand.u32 %v110, 4294901760
    %1633 = vmatpush1.msra.mxu0 %v1632
    %v1634 = vand.u32 %v113, 4294901760
    %1635 = vmatprep.subr.mxu0 %v1634
    %v1636 = vand.u32 %v112, 4294901760
    %1637 = vmatpush1.msra.mxu0 %v1636
    %v1638 = vand.u32 %v115, 4294901760
    %1639 = vmatprep.subr.mxu0 %v1638
    %v1640 = vand.u32 %v114, 4294901760
    %1641 = vmatpush1.msra.mxu0 %v1640
    %v1642 = vand.u32 %v117, 4294901760
    %1643 = vmatprep.subr.mxu0 %v1642
    %v1644 = vand.u32 %v116, 4294901760
    %1645 = vmatpush1.msra.mxu0 %v1644
    %v1646 = vand.u32 %v119, 4294901760
    %1647 = vmatprep.subr.mxu0 %v1646
    %v1648 = vand.u32 %v118, 4294901760
    %1649 = vmatpush1.msra.mxu0 %v1648
    %v1650 = vand.u32 %v121, 4294901760
    %1651 = vmatprep.subr.mxu0 %v1650
    %v1652 = vand.u32 %v120, 4294901760
    %1653 = vmatpush1.msra.mxu0 %v1652
    %v1654 = vand.u32 %v123, 4294901760
    %1655 = vmatprep.subr.mxu0 %v1654
    %v1656 = vand.u32 %v122, 4294901760
    %1657 = vmatpush1.msra.mxu0 %v1656
    %v1658 = vand.u32 %v125, 4294901760
    %1659 = vmatprep.subr.mxu0 %v1658
    %v1660 = vand.u32 %v124, 4294901760
    %1661 = vmatpush1.msra.mxu0 %v1660
    %v1662 = vand.u32 %v127, 4294901760
    %1663 = vmatprep.subr.mxu0 %v1662
    %v1664 = vand.u32 %v126, 4294901760
    %1665 = vmatpush1.msra.mxu0 %v1664
    %v1666 = vand.u32 %v129, 4294901760
    %1667 = vmatprep.subr.mxu0 %v1666
    %v1668 = vand.u32 %v128, 4294901760
    %1669 = vmatpush1.msra.mxu0 %v1668
    %v1670 = vand.u32 %v131, 4294901760
    %1671 = vmatprep.subr.mxu0 %v1670
    %v1672 = vand.u32 %v130, 4294901760
    %1673 = vmatpush1.msra.mxu0 %v1672
    %v1674 = vand.u32 %v133, 4294901760
    %1675 = vmatprep.subr.mxu0 %v1674
    %v1676 = vand.u32 %v132, 4294901760
    %1677 = vmatpush1.msra.mxu0 %v1676
    %v1678 = vand.u32 %v135, 4294901760
    %1679 = vmatprep.subr.mxu0 %v1678
    %v1680 = vand.u32 %v134, 4294901760
    %1681 = vmatpush1.msra.mxu0 %v1680
    %v1682 = vand.u32 %v137, 4294901760
    %1683 = vmatprep.subr.mxu0 %v1682
    %v1684 = vand.u32 %v136, 4294901760
    %1685 = vmatpush1.msra.mxu0 %v1684
    %v1686 = vand.u32 %v139, 4294901760
    %1687 = vmatprep.subr.mxu0 %v1686
    %v1688 = vand.u32 %v138, 4294901760
    %1689 = vmatpush1.msra.mxu0 %v1688
    %v1690 = vand.u32 %v141, 4294901760
    %1691 = vmatprep.subr.mxu0 %v1690
    %v1692 = vand.u32 %v140, 4294901760
    %1693 = vmatpush1.msra.mxu0 %v1692
    %v1694 = vand.u32 %v143, 4294901760
    %1695 = vmatprep.subr.mxu0 %v1694
    %v1696 = vand.u32 %v142, 4294901760
    %1697 = vmatpush1.msra.mxu0 %v1696
    %v1698 = vand.u32 %v145, 4294901760
    %1699 = vmatprep.subr.mxu0 %v1698
    %v1700 = vand.u32 %v144, 4294901760
    %1701 = vmatpush1.msra.mxu0 %v1700
    %v1702 = vand.u32 %v147, 4294901760
    %1703 = vmatprep.subr.mxu0 %v1702
    %v1704 = vand.u32 %v146, 4294901760
    %1705 = vmatpush1.msra.mxu0 %v1704
    %v1706 = vand.u32 %v149, 4294901760
    %1707 = vmatprep.subr.mxu0 %v1706
    %v1708 = vand.u32 %v148, 4294901760
    %1709 = vmatpush1.msra.mxu0 %v1708
    %v1710 = vand.u32 %v151, 4294901760
    %1711 = vmatprep.subr.mxu0 %v1710
    %v1712 = vand.u32 %v150, 4294901760
    %1713 = vmatpush1.msra.mxu0 %v1712
    %v1714 = vand.u32 %v153, 4294901760
    %1715 = vmatprep.subr.mxu0 %v1714
    %v1716 = vand.u32 %v152, 4294901760
    %1717 = vmatpush1.msra.mxu0 %v1716
    %v1718 = vand.u32 %v155, 4294901760
    %1719 = vmatprep.subr.mxu0 %v1718
    %v1720 = vand.u32 %v154, 4294901760
    %1721 = vmatpush1.msra.mxu0 %v1720
    %v1722 = vand.u32 %v157, 4294901760
    %1723 = vmatprep.subr.mxu0 %v1722
    %v1724 = vand.u32 %v156, 4294901760
    %1725 = vmatpush1.msra.mxu0 %v1724
    %v1726 = vand.u32 %v159, 4294901760
    %1727 = vmatprep.subr.mxu0 %v1726
    %v1728 = vand.u32 %v158, 4294901760
    %1729 = vmatpush1.msra.mxu0 %v1728
    %v1730 = vand.u32 %v161, 4294901760
    %1731 = vmatprep.subr.mxu0 %v1730
    %v1732 = vand.u32 %v160, 4294901760
    %1733 = vmatpush1.msra.mxu0 %v1732
    %v1734 = vand.u32 %v163, 4294901760
    %1735 = vmatprep.subr.mxu0 %v1734
    %v1736 = vand.u32 %v162, 4294901760
    %1737 = vmatpush1.msra.mxu0 %v1736
    %v1738 = vand.u32 %v165, 4294901760
    %1739 = vmatprep.subr.mxu0 %v1738
    %v1740 = vand.u32 %v164, 4294901760
    %1741 = vmatpush1.msra.mxu0 %v1740
    %v1742 = vand.u32 %v167, 4294901760
    %1743 = vmatprep.subr.mxu0 %v1742
    %v1744 = vand.u32 %v166, 4294901760
    %1745 = vmatpush1.msra.mxu0 %v1744
    %v1746 = vand.u32 %v169, 4294901760
    %1747 = vmatprep.subr.mxu0 %v1746
    %v1748 = vand.u32 %v168, 4294901760
    %1749 = vmatpush1.msra.mxu0 %v1748
    %v1750 = vand.u32 %v171, 4294901760
    %1751 = vmatprep.subr.mxu0 %v1750
    %v1752 = vand.u32 %v170, 4294901760
    %1753 = vmatpush1.msra.mxu0 %v1752
    %v1754 = vand.u32 %v173, 4294901760
    %1755 = vmatprep.subr.mxu0 %v1754
    %v1756 = vand.u32 %v172, 4294901760
    %1757 = vmatpush1.msra.mxu0 %v1756
    %v1758 = vand.u32 %v320, 4294901760
    %v1759 = vsub.f32 %v320, %v1758
    %v1760 = vand.u32 %v1759, 4294901760
    %v1761 = vsub.f32 %v1759, %v1760
    %v1762 = vand.u32 %v1761, 4294901760
    %1763 = vmatprep.mubr.f32.mxu0 %v1762
    %v1764 = vand.u32 %v318, 4294901760
    %v1765 = vsub.f32 %v318, %v1764
    %v1766 = vand.u32 %v1765, 4294901760
    %v1767 = vsub.f32 %v1765, %v1766
    %v1768 = vand.u32 %v1767, 4294901760
    %1769 = vmatmul.mubr.f32.gmra.mrb[0].mxu0 %v1768
    %v1770 = vpop.f32.mrb[0].mxu0
    %v1771 = vadd.f32 %v1626, %v1770
    %v1772 = vpop.f32.mrb[0].mxu0
    %v1773 = vadd.f32 %v1628, %v1772
    %1774 = vdwg.mxu0
    %v1775 = vand.u32 %v111, 4294901760
    %v1776 = vsub.f32 %v111, %v1775
    %v1777 = vand.u32 %v1776, 4294901760
    %v1778 = vsub.f32 %v1776, %v1777
    %v1779 = vand.u32 %v1778, 4294901760
    %1780 = vmatprep.subr.mxu0 %v1779
    %v1781 = vand.u32 %v110, 4294901760
    %v1782 = vsub.f32 %v110, %v1781
    %v1783 = vand.u32 %v1782, 4294901760
    %v1784 = vsub.f32 %v1782, %v1783
    %v1785 = vand.u32 %v1784, 4294901760
    %1786 = vmatpush1.msra.mxu0 %v1785
    %v1787 = vand.u32 %v113, 4294901760
    %v1788 = vsub.f32 %v113, %v1787
    %v1789 = vand.u32 %v1788, 4294901760
    %v1790 = vsub.f32 %v1788, %v1789
    %v1791 = vand.u32 %v1790, 4294901760
    %1792 = vmatprep.subr.mxu0 %v1791
    %v1793 = vand.u32 %v112, 4294901760
    %v1794 = vsub.f32 %v112, %v1793
    %v1795 = vand.u32 %v1794, 4294901760
    %v1796 = vsub.f32 %v1794, %v1795
    %v1797 = vand.u32 %v1796, 4294901760
    %1798 = vmatpush1.msra.mxu0 %v1797
    %v1799 = vand.u32 %v115, 4294901760
    %v1800 = vsub.f32 %v115, %v1799
    %v1801 = vand.u32 %v1800, 4294901760
    %v1802 = vsub.f32 %v1800, %v1801
    %v1803 = vand.u32 %v1802, 4294901760
    %1804 = vmatprep.subr.mxu0 %v1803
    %v1805 = vand.u32 %v114, 4294901760
    %v1806 = vsub.f32 %v114, %v1805
    %v1807 = vand.u32 %v1806, 4294901760
    %v1808 = vsub.f32 %v1806, %v1807
    %v1809 = vand.u32 %v1808, 4294901760
    %1810 = vmatpush1.msra.mxu0 %v1809
    %v1811 = vand.u32 %v117, 4294901760
    %v1812 = vsub.f32 %v117, %v1811
    %v1813 = vand.u32 %v1812, 4294901760
    %v1814 = vsub.f32 %v1812, %v1813
    %v1815 = vand.u32 %v1814, 4294901760
    %1816 = vmatprep.subr.mxu0 %v1815
    %v1817 = vand.u32 %v116, 4294901760
    %v1818 = vsub.f32 %v116, %v1817
    %v1819 = vand.u32 %v1818, 4294901760
    %v1820 = vsub.f32 %v1818, %v1819
    %v1821 = vand.u32 %v1820, 4294901760
    %1822 = vmatpush1.msra.mxu0 %v1821
    %v1823 = vand.u32 %v119, 4294901760
    %v1824 = vsub.f32 %v119, %v1823
    %v1825 = vand.u32 %v1824, 4294901760
    %v1826 = vsub.f32 %v1824, %v1825
    %v1827 = vand.u32 %v1826, 4294901760
    %1828 = vmatprep.subr.mxu0 %v1827
    %v1829 = vand.u32 %v118, 4294901760
    %v1830 = vsub.f32 %v118, %v1829
    %v1831 = vand.u32 %v1830, 4294901760
    %v1832 = vsub.f32 %v1830, %v1831
    %v1833 = vand.u32 %v1832, 4294901760
    %1834 = vmatpush1.msra.mxu0 %v1833
    %v1835 = vand.u32 %v121, 4294901760
    %v1836 = vsub.f32 %v121, %v1835
    %v1837 = vand.u32 %v1836, 4294901760
    %v1838 = vsub.f32 %v1836, %v1837
    %v1839 = vand.u32 %v1838, 4294901760
    %1840 = vmatprep.subr.mxu0 %v1839
    %v1841 = vand.u32 %v120, 4294901760
    %v1842 = vsub.f32 %v120, %v1841
    %v1843 = vand.u32 %v1842, 4294901760
    %v1844 = vsub.f32 %v1842, %v1843
    %v1845 = vand.u32 %v1844, 4294901760
    %1846 = vmatpush1.msra.mxu0 %v1845
    %v1847 = vand.u32 %v123, 4294901760
    %v1848 = vsub.f32 %v123, %v1847
    %v1849 = vand.u32 %v1848, 4294901760
    %v1850 = vsub.f32 %v1848, %v1849
    %v1851 = vand.u32 %v1850, 4294901760
    %1852 = vmatprep.subr.mxu0 %v1851
    %v1853 = vand.u32 %v122, 4294901760
    %v1854 = vsub.f32 %v122, %v1853
    %v1855 = vand.u32 %v1854, 4294901760
    %v1856 = vsub.f32 %v1854, %v1855
    %v1857 = vand.u32 %v1856, 4294901760
    %1858 = vmatpush1.msra.mxu0 %v1857
    %v1859 = vand.u32 %v125, 4294901760
    %v1860 = vsub.f32 %v125, %v1859
    %v1861 = vand.u32 %v1860, 4294901760
    %v1862 = vsub.f32 %v1860, %v1861
    %v1863 = vand.u32 %v1862, 4294901760
    %1864 = vmatprep.subr.mxu0 %v1863
    %v1865 = vand.u32 %v124, 4294901760
    %v1866 = vsub.f32 %v124, %v1865
    %v1867 = vand.u32 %v1866, 4294901760
    %v1868 = vsub.f32 %v1866, %v1867
    %v1869 = vand.u32 %v1868, 4294901760
    %1870 = vmatpush1.msra.mxu0 %v1869
    %v1871 = vand.u32 %v127, 4294901760
    %v1872 = vsub.f32 %v127, %v1871
    %v1873 = vand.u32 %v1872, 4294901760
    %v1874 = vsub.f32 %v1872, %v1873
    %v1875 = vand.u32 %v1874, 4294901760
    %1876 = vmatprep.subr.mxu0 %v1875
    %v1877 = vand.u32 %v126, 4294901760
    %v1878 = vsub.f32 %v126, %v1877
    %v1879 = vand.u32 %v1878, 4294901760
    %v1880 = vsub.f32 %v1878, %v1879
    %v1881 = vand.u32 %v1880, 4294901760
    %1882 = vmatpush1.msra.mxu0 %v1881
    %v1883 = vand.u32 %v129, 4294901760
    %v1884 = vsub.f32 %v129, %v1883
    %v1885 = vand.u32 %v1884, 4294901760
    %v1886 = vsub.f32 %v1884, %v1885
    %v1887 = vand.u32 %v1886, 4294901760
    %1888 = vmatprep.subr.mxu0 %v1887
    %v1889 = vand.u32 %v128, 4294901760
    %v1890 = vsub.f32 %v128, %v1889
    %v1891 = vand.u32 %v1890, 4294901760
    %v1892 = vsub.f32 %v1890, %v1891
    %v1893 = vand.u32 %v1892, 4294901760
    %1894 = vmatpush1.msra.mxu0 %v1893
    %v1895 = vand.u32 %v131, 4294901760
    %v1896 = vsub.f32 %v131, %v1895
    %v1897 = vand.u32 %v1896, 4294901760
    %v1898 = vsub.f32 %v1896, %v1897
    %v1899 = vand.u32 %v1898, 4294901760
    %1900 = vmatprep.subr.mxu0 %v1899
    %v1901 = vand.u32 %v130, 4294901760
    %v1902 = vsub.f32 %v130, %v1901
    %v1903 = vand.u32 %v1902, 4294901760
    %v1904 = vsub.f32 %v1902, %v1903
    %v1905 = vand.u32 %v1904, 4294901760
    %1906 = vmatpush1.msra.mxu0 %v1905
    %v1907 = vand.u32 %v133, 4294901760
    %v1908 = vsub.f32 %v133, %v1907
    %v1909 = vand.u32 %v1908, 4294901760
    %v1910 = vsub.f32 %v1908, %v1909
    %v1911 = vand.u32 %v1910, 4294901760
    %1912 = vmatprep.subr.mxu0 %v1911
    %v1913 = vand.u32 %v132, 4294901760
    %v1914 = vsub.f32 %v132, %v1913
    %v1915 = vand.u32 %v1914, 4294901760
    %v1916 = vsub.f32 %v1914, %v1915
    %v1917 = vand.u32 %v1916, 4294901760
    %1918 = vmatpush1.msra.mxu0 %v1917
    %v1919 = vand.u32 %v135, 4294901760
    %v1920 = vsub.f32 %v135, %v1919
    %v1921 = vand.u32 %v1920, 4294901760
    %v1922 = vsub.f32 %v1920, %v1921
    %v1923 = vand.u32 %v1922, 4294901760
    %1924 = vmatprep.subr.mxu0 %v1923
    %v1925 = vand.u32 %v134, 4294901760
    %v1926 = vsub.f32 %v134, %v1925
    %v1927 = vand.u32 %v1926, 4294901760
    %v1928 = vsub.f32 %v1926, %v1927
    %v1929 = vand.u32 %v1928, 4294901760
    %1930 = vmatpush1.msra.mxu0 %v1929
    %v1931 = vand.u32 %v137, 4294901760
    %v1932 = vsub.f32 %v137, %v1931
    %v1933 = vand.u32 %v1932, 4294901760
    %v1934 = vsub.f32 %v1932, %v1933
    %v1935 = vand.u32 %v1934, 4294901760
    %1936 = vmatprep.subr.mxu0 %v1935
    %v1937 = vand.u32 %v136, 4294901760
    %v1938 = vsub.f32 %v136, %v1937
    %v1939 = vand.u32 %v1938, 4294901760
    %v1940 = vsub.f32 %v1938, %v1939
    %v1941 = vand.u32 %v1940, 4294901760
    %1942 = vmatpush1.msra.mxu0 %v1941
    %v1943 = vand.u32 %v139, 4294901760
    %v1944 = vsub.f32 %v139, %v1943
    %v1945 = vand.u32 %v1944, 4294901760
    %v1946 = vsub.f32 %v1944, %v1945
    %v1947 = vand.u32 %v1946, 4294901760
    %1948 = vmatprep.subr.mxu0 %v1947
    %v1949 = vand.u32 %v138, 4294901760
    %v1950 = vsub.f32 %v138, %v1949
    %v1951 = vand.u32 %v1950, 4294901760
    %v1952 = vsub.f32 %v1950, %v1951
    %v1953 = vand.u32 %v1952, 4294901760
    %1954 = vmatpush1.msra.mxu0 %v1953
    %v1955 = vand.u32 %v141, 4294901760
    %v1956 = vsub.f32 %v141, %v1955
    %v1957 = vand.u32 %v1956, 4294901760
    %v1958 = vsub.f32 %v1956, %v1957
    %v1959 = vand.u32 %v1958, 4294901760
    %1960 = vmatprep.subr.mxu0 %v1959
    %v1961 = vand.u32 %v140, 4294901760
    %v1962 = vsub.f32 %v140, %v1961
    %v1963 = vand.u32 %v1962, 4294901760
    %v1964 = vsub.f32 %v1962, %v1963
    %v1965 = vand.u32 %v1964, 4294901760
    %1966 = vmatpush1.msra.mxu0 %v1965
    %v1967 = vand.u32 %v143, 4294901760
    %v1968 = vsub.f32 %v143, %v1967
    %v1969 = vand.u32 %v1968, 4294901760
    %v1970 = vsub.f32 %v1968, %v1969
    %v1971 = vand.u32 %v1970, 4294901760
    %1972 = vmatprep.subr.mxu0 %v1971
    %v1973 = vand.u32 %v142, 4294901760
    %v1974 = vsub.f32 %v142, %v1973
    %v1975 = vand.u32 %v1974, 4294901760
    %v1976 = vsub.f32 %v1974, %v1975
    %v1977 = vand.u32 %v1976, 4294901760
    %1978 = vmatpush1.msra.mxu0 %v1977
    %v1979 = vand.u32 %v145, 4294901760
    %v1980 = vsub.f32 %v145, %v1979
    %v1981 = vand.u32 %v1980, 4294901760
    %v1982 = vsub.f32 %v1980, %v1981
    %v1983 = vand.u32 %v1982, 4294901760
    %1984 = vmatprep.subr.mxu0 %v1983
    %v1985 = vand.u32 %v144, 4294901760
    %v1986 = vsub.f32 %v144, %v1985
    %v1987 = vand.u32 %v1986, 4294901760
    %v1988 = vsub.f32 %v1986, %v1987
    %v1989 = vand.u32 %v1988, 4294901760
    %1990 = vmatpush1.msra.mxu0 %v1989
    %v1991 = vand.u32 %v147, 4294901760
    %v1992 = vsub.f32 %v147, %v1991
    %v1993 = vand.u32 %v1992, 4294901760
    %v1994 = vsub.f32 %v1992, %v1993
    %v1995 = vand.u32 %v1994, 4294901760
    %1996 = vmatprep.subr.mxu0 %v1995
    %v1997 = vand.u32 %v146, 4294901760
    %v1998 = vsub.f32 %v146, %v1997
    %v1999 = vand.u32 %v1998, 4294901760
    %v2000 = vsub.f32 %v1998, %v1999
    %v2001 = vand.u32 %v2000, 4294901760
    %2002 = vmatpush1.msra.mxu0 %v2001
    %v2003 = vand.u32 %v149, 4294901760
    %v2004 = vsub.f32 %v149, %v2003
    %v2005 = vand.u32 %v2004, 4294901760
    %v2006 = vsub.f32 %v2004, %v2005
    %v2007 = vand.u32 %v2006, 4294901760
    %2008 = vmatprep.subr.mxu0 %v2007
    %v2009 = vand.u32 %v148, 4294901760
    %v2010 = vsub.f32 %v148, %v2009
    %v2011 = vand.u32 %v2010, 4294901760
    %v2012 = vsub.f32 %v2010, %v2011
    %v2013 = vand.u32 %v2012, 4294901760
    %2014 = vmatpush1.msra.mxu0 %v2013
    %v2015 = vand.u32 %v151, 4294901760
    %v2016 = vsub.f32 %v151, %v2015
    %v2017 = vand.u32 %v2016, 4294901760
    %v2018 = vsub.f32 %v2016, %v2017
    %v2019 = vand.u32 %v2018, 4294901760
    %2020 = vmatprep.subr.mxu0 %v2019
    %v2021 = vand.u32 %v150, 4294901760
    %v2022 = vsub.f32 %v150, %v2021
    %v2023 = vand.u32 %v2022, 4294901760
    %v2024 = vsub.f32 %v2022, %v2023
    %v2025 = vand.u32 %v2024, 4294901760
    %2026 = vmatpush1.msra.mxu0 %v2025
    %v2027 = vand.u32 %v153, 4294901760
    %v2028 = vsub.f32 %v153, %v2027
    %v2029 = vand.u32 %v2028, 4294901760
    %v2030 = vsub.f32 %v2028, %v2029
    %v2031 = vand.u32 %v2030, 4294901760
    %2032 = vmatprep.subr.mxu0 %v2031
    %v2033 = vand.u32 %v152, 4294901760
    %v2034 = vsub.f32 %v152, %v2033
    %v2035 = vand.u32 %v2034, 4294901760
    %v2036 = vsub.f32 %v2034, %v2035
    %v2037 = vand.u32 %v2036, 4294901760
    %2038 = vmatpush1.msra.mxu0 %v2037
    %v2039 = vand.u32 %v155, 4294901760
    %v2040 = vsub.f32 %v155, %v2039
    %v2041 = vand.u32 %v2040, 4294901760
    %v2042 = vsub.f32 %v2040, %v2041
    %v2043 = vand.u32 %v2042, 4294901760
    %2044 = vmatprep.subr.mxu0 %v2043
    %v2045 = vand.u32 %v154, 4294901760
    %v2046 = vsub.f32 %v154, %v2045
    %v2047 = vand.u32 %v2046, 4294901760
    %v2048 = vsub.f32 %v2046, %v2047
    %v2049 = vand.u32 %v2048, 4294901760
    %2050 = vmatpush1.msra.mxu0 %v2049
    %v2051 = vand.u32 %v157, 4294901760
    %v2052 = vsub.f32 %v157, %v2051
    %v2053 = vand.u32 %v2052, 4294901760
    %v2054 = vsub.f32 %v2052, %v2053
    %v2055 = vand.u32 %v2054, 4294901760
    %2056 = vmatprep.subr.mxu0 %v2055
    %v2057 = vand.u32 %v156, 4294901760
    %v2058 = vsub.f32 %v156, %v2057
    %v2059 = vand.u32 %v2058, 4294901760
    %v2060 = vsub.f32 %v2058, %v2059
    %v2061 = vand.u32 %v2060, 4294901760
    %2062 = vmatpush1.msra.mxu0 %v2061
    %v2063 = vand.u32 %v159, 4294901760
    %v2064 = vsub.f32 %v159, %v2063
    %v2065 = vand.u32 %v2064, 4294901760
    %v2066 = vsub.f32 %v2064, %v2065
    %v2067 = vand.u32 %v2066, 4294901760
    %2068 = vmatprep.subr.mxu0 %v2067
    %v2069 = vand.u32 %v158, 4294901760
    %v2070 = vsub.f32 %v158, %v2069
    %v2071 = vand.u32 %v2070, 4294901760
    %v2072 = vsub.f32 %v2070, %v2071
    %v2073 = vand.u32 %v2072, 4294901760
    %2074 = vmatpush1.msra.mxu0 %v2073
    %v2075 = vand.u32 %v161, 4294901760
    %v2076 = vsub.f32 %v161, %v2075
    %v2077 = vand.u32 %v2076, 4294901760
    %v2078 = vsub.f32 %v2076, %v2077
    %v2079 = vand.u32 %v2078, 4294901760
    %2080 = vmatprep.subr.mxu0 %v2079
    %v2081 = vand.u32 %v160, 4294901760
    %v2082 = vsub.f32 %v160, %v2081
    %v2083 = vand.u32 %v2082, 4294901760
    %v2084 = vsub.f32 %v2082, %v2083
    %v2085 = vand.u32 %v2084, 4294901760
    %2086 = vmatpush1.msra.mxu0 %v2085
    %v2087 = vand.u32 %v163, 4294901760
    %v2088 = vsub.f32 %v163, %v2087
    %v2089 = vand.u32 %v2088, 4294901760
    %v2090 = vsub.f32 %v2088, %v2089
    %v2091 = vand.u32 %v2090, 4294901760
    %2092 = vmatprep.subr.mxu0 %v2091
    %v2093 = vand.u32 %v162, 4294901760
    %v2094 = vsub.f32 %v162, %v2093
    %v2095 = vand.u32 %v2094, 4294901760
    %v2096 = vsub.f32 %v2094, %v2095
    %v2097 = vand.u32 %v2096, 4294901760
    %2098 = vmatpush1.msra.mxu0 %v2097
    %v2099 = vand.u32 %v165, 4294901760
    %v2100 = vsub.f32 %v165, %v2099
    %v2101 = vand.u32 %v2100, 4294901760
    %v2102 = vsub.f32 %v2100, %v2101
    %v2103 = vand.u32 %v2102, 4294901760
    %2104 = vmatprep.subr.mxu0 %v2103
    %v2105 = vand.u32 %v164, 4294901760
    %v2106 = vsub.f32 %v164, %v2105
    %v2107 = vand.u32 %v2106, 4294901760
    %v2108 = vsub.f32 %v2106, %v2107
    %v2109 = vand.u32 %v2108, 4294901760
    %2110 = vmatpush1.msra.mxu0 %v2109
    %v2111 = vand.u32 %v167, 4294901760
    %v2112 = vsub.f32 %v167, %v2111
    %v2113 = vand.u32 %v2112, 4294901760
    %v2114 = vsub.f32 %v2112, %v2113
    %v2115 = vand.u32 %v2114, 4294901760
    %2116 = vmatprep.subr.mxu0 %v2115
    %v2117 = vand.u32 %v166, 4294901760
    %v2118 = vsub.f32 %v166, %v2117
    %v2119 = vand.u32 %v2118, 4294901760
    %v2120 = vsub.f32 %v2118, %v2119
    %v2121 = vand.u32 %v2120, 4294901760
    %2122 = vmatpush1.msra.mxu0 %v2121
    %v2123 = vand.u32 %v169, 4294901760
    %v2124 = vsub.f32 %v169, %v2123
    %v2125 = vand.u32 %v2124, 4294901760
    %v2126 = vsub.f32 %v2124, %v2125
    %v2127 = vand.u32 %v2126, 4294901760
    %2128 = vmatprep.subr.mxu0 %v2127
    %v2129 = vand.u32 %v168, 4294901760
    %v2130 = vsub.f32 %v168, %v2129
    %v2131 = vand.u32 %v2130, 4294901760
    %v2132 = vsub.f32 %v2130, %v2131
    %v2133 = vand.u32 %v2132, 4294901760
    %2134 = vmatpush1.msra.mxu0 %v2133
    %v2135 = vand.u32 %v171, 4294901760
    %v2136 = vsub.f32 %v171, %v2135
    %v2137 = vand.u32 %v2136, 4294901760
    %v2138 = vsub.f32 %v2136, %v2137
    %v2139 = vand.u32 %v2138, 4294901760
    %2140 = vmatprep.subr.mxu0 %v2139
    %v2141 = vand.u32 %v170, 4294901760
    %v2142 = vsub.f32 %v170, %v2141
    %v2143 = vand.u32 %v2142, 4294901760
    %v2144 = vsub.f32 %v2142, %v2143
    %v2145 = vand.u32 %v2144, 4294901760
    %2146 = vmatpush1.msra.mxu0 %v2145
    %v2147 = vand.u32 %v173, 4294901760
    %v2148 = vsub.f32 %v173, %v2147
    %v2149 = vand.u32 %v2148, 4294901760
    %v2150 = vsub.f32 %v2148, %v2149
    %v2151 = vand.u32 %v2150, 4294901760
    %2152 = vmatprep.subr.mxu0 %v2151
    %v2153 = vand.u32 %v172, 4294901760
    %v2154 = vsub.f32 %v172, %v2153
    %v2155 = vand.u32 %v2154, 4294901760
    %v2156 = vsub.f32 %v2154, %v2155
    %v2157 = vand.u32 %v2156, 4294901760
    %2158 = vmatpush1.msra.mxu0 %v2157
    %v2159 = vand.u32 %v320, 4294901760
    %2160 = vmatprep.mubr.f32.mxu0 %v2159
    %v2161 = vand.u32 %v318, 4294901760
    %2162 = vmatmul.mubr.f32.gmra.mrb[0].mxu0 %v2161
    %v2163 = vpop.f32.mrb[0].mxu0
    %v2164 = vadd.f32 %v1771, %v2163
    %v2165 = vpop.f32.mrb[0].mxu0
    %v2166 = vadd.f32 %v1773, %v2165
    %2167 = vdwg.mxu0
    %v2168 = vand.u32 %v111, 4294901760
    %v2169 = vsub.f32 %v111, %v2168
    %2170 = vmatprep.subr.mxu0 %v2169
    %v2171 = vand.u32 %v110, 4294901760
    %v2172 = vsub.f32 %v110, %v2171
    %2173 = vmatpush1.msra.mxu0 %v2172
    %v2174 = vand.u32 %v113, 4294901760
    %v2175 = vsub.f32 %v113, %v2174
    %2176 = vmatprep.subr.mxu0 %v2175
    %v2177 = vand.u32 %v112, 4294901760
    %v2178 = vsub.f32 %v112, %v2177
    %2179 = vmatpush1.msra.mxu0 %v2178
    %v2180 = vand.u32 %v115, 4294901760
    %v2181 = vsub.f32 %v115, %v2180
    %2182 = vmatprep.subr.mxu0 %v2181
    %v2183 = vand.u32 %v114, 4294901760
    %v2184 = vsub.f32 %v114, %v2183
    %2185 = vmatpush1.msra.mxu0 %v2184
    %v2186 = vand.u32 %v117, 4294901760
    %v2187 = vsub.f32 %v117, %v2186
    %2188 = vmatprep.subr.mxu0 %v2187
    %v2189 = vand.u32 %v116, 4294901760
    %v2190 = vsub.f32 %v116, %v2189
    %2191 = vmatpush1.msra.mxu0 %v2190
    %v2192 = vand.u32 %v119, 4294901760
    %v2193 = vsub.f32 %v119, %v2192
    %2194 = vmatprep.subr.mxu0 %v2193
    %v2195 = vand.u32 %v118, 4294901760
    %v2196 = vsub.f32 %v118, %v2195
    %2197 = vmatpush1.msra.mxu0 %v2196
    %v2198 = vand.u32 %v121, 4294901760
    %v2199 = vsub.f32 %v121, %v2198
    %2200 = vmatprep.subr.mxu0 %v2199
    %v2201 = vand.u32 %v120, 4294901760
    %v2202 = vsub.f32 %v120, %v2201
    %2203 = vmatpush1.msra.mxu0 %v2202
    %v2204 = vand.u32 %v123, 4294901760
    %v2205 = vsub.f32 %v123, %v2204
    %2206 = vmatprep.subr.mxu0 %v2205
    %v2207 = vand.u32 %v122, 4294901760
    %v2208 = vsub.f32 %v122, %v2207
    %2209 = vmatpush1.msra.mxu0 %v2208
    %v2210 = vand.u32 %v125, 4294901760
    %v2211 = vsub.f32 %v125, %v2210
    %2212 = vmatprep.subr.mxu0 %v2211
    %v2213 = vand.u32 %v124, 4294901760
    %v2214 = vsub.f32 %v124, %v2213
    %2215 = vmatpush1.msra.mxu0 %v2214
    %v2216 = vand.u32 %v127, 4294901760
    %v2217 = vsub.f32 %v127, %v2216
    %2218 = vmatprep.subr.mxu0 %v2217
    %v2219 = vand.u32 %v126, 4294901760
    %v2220 = vsub.f32 %v126, %v2219
    %2221 = vmatpush1.msra.mxu0 %v2220
    %v2222 = vand.u32 %v129, 4294901760
    %v2223 = vsub.f32 %v129, %v2222
    %2224 = vmatprep.subr.mxu0 %v2223
    %v2225 = vand.u32 %v128, 4294901760
    %v2226 = vsub.f32 %v128, %v2225
    %2227 = vmatpush1.msra.mxu0 %v2226
    %v2228 = vand.u32 %v131, 4294901760
    %v2229 = vsub.f32 %v131, %v2228
    %2230 = vmatprep.subr.mxu0 %v2229
    %v2231 = vand.u32 %v130, 4294901760
    %v2232 = vsub.f32 %v130, %v2231
    %2233 = vmatpush1.msra.mxu0 %v2232
    %v2234 = vand.u32 %v133, 4294901760
    %v2235 = vsub.f32 %v133, %v2234
    %2236 = vmatprep.subr.mxu0 %v2235
    %v2237 = vand.u32 %v132, 4294901760
    %v2238 = vsub.f32 %v132, %v2237
    %2239 = vmatpush1.msra.mxu0 %v2238
    %v2240 = vand.u32 %v135, 4294901760
    %v2241 = vsub.f32 %v135, %v2240
    %2242 = vmatprep.subr.mxu0 %v2241
    %v2243 = vand.u32 %v134, 4294901760
    %v2244 = vsub.f32 %v134, %v2243
    %2245 = vmatpush1.msra.mxu0 %v2244
    %v2246 = vand.u32 %v137, 4294901760
    %v2247 = vsub.f32 %v137, %v2246
    %2248 = vmatprep.subr.mxu0 %v2247
    %v2249 = vand.u32 %v136, 4294901760
    %v2250 = vsub.f32 %v136, %v2249
    %2251 = vmatpush1.msra.mxu0 %v2250
    %v2252 = vand.u32 %v139, 4294901760
    %v2253 = vsub.f32 %v139, %v2252
    %2254 = vmatprep.subr.mxu0 %v2253
    %v2255 = vand.u32 %v138, 4294901760
    %v2256 = vsub.f32 %v138, %v2255
    %2257 = vmatpush1.msra.mxu0 %v2256
    %v2258 = vand.u32 %v141, 4294901760
    %v2259 = vsub.f32 %v141, %v2258
    %2260 = vmatprep.subr.mxu0 %v2259
    %v2261 = vand.u32 %v140, 4294901760
    %v2262 = vsub.f32 %v140, %v2261
    %2263 = vmatpush1.msra.mxu0 %v2262
    %v2264 = vand.u32 %v143, 4294901760
    %v2265 = vsub.f32 %v143, %v2264
    %2266 = vmatprep.subr.mxu0 %v2265
    %v2267 = vand.u32 %v142, 4294901760
    %v2268 = vsub.f32 %v142, %v2267
    %2269 = vmatpush1.msra.mxu0 %v2268
    %v2270 = vand.u32 %v145, 4294901760
    %v2271 = vsub.f32 %v145, %v2270
    %2272 = vmatprep.subr.mxu0 %v2271
    %v2273 = vand.u32 %v144, 4294901760
    %v2274 = vsub.f32 %v144, %v2273
    %2275 = vmatpush1.msra.mxu0 %v2274
    %v2276 = vand.u32 %v147, 4294901760
    %v2277 = vsub.f32 %v147, %v2276
    %2278 = vmatprep.subr.mxu0 %v2277
    %v2279 = vand.u32 %v146, 4294901760
    %v2280 = vsub.f32 %v146, %v2279
    %2281 = vmatpush1.msra.mxu0 %v2280
    %v2282 = vand.u32 %v149, 4294901760
    %v2283 = vsub.f32 %v149, %v2282
    %2284 = vmatprep.subr.mxu0 %v2283
    %v2285 = vand.u32 %v148, 4294901760
    %v2286 = vsub.f32 %v148, %v2285
    %2287 = vmatpush1.msra.mxu0 %v2286
    %v2288 = vand.u32 %v151, 4294901760
    %v2289 = vsub.f32 %v151, %v2288
    %2290 = vmatprep.subr.mxu0 %v2289
    %v2291 = vand.u32 %v150, 4294901760
    %v2292 = vsub.f32 %v150, %v2291
    %2293 = vmatpush1.msra.mxu0 %v2292
    %v2294 = vand.u32 %v153, 4294901760
    %v2295 = vsub.f32 %v153, %v2294
    %2296 = vmatprep.subr.mxu0 %v2295
    %v2297 = vand.u32 %v152, 4294901760
    %v2298 = vsub.f32 %v152, %v2297
    %2299 = vmatpush1.msra.mxu0 %v2298
    %v2300 = vand.u32 %v155, 4294901760
    %v2301 = vsub.f32 %v155, %v2300
    %2302 = vmatprep.subr.mxu0 %v2301
    %v2303 = vand.u32 %v154, 4294901760
    %v2304 = vsub.f32 %v154, %v2303
    %2305 = vmatpush1.msra.mxu0 %v2304
    %v2306 = vand.u32 %v157, 4294901760
    %v2307 = vsub.f32 %v157, %v2306
    %2308 = vmatprep.subr.mxu0 %v2307
    %v2309 = vand.u32 %v156, 4294901760
    %v2310 = vsub.f32 %v156, %v2309
    %2311 = vmatpush1.msra.mxu0 %v2310
    %v2312 = vand.u32 %v159, 4294901760
    %v2313 = vsub.f32 %v159, %v2312
    %2314 = vmatprep.subr.mxu0 %v2313
    %v2315 = vand.u32 %v158, 4294901760
    %v2316 = vsub.f32 %v158, %v2315
    %2317 = vmatpush1.msra.mxu0 %v2316
    %v2318 = vand.u32 %v161, 4294901760
    %v2319 = vsub.f32 %v161, %v2318
    %2320 = vmatprep.subr.mxu0 %v2319
    %v2321 = vand.u32 %v160, 4294901760
    %v2322 = vsub.f32 %v160, %v2321
    %2323 = vmatpush1.msra.mxu0 %v2322
    %v2324 = vand.u32 %v163, 4294901760
    %v2325 = vsub.f32 %v163, %v2324
    %2326 = vmatprep.subr.mxu0 %v2325
    %v2327 = vand.u32 %v162, 4294901760
    %v2328 = vsub.f32 %v162, %v2327
    %2329 = vmatpush1.msra.mxu0 %v2328
    %v2330 = vand.u32 %v165, 4294901760
    %v2331 = vsub.f32 %v165, %v2330
    %2332 = vmatprep.subr.mxu0 %v2331
    %v2333 = vand.u32 %v164, 4294901760
    %v2334 = vsub.f32 %v164, %v2333
    %2335 = vmatpush1.msra.mxu0 %v2334
    %v2336 = vand.u32 %v167, 4294901760
    %v2337 = vsub.f32 %v167, %v2336
    %2338 = vmatprep.subr.mxu0 %v2337
    %v2339 = vand.u32 %v166, 4294901760
    %v2340 = vsub.f32 %v166, %v2339
    %2341 = vmatpush1.msra.mxu0 %v2340
    %v2342 = vand.u32 %v169, 4294901760
    %v2343 = vsub.f32 %v169, %v2342
    %2344 = vmatprep.subr.mxu0 %v2343
    %v2345 = vand.u32 %v168, 4294901760
    %v2346 = vsub.f32 %v168, %v2345
    %2347 = vmatpush1.msra.mxu0 %v2346
    %v2348 = vand.u32 %v171, 4294901760
    %v2349 = vsub.f32 %v171, %v2348
    %2350 = vmatprep.subr.mxu0 %v2349
    %v2351 = vand.u32 %v170, 4294901760
    %v2352 = vsub.f32 %v170, %v2351
    %2353 = vmatpush1.msra.mxu0 %v2352
    %v2354 = vand.u32 %v173, 4294901760
    %v2355 = vsub.f32 %v173, %v2354
    %2356 = vmatprep.subr.mxu0 %v2355
    %v2357 = vand.u32 %v172, 4294901760
    %v2358 = vsub.f32 %v172, %v2357
    %2359 = vmatpush1.msra.mxu0 %v2358
    %v2360 = vand.u32 %v320, 4294901760
    %v2361 = vsub.f32 %v320, %v2360
    %2362 = vmatprep.mubr.f32.mxu0 %v2361
    %v2363 = vand.u32 %v318, 4294901760
    %v2364 = vsub.f32 %v318, %v2363
    %2365 = vmatmul.mubr.f32.gmra.mrb[0].mxu0 %v2364
    %v2366 = vpop.f32.mrb[0].mxu0
    %v2367 = vadd.f32 %v2164, %v2366
    %v2368 = vpop.f32.mrb[0].mxu0
    %v2369 = vadd.f32 %v2166, %v2368
    %2370 = vdwg.mxu0
    %v2371 = vand.u32 %v111, 4294901760
    %2372 = vmatprep.subr.mxu0 %v2371
    %v2373 = vand.u32 %v110, 4294901760
    %2374 = vmatpush1.msra.mxu0 %v2373
    %v2375 = vand.u32 %v113, 4294901760
    %2376 = vmatprep.subr.mxu0 %v2375
    %v2377 = vand.u32 %v112, 4294901760
    %2378 = vmatpush1.msra.mxu0 %v2377
    %v2379 = vand.u32 %v115, 4294901760
    %2380 = vmatprep.subr.mxu0 %v2379
    %v2381 = vand.u32 %v114, 4294901760
    %2382 = vmatpush1.msra.mxu0 %v2381
    %v2383 = vand.u32 %v117, 4294901760
    %2384 = vmatprep.subr.mxu0 %v2383
    %v2385 = vand.u32 %v116, 4294901760
    %2386 = vmatpush1.msra.mxu0 %v2385
    %v2387 = vand.u32 %v119, 4294901760
    %2388 = vmatprep.subr.mxu0 %v2387
    %v2389 = vand.u32 %v118, 4294901760
    %2390 = vmatpush1.msra.mxu0 %v2389
    %v2391 = vand.u32 %v121, 4294901760
    %2392 = vmatprep.subr.mxu0 %v2391
    %v2393 = vand.u32 %v120, 4294901760
    %2394 = vmatpush1.msra.mxu0 %v2393
    %v2395 = vand.u32 %v123, 4294901760
    %2396 = vmatprep.subr.mxu0 %v2395
    %v2397 = vand.u32 %v122, 4294901760
    %2398 = vmatpush1.msra.mxu0 %v2397
    %v2399 = vand.u32 %v125, 4294901760
    %2400 = vmatprep.subr.mxu0 %v2399
    %v2401 = vand.u32 %v124, 4294901760
    %2402 = vmatpush1.msra.mxu0 %v2401
    %v2403 = vand.u32 %v127, 4294901760
    %2404 = vmatprep.subr.mxu0 %v2403
    %v2405 = vand.u32 %v126, 4294901760
    %2406 = vmatpush1.msra.mxu0 %v2405
    %v2407 = vand.u32 %v129, 4294901760
    %2408 = vmatprep.subr.mxu0 %v2407
    %v2409 = vand.u32 %v128, 4294901760
    %2410 = vmatpush1.msra.mxu0 %v2409
    %v2411 = vand.u32 %v131, 4294901760
    %2412 = vmatprep.subr.mxu0 %v2411
    %v2413 = vand.u32 %v130, 4294901760
    %2414 = vmatpush1.msra.mxu0 %v2413
    %v2415 = vand.u32 %v133, 4294901760
    %2416 = vmatprep.subr.mxu0 %v2415
    %v2417 = vand.u32 %v132, 4294901760
    %2418 = vmatpush1.msra.mxu0 %v2417
    %v2419 = vand.u32 %v135, 4294901760
    %2420 = vmatprep.subr.mxu0 %v2419
    %v2421 = vand.u32 %v134, 4294901760
    %2422 = vmatpush1.msra.mxu0 %v2421
    %v2423 = vand.u32 %v137, 4294901760
    %2424 = vmatprep.subr.mxu0 %v2423
    %v2425 = vand.u32 %v136, 4294901760
    %2426 = vmatpush1.msra.mxu0 %v2425
    %v2427 = vand.u32 %v139, 4294901760
    %2428 = vmatprep.subr.mxu0 %v2427
    %v2429 = vand.u32 %v138, 4294901760
    %2430 = vmatpush1.msra.mxu0 %v2429
    %v2431 = vand.u32 %v141, 4294901760
    %2432 = vmatprep.subr.mxu0 %v2431
    %v2433 = vand.u32 %v140, 4294901760
    %2434 = vmatpush1.msra.mxu0 %v2433
    %v2435 = vand.u32 %v143, 4294901760
    %2436 = vmatprep.subr.mxu0 %v2435
    %v2437 = vand.u32 %v142, 4294901760
    %2438 = vmatpush1.msra.mxu0 %v2437
    %v2439 = vand.u32 %v145, 4294901760
    %2440 = vmatprep.subr.mxu0 %v2439
    %v2441 = vand.u32 %v144, 4294901760
    %2442 = vmatpush1.msra.mxu0 %v2441
    %v2443 = vand.u32 %v147, 4294901760
    %2444 = vmatprep.subr.mxu0 %v2443
    %v2445 = vand.u32 %v146, 4294901760
    %2446 = vmatpush1.msra.mxu0 %v2445
    %v2447 = vand.u32 %v149, 4294901760
    %2448 = vmatprep.subr.mxu0 %v2447
    %v2449 = vand.u32 %v148, 4294901760
    %2450 = vmatpush1.msra.mxu0 %v2449
    %v2451 = vand.u32 %v151, 4294901760
    %2452 = vmatprep.subr.mxu0 %v2451
    %v2453 = vand.u32 %v150, 4294901760
    %2454 = vmatpush1.msra.mxu0 %v2453
    %v2455 = vand.u32 %v153, 4294901760
    %2456 = vmatprep.subr.mxu0 %v2455
    %v2457 = vand.u32 %v152, 4294901760
    %2458 = vmatpush1.msra.mxu0 %v2457
    %v2459 = vand.u32 %v155, 4294901760
    %2460 = vmatprep.subr.mxu0 %v2459
    %v2461 = vand.u32 %v154, 4294901760
    %2462 = vmatpush1.msra.mxu0 %v2461
    %v2463 = vand.u32 %v157, 4294901760
    %2464 = vmatprep.subr.mxu0 %v2463
    %v2465 = vand.u32 %v156, 4294901760
    %2466 = vmatpush1.msra.mxu0 %v2465
    %v2467 = vand.u32 %v159, 4294901760
    %2468 = vmatprep.subr.mxu0 %v2467
    %v2469 = vand.u32 %v158, 4294901760
    %2470 = vmatpush1.msra.mxu0 %v2469
    %v2471 = vand.u32 %v161, 4294901760
    %2472 = vmatprep.subr.mxu0 %v2471
    %v2473 = vand.u32 %v160, 4294901760
    %2474 = vmatpush1.msra.mxu0 %v2473
    %v2475 = vand.u32 %v163, 4294901760
    %2476 = vmatprep.subr.mxu0 %v2475
    %v2477 = vand.u32 %v162, 4294901760
    %2478 = vmatpush1.msra.mxu0 %v2477
    %v2479 = vand.u32 %v165, 4294901760
    %2480 = vmatprep.subr.mxu0 %v2479
    %v2481 = vand.u32 %v164, 4294901760
    %2482 = vmatpush1.msra.mxu0 %v2481
    %v2483 = vand.u32 %v167, 4294901760
    %2484 = vmatprep.subr.mxu0 %v2483
    %v2485 = vand.u32 %v166, 4294901760
    %2486 = vmatpush1.msra.mxu0 %v2485
    %v2487 = vand.u32 %v169, 4294901760
    %2488 = vmatprep.subr.mxu0 %v2487
    %v2489 = vand.u32 %v168, 4294901760
    %2490 = vmatpush1.msra.mxu0 %v2489
    %v2491 = vand.u32 %v171, 4294901760
    %2492 = vmatprep.subr.mxu0 %v2491
    %v2493 = vand.u32 %v170, 4294901760
    %2494 = vmatpush1.msra.mxu0 %v2493
    %v2495 = vand.u32 %v173, 4294901760
    %2496 = vmatprep.subr.mxu0 %v2495
    %v2497 = vand.u32 %v172, 4294901760
    %2498 = vmatpush1.msra.mxu0 %v2497
    %v2499 = vand.u32 %v320, 4294901760
    %v2500 = vsub.f32 %v320, %v2499
    %v2501 = vand.u32 %v2500, 4294901760
    %2502 = vmatprep.mubr.f32.mxu0 %v2501
    %v2503 = vand.u32 %v318, 4294901760
    %v2504 = vsub.f32 %v318, %v2503
    %v2505 = vand.u32 %v2504, 4294901760
    %2506 = vmatmul.mubr.f32.gmra.mrb[0].mxu0 %v2505
    %v2507 = vpop.f32.mrb[0].mxu0
    %v2508 = vadd.f32 %v2367, %v2507
    %v2509 = vpop.f32.mrb[0].mxu0
    %v2510 = vadd.f32 %v2369, %v2509
    %2511 = vdwg.mxu0
    %v2512 = vand.u32 %v111, 4294901760
    %v2513 = vsub.f32 %v111, %v2512
    %v2514 = vand.u32 %v2513, 4294901760
    %2515 = vmatprep.subr.mxu0 %v2514
    %v2516 = vand.u32 %v110, 4294901760
    %v2517 = vsub.f32 %v110, %v2516
    %v2518 = vand.u32 %v2517, 4294901760
    %2519 = vmatpush1.msra.mxu0 %v2518
    %v2520 = vand.u32 %v113, 4294901760
    %v2521 = vsub.f32 %v113, %v2520
    %v2522 = vand.u32 %v2521, 4294901760
    %2523 = vmatprep.subr.mxu0 %v2522
    %v2524 = vand.u32 %v112, 4294901760
    %v2525 = vsub.f32 %v112, %v2524
    %v2526 = vand.u32 %v2525, 4294901760
    %2527 = vmatpush1.msra.mxu0 %v2526
    %v2528 = vand.u32 %v115, 4294901760
    %v2529 = vsub.f32 %v115, %v2528
    %v2530 = vand.u32 %v2529, 4294901760
    %2531 = vmatprep.subr.mxu0 %v2530
    %v2532 = vand.u32 %v114, 4294901760
    %v2533 = vsub.f32 %v114, %v2532
    %v2534 = vand.u32 %v2533, 4294901760
    %2535 = vmatpush1.msra.mxu0 %v2534
    %v2536 = vand.u32 %v117, 4294901760
    %v2537 = vsub.f32 %v117, %v2536
    %v2538 = vand.u32 %v2537, 4294901760
    %2539 = vmatprep.subr.mxu0 %v2538
    %v2540 = vand.u32 %v116, 4294901760
    %v2541 = vsub.f32 %v116, %v2540
    %v2542 = vand.u32 %v2541, 4294901760
    %2543 = vmatpush1.msra.mxu0 %v2542
    %v2544 = vand.u32 %v119, 4294901760
    %v2545 = vsub.f32 %v119, %v2544
    %v2546 = vand.u32 %v2545, 4294901760
    %2547 = vmatprep.subr.mxu0 %v2546
    %v2548 = vand.u32 %v118, 4294901760
    %v2549 = vsub.f32 %v118, %v2548
    %v2550 = vand.u32 %v2549, 4294901760
    %2551 = vmatpush1.msra.mxu0 %v2550
    %v2552 = vand.u32 %v121, 4294901760
    %v2553 = vsub.f32 %v121, %v2552
    %v2554 = vand.u32 %v2553, 4294901760
    %2555 = vmatprep.subr.mxu0 %v2554
    %v2556 = vand.u32 %v120, 4294901760
    %v2557 = vsub.f32 %v120, %v2556
    %v2558 = vand.u32 %v2557, 4294901760
    %2559 = vmatpush1.msra.mxu0 %v2558
    %v2560 = vand.u32 %v123, 4294901760
    %v2561 = vsub.f32 %v123, %v2560
    %v2562 = vand.u32 %v2561, 4294901760
    %2563 = vmatprep.subr.mxu0 %v2562
    %v2564 = vand.u32 %v122, 4294901760
    %v2565 = vsub.f32 %v122, %v2564
    %v2566 = vand.u32 %v2565, 4294901760
    %2567 = vmatpush1.msra.mxu0 %v2566
    %v2568 = vand.u32 %v125, 4294901760
    %v2569 = vsub.f32 %v125, %v2568
    %v2570 = vand.u32 %v2569, 4294901760
    %2571 = vmatprep.subr.mxu0 %v2570
    %v2572 = vand.u32 %v124, 4294901760
    %v2573 = vsub.f32 %v124, %v2572
    %v2574 = vand.u32 %v2573, 4294901760
    %2575 = vmatpush1.msra.mxu0 %v2574
    %v2576 = vand.u32 %v127, 4294901760
    %v2577 = vsub.f32 %v127, %v2576
    %v2578 = vand.u32 %v2577, 4294901760
    %2579 = vmatprep.subr.mxu0 %v2578
    %v2580 = vand.u32 %v126, 4294901760
    %v2581 = vsub.f32 %v126, %v2580
    %v2582 = vand.u32 %v2581, 4294901760
    %2583 = vmatpush1.msra.mxu0 %v2582
    %v2584 = vand.u32 %v129, 4294901760
    %v2585 = vsub.f32 %v129, %v2584
    %v2586 = vand.u32 %v2585, 4294901760
    %2587 = vmatprep.subr.mxu0 %v2586
    %v2588 = vand.u32 %v128, 4294901760
    %v2589 = vsub.f32 %v128, %v2588
    %v2590 = vand.u32 %v2589, 4294901760
    %2591 = vmatpush1.msra.mxu0 %v2590
    %v2592 = vand.u32 %v131, 4294901760
    %v2593 = vsub.f32 %v131, %v2592
    %v2594 = vand.u32 %v2593, 4294901760
    %2595 = vmatprep.subr.mxu0 %v2594
    %v2596 = vand.u32 %v130, 4294901760
    %v2597 = vsub.f32 %v130, %v2596
    %v2598 = vand.u32 %v2597, 4294901760
    %2599 = vmatpush1.msra.mxu0 %v2598
    %v2600 = vand.u32 %v133, 4294901760
    %v2601 = vsub.f32 %v133, %v2600
    %v2602 = vand.u32 %v2601, 4294901760
    %2603 = vmatprep.subr.mxu0 %v2602
    %v2604 = vand.u32 %v132, 4294901760
    %v2605 = vsub.f32 %v132, %v2604
    %v2606 = vand.u32 %v2605, 4294901760
    %2607 = vmatpush1.msra.mxu0 %v2606
    %v2608 = vand.u32 %v135, 4294901760
    %v2609 = vsub.f32 %v135, %v2608
    %v2610 = vand.u32 %v2609, 4294901760
    %2611 = vmatprep.subr.mxu0 %v2610
    %v2612 = vand.u32 %v134, 4294901760
    %v2613 = vsub.f32 %v134, %v2612
    %v2614 = vand.u32 %v2613, 4294901760
    %2615 = vmatpush1.msra.mxu0 %v2614
    %v2616 = vand.u32 %v137, 4294901760
    %v2617 = vsub.f32 %v137, %v2616
    %v2618 = vand.u32 %v2617, 4294901760
    %2619 = vmatprep.subr.mxu0 %v2618
    %v2620 = vand.u32 %v136, 4294901760
    %v2621 = vsub.f32 %v136, %v2620
    %v2622 = vand.u32 %v2621, 4294901760
    %2623 = vmatpush1.msra.mxu0 %v2622
    %v2624 = vand.u32 %v139, 4294901760
    %v2625 = vsub.f32 %v139, %v2624
    %v2626 = vand.u32 %v2625, 4294901760
    %2627 = vmatprep.subr.mxu0 %v2626
    %v2628 = vand.u32 %v138, 4294901760
    %v2629 = vsub.f32 %v138, %v2628
    %v2630 = vand.u32 %v2629, 4294901760
    %2631 = vmatpush1.msra.mxu0 %v2630
    %v2632 = vand.u32 %v141, 4294901760
    %v2633 = vsub.f32 %v141, %v2632
    %v2634 = vand.u32 %v2633, 4294901760
    %2635 = vmatprep.subr.mxu0 %v2634
    %v2636 = vand.u32 %v140, 4294901760
    %v2637 = vsub.f32 %v140, %v2636
    %v2638 = vand.u32 %v2637, 4294901760
    %2639 = vmatpush1.msra.mxu0 %v2638
    %v2640 = vand.u32 %v143, 4294901760
    %v2641 = vsub.f32 %v143, %v2640
    %v2642 = vand.u32 %v2641, 4294901760
    %2643 = vmatprep.subr.mxu0 %v2642
    %v2644 = vand.u32 %v142, 4294901760
    %v2645 = vsub.f32 %v142, %v2644
    %v2646 = vand.u32 %v2645, 4294901760
    %2647 = vmatpush1.msra.mxu0 %v2646
    %v2648 = vand.u32 %v145, 4294901760
    %v2649 = vsub.f32 %v145, %v2648
    %v2650 = vand.u32 %v2649, 4294901760
    %2651 = vmatprep.subr.mxu0 %v2650
    %v2652 = vand.u32 %v144, 4294901760
    %v2653 = vsub.f32 %v144, %v2652
    %v2654 = vand.u32 %v2653, 4294901760
    %2655 = vmatpush1.msra.mxu0 %v2654
    %v2656 = vand.u32 %v147, 4294901760
    %v2657 = vsub.f32 %v147, %v2656
    %v2658 = vand.u32 %v2657, 4294901760
    %2659 = vmatprep.subr.mxu0 %v2658
    %v2660 = vand.u32 %v146, 4294901760
    %v2661 = vsub.f32 %v146, %v2660
    %v2662 = vand.u32 %v2661, 4294901760
    %2663 = vmatpush1.msra.mxu0 %v2662
    %v2664 = vand.u32 %v149, 4294901760
    %v2665 = vsub.f32 %v149, %v2664
    %v2666 = vand.u32 %v2665, 4294901760
    %2667 = vmatprep.subr.mxu0 %v2666
    %v2668 = vand.u32 %v148, 4294901760
    %v2669 = vsub.f32 %v148, %v2668
    %v2670 = vand.u32 %v2669, 4294901760
    %2671 = vmatpush1.msra.mxu0 %v2670
    %v2672 = vand.u32 %v151, 4294901760
    %v2673 = vsub.f32 %v151, %v2672
    %v2674 = vand.u32 %v2673, 4294901760
    %2675 = vmatprep.subr.mxu0 %v2674
    %v2676 = vand.u32 %v150, 4294901760
    %v2677 = vsub.f32 %v150, %v2676
    %v2678 = vand.u32 %v2677, 4294901760
    %2679 = vmatpush1.msra.mxu0 %v2678
    %v2680 = vand.u32 %v153, 4294901760
    %v2681 = vsub.f32 %v153, %v2680
    %v2682 = vand.u32 %v2681, 4294901760
    %2683 = vmatprep.subr.mxu0 %v2682
    %v2684 = vand.u32 %v152, 4294901760
    %v2685 = vsub.f32 %v152, %v2684
    %v2686 = vand.u32 %v2685, 4294901760
    %2687 = vmatpush1.msra.mxu0 %v2686
    %v2688 = vand.u32 %v155, 4294901760
    %v2689 = vsub.f32 %v155, %v2688
    %v2690 = vand.u32 %v2689, 4294901760
    %2691 = vmatprep.subr.mxu0 %v2690
    %v2692 = vand.u32 %v154, 4294901760
    %v2693 = vsub.f32 %v154, %v2692
    %v2694 = vand.u32 %v2693, 4294901760
    %2695 = vmatpush1.msra.mxu0 %v2694
    %v2696 = vand.u32 %v157, 4294901760
    %v2697 = vsub.f32 %v157, %v2696
    %v2698 = vand.u32 %v2697, 4294901760
    %2699 = vmatprep.subr.mxu0 %v2698
    %v2700 = vand.u32 %v156, 4294901760
    %v2701 = vsub.f32 %v156, %v2700
    %v2702 = vand.u32 %v2701, 4294901760
    %2703 = vmatpush1.msra.mxu0 %v2702
    %v2704 = vand.u32 %v159, 4294901760
    %v2705 = vsub.f32 %v159, %v2704
    %v2706 = vand.u32 %v2705, 4294901760
    %2707 = vmatprep.subr.mxu0 %v2706
    %v2708 = vand.u32 %v158, 4294901760
    %v2709 = vsub.f32 %v158, %v2708
    %v2710 = vand.u32 %v2709, 4294901760
    %2711 = vmatpush1.msra.mxu0 %v2710
    %v2712 = vand.u32 %v161, 4294901760
    %v2713 = vsub.f32 %v161, %v2712
    %v2714 = vand.u32 %v2713, 4294901760
    %2715 = vmatprep.subr.mxu0 %v2714
    %v2716 = vand.u32 %v160, 4294901760
    %v2717 = vsub.f32 %v160, %v2716
    %v2718 = vand.u32 %v2717, 4294901760
    %2719 = vmatpush1.msra.mxu0 %v2718
    %v2720 = vand.u32 %v163, 4294901760
    %v2721 = vsub.f32 %v163, %v2720
    %v2722 = vand.u32 %v2721, 4294901760
    %2723 = vmatprep.subr.mxu0 %v2722
    %v2724 = vand.u32 %v162, 4294901760
    %v2725 = vsub.f32 %v162, %v2724
    %v2726 = vand.u32 %v2725, 4294901760
    %2727 = vmatpush1.msra.mxu0 %v2726
    %v2728 = vand.u32 %v165, 4294901760
    %v2729 = vsub.f32 %v165, %v2728
    %v2730 = vand.u32 %v2729, 4294901760
    %2731 = vmatprep.subr.mxu0 %v2730
    %v2732 = vand.u32 %v164, 4294901760
    %v2733 = vsub.f32 %v164, %v2732
    %v2734 = vand.u32 %v2733, 4294901760
    %2735 = vmatpush1.msra.mxu0 %v2734
    %v2736 = vand.u32 %v167, 4294901760
    %v2737 = vsub.f32 %v167, %v2736
    %v2738 = vand.u32 %v2737, 4294901760
    %2739 = vmatprep.subr.mxu0 %v2738
    %v2740 = vand.u32 %v166, 4294901760
    %v2741 = vsub.f32 %v166, %v2740
    %v2742 = vand.u32 %v2741, 4294901760
    %2743 = vmatpush1.msra.mxu0 %v2742
    %v2744 = vand.u32 %v169, 4294901760
    %v2745 = vsub.f32 %v169, %v2744
    %v2746 = vand.u32 %v2745, 4294901760
    %2747 = vmatprep.subr.mxu0 %v2746
    %v2748 = vand.u32 %v168, 4294901760
    %v2749 = vsub.f32 %v168, %v2748
    %v2750 = vand.u32 %v2749, 4294901760
    %2751 = vmatpush1.msra.mxu0 %v2750
    %v2752 = vand.u32 %v171, 4294901760
    %v2753 = vsub.f32 %v171, %v2752
    %v2754 = vand.u32 %v2753, 4294901760
    %2755 = vmatprep.subr.mxu0 %v2754
    %v2756 = vand.u32 %v170, 4294901760
    %v2757 = vsub.f32 %v170, %v2756
    %v2758 = vand.u32 %v2757, 4294901760
    %2759 = vmatpush1.msra.mxu0 %v2758
    %v2760 = vand.u32 %v173, 4294901760
    %v2761 = vsub.f32 %v173, %v2760
    %v2762 = vand.u32 %v2761, 4294901760
    %2763 = vmatprep.subr.mxu0 %v2762
    %v2764 = vand.u32 %v172, 4294901760
    %v2765 = vsub.f32 %v172, %v2764
    %v2766 = vand.u32 %v2765, 4294901760
    %2767 = vmatpush1.msra.mxu0 %v2766
    %v2768 = vand.u32 %v320, 4294901760
    %2769 = vmatprep.mubr.f32.mxu0 %v2768
    %v2770 = vand.u32 %v318, 4294901760
    %2771 = vmatmul.mubr.f32.gmra.mrb[0].mxu0 %v2770
    %v2772 = vpop.f32.mrb[0].mxu0
    %v2773 = vadd.f32 %v2508, %v2772
    %v2774 = vpop.f32.mrb[0].mxu0
    %v2775 = vadd.f32 %v2510, %v2774
    %2776 = vdwg.mxu0
    %v2777 = vand.u32 %v111, 4294901760
    %2778 = vmatprep.subr.mxu0 %v2777
    %v2779 = vand.u32 %v110, 4294901760
    %2780 = vmatpush1.msra.mxu0 %v2779
    %v2781 = vand.u32 %v113, 4294901760
    %2782 = vmatprep.subr.mxu0 %v2781
    %v2783 = vand.u32 %v112, 4294901760
    %2784 = vmatpush1.msra.mxu0 %v2783
    %v2785 = vand.u32 %v115, 4294901760
    %2786 = vmatprep.subr.mxu0 %v2785
    %v2787 = vand.u32 %v114, 4294901760
    %2788 = vmatpush1.msra.mxu0 %v2787
    %v2789 = vand.u32 %v117, 4294901760
    %2790 = vmatprep.subr.mxu0 %v2789
    %v2791 = vand.u32 %v116, 4294901760
    %2792 = vmatpush1.msra.mxu0 %v2791
    %v2793 = vand.u32 %v119, 4294901760
    %2794 = vmatprep.subr.mxu0 %v2793
    %v2795 = vand.u32 %v118, 4294901760
    %2796 = vmatpush1.msra.mxu0 %v2795
    %v2797 = vand.u32 %v121, 4294901760
    %2798 = vmatprep.subr.mxu0 %v2797
    %v2799 = vand.u32 %v120, 4294901760
    %2800 = vmatpush1.msra.mxu0 %v2799
    %v2801 = vand.u32 %v123, 4294901760
    %2802 = vmatprep.subr.mxu0 %v2801
    %v2803 = vand.u32 %v122, 4294901760
    %2804 = vmatpush1.msra.mxu0 %v2803
    %v2805 = vand.u32 %v125, 4294901760
    %2806 = vmatprep.subr.mxu0 %v2805
    %v2807 = vand.u32 %v124, 4294901760
    %2808 = vmatpush1.msra.mxu0 %v2807
    %v2809 = vand.u32 %v127, 4294901760
    %2810 = vmatprep.subr.mxu0 %v2809
    %v2811 = vand.u32 %v126, 4294901760
    %2812 = vmatpush1.msra.mxu0 %v2811
    %v2813 = vand.u32 %v129, 4294901760
    %2814 = vmatprep.subr.mxu0 %v2813
    %v2815 = vand.u32 %v128, 4294901760
    %2816 = vmatpush1.msra.mxu0 %v2815
    %v2817 = vand.u32 %v131, 4294901760
    %2818 = vmatprep.subr.mxu0 %v2817
    %v2819 = vand.u32 %v130, 4294901760
    %2820 = vmatpush1.msra.mxu0 %v2819
    %v2821 = vand.u32 %v133, 4294901760
    %2822 = vmatprep.subr.mxu0 %v2821
    %v2823 = vand.u32 %v132, 4294901760
    %2824 = vmatpush1.msra.mxu0 %v2823
    %v2825 = vand.u32 %v135, 4294901760
    %2826 = vmatprep.subr.mxu0 %v2825
    %v2827 = vand.u32 %v134, 4294901760
    %2828 = vmatpush1.msra.mxu0 %v2827
    %v2829 = vand.u32 %v137, 4294901760
    %2830 = vmatprep.subr.mxu0 %v2829
    %v2831 = vand.u32 %v136, 4294901760
    %2832 = vmatpush1.msra.mxu0 %v2831
    %v2833 = vand.u32 %v139, 4294901760
    %2834 = vmatprep.subr.mxu0 %v2833
    %v2835 = vand.u32 %v138, 4294901760
    %2836 = vmatpush1.msra.mxu0 %v2835
    %v2837 = vand.u32 %v141, 4294901760
    %2838 = vmatprep.subr.mxu0 %v2837
    %v2839 = vand.u32 %v140, 4294901760
    %2840 = vmatpush1.msra.mxu0 %v2839
    %v2841 = vand.u32 %v143, 4294901760
    %2842 = vmatprep.subr.mxu0 %v2841
    %v2843 = vand.u32 %v142, 4294901760
    %2844 = vmatpush1.msra.mxu0 %v2843
    %v2845 = vand.u32 %v145, 4294901760
    %2846 = vmatprep.subr.mxu0 %v2845
    %v2847 = vand.u32 %v144, 4294901760
    %2848 = vmatpush1.msra.mxu0 %v2847
    %v2849 = vand.u32 %v147, 4294901760
    %2850 = vmatprep.subr.mxu0 %v2849
    %v2851 = vand.u32 %v146, 4294901760
    %2852 = vmatpush1.msra.mxu0 %v2851
    %v2853 = vand.u32 %v149, 4294901760
    %2854 = vmatprep.subr.mxu0 %v2853
    %v2855 = vand.u32 %v148, 4294901760
    %2856 = vmatpush1.msra.mxu0 %v2855
    %v2857 = vand.u32 %v151, 4294901760
    %2858 = vmatprep.subr.mxu0 %v2857
    %v2859 = vand.u32 %v150, 4294901760
    %2860 = vmatpush1.msra.mxu0 %v2859
    %v2861 = vand.u32 %v153, 4294901760
    %2862 = vmatprep.subr.mxu0 %v2861
    %v2863 = vand.u32 %v152, 4294901760
    %2864 = vmatpush1.msra.mxu0 %v2863
    %v2865 = vand.u32 %v155, 4294901760
    %2866 = vmatprep.subr.mxu0 %v2865
    %v2867 = vand.u32 %v154, 4294901760
    %2868 = vmatpush1.msra.mxu0 %v2867
    %v2869 = vand.u32 %v157, 4294901760
    %2870 = vmatprep.subr.mxu0 %v2869
    %v2871 = vand.u32 %v156, 4294901760
    %2872 = vmatpush1.msra.mxu0 %v2871
    %v2873 = vand.u32 %v159, 4294901760
    %2874 = vmatprep.subr.mxu0 %v2873
    %v2875 = vand.u32 %v158, 4294901760
    %2876 = vmatpush1.msra.mxu0 %v2875
    %v2877 = vand.u32 %v161, 4294901760
    %2878 = vmatprep.subr.mxu0 %v2877
    %v2879 = vand.u32 %v160, 4294901760
    %2880 = vmatpush1.msra.mxu0 %v2879
    %v2881 = vand.u32 %v163, 4294901760
    %2882 = vmatprep.subr.mxu0 %v2881
    %v2883 = vand.u32 %v162, 4294901760
    %2884 = vmatpush1.msra.mxu0 %v2883
    %v2885 = vand.u32 %v165, 4294901760
    %2886 = vmatprep.subr.mxu0 %v2885
    %v2887 = vand.u32 %v164, 4294901760
    %2888 = vmatpush1.msra.mxu0 %v2887
    %v2889 = vand.u32 %v167, 4294901760
    %2890 = vmatprep.subr.mxu0 %v2889
    %v2891 = vand.u32 %v166, 4294901760
    %2892 = vmatpush1.msra.mxu0 %v2891
    %v2893 = vand.u32 %v169, 4294901760
    %2894 = vmatprep.subr.mxu0 %v2893
    %v2895 = vand.u32 %v168, 4294901760
    %2896 = vmatpush1.msra.mxu0 %v2895
    %v2897 = vand.u32 %v171, 4294901760
    %2898 = vmatprep.subr.mxu0 %v2897
    %v2899 = vand.u32 %v170, 4294901760
    %2900 = vmatpush1.msra.mxu0 %v2899
    %v2901 = vand.u32 %v173, 4294901760
    %2902 = vmatprep.subr.mxu0 %v2901
    %v2903 = vand.u32 %v172, 4294901760
    %2904 = vmatpush1.msra.mxu0 %v2903
    %v2905 = vand.u32 %v320, 4294901760
    %2906 = vmatprep.mubr.f32.mxu0 %v2905
    %v2907 = vand.u32 %v318, 4294901760
    %2908 = vmatmul.mubr.f32.gmra.mrb[0].mxu0 %v2907
    %v2909 = vpop.f32.mrb[0].mxu0
    %v2910 = vadd.f32 %v2773, %v2909
    %v2911 = vpop.f32.mrb[0].mxu0
    %v2912 = vadd.f32 %v2775, %v2911
    %2913 = vdwg.mxu0
    %v2914 = vand.u32 %v175, 4294901760
    %2915 = vmatprep.subr.mxu0 %v2914
    %v2916 = vand.u32 %v174, 4294901760
    %2917 = vmatpush1.msra.mxu0 %v2916
    %v2918 = vand.u32 %v177, 4294901760
    %2919 = vmatprep.subr.mxu0 %v2918
    %v2920 = vand.u32 %v176, 4294901760
    %2921 = vmatpush1.msra.mxu0 %v2920
    %v2922 = vand.u32 %v179, 4294901760
    %2923 = vmatprep.subr.mxu0 %v2922
    %v2924 = vand.u32 %v178, 4294901760
    %2925 = vmatpush1.msra.mxu0 %v2924
    %v2926 = vand.u32 %v181, 4294901760
    %2927 = vmatprep.subr.mxu0 %v2926
    %v2928 = vand.u32 %v180, 4294901760
    %2929 = vmatpush1.msra.mxu0 %v2928
    %v2930 = vand.u32 %v183, 4294901760
    %2931 = vmatprep.subr.mxu0 %v2930
    %v2932 = vand.u32 %v182, 4294901760
    %2933 = vmatpush1.msra.mxu0 %v2932
    %v2934 = vand.u32 %v185, 4294901760
    %2935 = vmatprep.subr.mxu0 %v2934
    %v2936 = vand.u32 %v184, 4294901760
    %2937 = vmatpush1.msra.mxu0 %v2936
    %v2938 = vand.u32 %v187, 4294901760
    %2939 = vmatprep.subr.mxu0 %v2938
    %v2940 = vand.u32 %v186, 4294901760
    %2941 = vmatpush1.msra.mxu0 %v2940
    %v2942 = vand.u32 %v189, 4294901760
    %2943 = vmatprep.subr.mxu0 %v2942
    %v2944 = vand.u32 %v188, 4294901760
    %2945 = vmatpush1.msra.mxu0 %v2944
    %v2946 = vand.u32 %v191, 4294901760
    %2947 = vmatprep.subr.mxu0 %v2946
    %v2948 = vand.u32 %v190, 4294901760
    %2949 = vmatpush1.msra.mxu0 %v2948
    %v2950 = vand.u32 %v193, 4294901760
    %2951 = vmatprep.subr.mxu0 %v2950
    %v2952 = vand.u32 %v192, 4294901760
    %2953 = vmatpush1.msra.mxu0 %v2952
    %v2954 = vand.u32 %v195, 4294901760
    %2955 = vmatprep.subr.mxu0 %v2954
    %v2956 = vand.u32 %v194, 4294901760
    %2957 = vmatpush1.msra.mxu0 %v2956
    %v2958 = vand.u32 %v197, 4294901760
    %2959 = vmatprep.subr.mxu0 %v2958
    %v2960 = vand.u32 %v196, 4294901760
    %2961 = vmatpush1.msra.mxu0 %v2960
    %v2962 = vand.u32 %v199, 4294901760
    %2963 = vmatprep.subr.mxu0 %v2962
    %v2964 = vand.u32 %v198, 4294901760
    %2965 = vmatpush1.msra.mxu0 %v2964
    %v2966 = vand.u32 %v201, 4294901760
    %2967 = vmatprep.subr.mxu0 %v2966
    %v2968 = vand.u32 %v200, 4294901760
    %2969 = vmatpush1.msra.mxu0 %v2968
    %v2970 = vand.u32 %v203, 4294901760
    %2971 = vmatprep.subr.mxu0 %v2970
    %v2972 = vand.u32 %v202, 4294901760
    %2973 = vmatpush1.msra.mxu0 %v2972
    %v2974 = vand.u32 %v205, 4294901760
    %2975 = vmatprep.subr.mxu0 %v2974
    %v2976 = vand.u32 %v204, 4294901760
    %2977 = vmatpush1.msra.mxu0 %v2976
    %v2978 = vand.u32 %v207, 4294901760
    %2979 = vmatprep.subr.mxu0 %v2978
    %v2980 = vand.u32 %v206, 4294901760
    %2981 = vmatpush1.msra.mxu0 %v2980
    %v2982 = vand.u32 %v209, 4294901760
    %2983 = vmatprep.subr.mxu0 %v2982
    %v2984 = vand.u32 %v208, 4294901760
    %2985 = vmatpush1.msra.mxu0 %v2984
    %v2986 = vand.u32 %v211, 4294901760
    %2987 = vmatprep.subr.mxu0 %v2986
    %v2988 = vand.u32 %v210, 4294901760
    %2989 = vmatpush1.msra.mxu0 %v2988
    %v2990 = vand.u32 %v213, 4294901760
    %2991 = vmatprep.subr.mxu0 %v2990
    %v2992 = vand.u32 %v212, 4294901760
    %2993 = vmatpush1.msra.mxu0 %v2992
    %v2994 = vand.u32 %v215, 4294901760
    %2995 = vmatprep.subr.mxu0 %v2994
    %v2996 = vand.u32 %v214, 4294901760
    %2997 = vmatpush1.msra.mxu0 %v2996
    %v2998 = vand.u32 %v217, 4294901760
    %2999 = vmatprep.subr.mxu0 %v2998
    %v3000 = vand.u32 %v216, 4294901760
    %3001 = vmatpush1.msra.mxu0 %v3000
    %v3002 = vand.u32 %v219, 4294901760
    %3003 = vmatprep.subr.mxu0 %v3002
    %v3004 = vand.u32 %v218, 4294901760
    %3005 = vmatpush1.msra.mxu0 %v3004
    %v3006 = vand.u32 %v221, 4294901760
    %3007 = vmatprep.subr.mxu0 %v3006
    %v3008 = vand.u32 %v220, 4294901760
    %3009 = vmatpush1.msra.mxu0 %v3008
    %v3010 = vand.u32 %v223, 4294901760
    %3011 = vmatprep.subr.mxu0 %v3010
    %v3012 = vand.u32 %v222, 4294901760
    %3013 = vmatpush1.msra.mxu0 %v3012
    %v3014 = vand.u32 %v225, 4294901760
    %3015 = vmatprep.subr.mxu0 %v3014
    %v3016 = vand.u32 %v224, 4294901760
    %3017 = vmatpush1.msra.mxu0 %v3016
    %v3018 = vand.u32 %v227, 4294901760
    %3019 = vmatprep.subr.mxu0 %v3018
    %v3020 = vand.u32 %v226, 4294901760
    %3021 = vmatpush1.msra.mxu0 %v3020
    %v3022 = vand.u32 %v229, 4294901760
    %3023 = vmatprep.subr.mxu0 %v3022
    %v3024 = vand.u32 %v228, 4294901760
    %3025 = vmatpush1.msra.mxu0 %v3024
    %v3026 = vand.u32 %v231, 4294901760
    %3027 = vmatprep.subr.mxu0 %v3026
    %v3028 = vand.u32 %v230, 4294901760
    %3029 = vmatpush1.msra.mxu0 %v3028
    %v3030 = vand.u32 %v233, 4294901760
    %3031 = vmatprep.subr.mxu0 %v3030
    %v3032 = vand.u32 %v232, 4294901760
    %3033 = vmatpush1.msra.mxu0 %v3032
    %v3034 = vand.u32 %v235, 4294901760
    %3035 = vmatprep.subr.mxu0 %v3034
    %v3036 = vand.u32 %v234, 4294901760
    %3037 = vmatpush1.msra.mxu0 %v3036
    %v3038 = vand.u32 %v237, 4294901760
    %3039 = vmatprep.subr.mxu0 %v3038
    %v3040 = vand.u32 %v236, 4294901760
    %3041 = vmatpush1.msra.mxu0 %v3040
    %v3042 = vand.u32 %v336, 4294901760
    %v3043 = vsub.f32 %v336, %v3042
    %v3044 = vand.u32 %v3043, 4294901760
    %v3045 = vsub.f32 %v3043, %v3044
    %v3046 = vand.u32 %v3045, 4294901760
    %3047 = vmatprep.mubr.f32.mxu0 %v3046
    %v3048 = vand.u32 %v328, 4294901760
    %v3049 = vsub.f32 %v328, %v3048
    %v3050 = vand.u32 %v3049, 4294901760
    %v3051 = vsub.f32 %v3049, %v3050
    %v3052 = vand.u32 %v3051, 4294901760
    %3053 = vmatmul.mubr.f32.gmra.mrb[0].mxu0 %v3052
    %v3054 = vpop.f32.mrb[0].mxu0
    %v3055 = vadd.f32 %v2910, %v3054
    %v3056 = vpop.f32.mrb[0].mxu0
    %v3057 = vadd.f32 %v2912, %v3056
    %3058 = vdwg.mxu0
    %v3059 = vand.u32 %v175, 4294901760
    %v3060 = vsub.f32 %v175, %v3059
    %v3061 = vand.u32 %v3060, 4294901760
    %v3062 = vsub.f32 %v3060, %v3061
    %v3063 = vand.u32 %v3062, 4294901760
    %3064 = vmatprep.subr.mxu0 %v3063
    %v3065 = vand.u32 %v174, 4294901760
    %v3066 = vsub.f32 %v174, %v3065
    %v3067 = vand.u32 %v3066, 4294901760
    %v3068 = vsub.f32 %v3066, %v3067
    %v3069 = vand.u32 %v3068, 4294901760
    %3070 = vmatpush1.msra.mxu0 %v3069
    %v3071 = vand.u32 %v177, 4294901760
    %v3072 = vsub.f32 %v177, %v3071
    %v3073 = vand.u32 %v3072, 4294901760
    %v3074 = vsub.f32 %v3072, %v3073
    %v3075 = vand.u32 %v3074, 4294901760
    %3076 = vmatprep.subr.mxu0 %v3075
    %v3077 = vand.u32 %v176, 4294901760
    %v3078 = vsub.f32 %v176, %v3077
    %v3079 = vand.u32 %v3078, 4294901760
    %v3080 = vsub.f32 %v3078, %v3079
    %v3081 = vand.u32 %v3080, 4294901760
    %3082 = vmatpush1.msra.mxu0 %v3081
    %v3083 = vand.u32 %v179, 4294901760
    %v3084 = vsub.f32 %v179, %v3083
    %v3085 = vand.u32 %v3084, 4294901760
    %v3086 = vsub.f32 %v3084, %v3085
    %v3087 = vand.u32 %v3086, 4294901760
    %3088 = vmatprep.subr.mxu0 %v3087
    %v3089 = vand.u32 %v178, 4294901760
    %v3090 = vsub.f32 %v178, %v3089
    %v3091 = vand.u32 %v3090, 4294901760
    %v3092 = vsub.f32 %v3090, %v3091
    %v3093 = vand.u32 %v3092, 4294901760
    %3094 = vmatpush1.msra.mxu0 %v3093
    %v3095 = vand.u32 %v181, 4294901760
    %v3096 = vsub.f32 %v181, %v3095
    %v3097 = vand.u32 %v3096, 4294901760
    %v3098 = vsub.f32 %v3096, %v3097
    %v3099 = vand.u32 %v3098, 4294901760
    %3100 = vmatprep.subr.mxu0 %v3099
    %v3101 = vand.u32 %v180, 4294901760
    %v3102 = vsub.f32 %v180, %v3101
    %v3103 = vand.u32 %v3102, 4294901760
    %v3104 = vsub.f32 %v3102, %v3103
    %v3105 = vand.u32 %v3104, 4294901760
    %3106 = vmatpush1.msra.mxu0 %v3105
    %v3107 = vand.u32 %v183, 4294901760
    %v3108 = vsub.f32 %v183, %v3107
    %v3109 = vand.u32 %v3108, 4294901760
    %v3110 = vsub.f32 %v3108, %v3109
    %v3111 = vand.u32 %v3110, 4294901760
    %3112 = vmatprep.subr.mxu0 %v3111
    %v3113 = vand.u32 %v182, 4294901760
    %v3114 = vsub.f32 %v182, %v3113
    %v3115 = vand.u32 %v3114, 4294901760
    %v3116 = vsub.f32 %v3114, %v3115
    %v3117 = vand.u32 %v3116, 4294901760
    %3118 = vmatpush1.msra.mxu0 %v3117
    %v3119 = vand.u32 %v185, 4294901760
    %v3120 = vsub.f32 %v185, %v3119
    %v3121 = vand.u32 %v3120, 4294901760
    %v3122 = vsub.f32 %v3120, %v3121
    %v3123 = vand.u32 %v3122, 4294901760
    %3124 = vmatprep.subr.mxu0 %v3123
    %v3125 = vand.u32 %v184, 4294901760
    %v3126 = vsub.f32 %v184, %v3125
    %v3127 = vand.u32 %v3126, 4294901760
    %v3128 = vsub.f32 %v3126, %v3127
    %v3129 = vand.u32 %v3128, 4294901760
    %3130 = vmatpush1.msra.mxu0 %v3129
    %v3131 = vand.u32 %v187, 4294901760
    %v3132 = vsub.f32 %v187, %v3131
    %v3133 = vand.u32 %v3132, 4294901760
    %v3134 = vsub.f32 %v3132, %v3133
    %v3135 = vand.u32 %v3134, 4294901760
    %3136 = vmatprep.subr.mxu0 %v3135
    %v3137 = vand.u32 %v186, 4294901760
    %v3138 = vsub.f32 %v186, %v3137
    %v3139 = vand.u32 %v3138, 4294901760
    %v3140 = vsub.f32 %v3138, %v3139
    %v3141 = vand.u32 %v3140, 4294901760
    %3142 = vmatpush1.msra.mxu0 %v3141
    %v3143 = vand.u32 %v189, 4294901760
    %v3144 = vsub.f32 %v189, %v3143
    %v3145 = vand.u32 %v3144, 4294901760
    %v3146 = vsub.f32 %v3144, %v3145
    %v3147 = vand.u32 %v3146, 4294901760
    %3148 = vmatprep.subr.mxu0 %v3147
    %v3149 = vand.u32 %v188, 4294901760
    %v3150 = vsub.f32 %v188, %v3149
    %v3151 = vand.u32 %v3150, 4294901760
    %v3152 = vsub.f32 %v3150, %v3151
    %v3153 = vand.u32 %v3152, 4294901760
    %3154 = vmatpush1.msra.mxu0 %v3153
    %v3155 = vand.u32 %v191, 4294901760
    %v3156 = vsub.f32 %v191, %v3155
    %v3157 = vand.u32 %v3156, 4294901760
    %v3158 = vsub.f32 %v3156, %v3157
    %v3159 = vand.u32 %v3158, 4294901760
    %3160 = vmatprep.subr.mxu0 %v3159
    %v3161 = vand.u32 %v190, 4294901760
    %v3162 = vsub.f32 %v190, %v3161
    %v3163 = vand.u32 %v3162, 4294901760
    %v3164 = vsub.f32 %v3162, %v3163
    %v3165 = vand.u32 %v3164, 4294901760
    %3166 = vmatpush1.msra.mxu0 %v3165
    %v3167 = vand.u32 %v193, 4294901760
    %v3168 = vsub.f32 %v193, %v3167
    %v3169 = vand.u32 %v3168, 4294901760
    %v3170 = vsub.f32 %v3168, %v3169
    %v3171 = vand.u32 %v3170, 4294901760
    %3172 = vmatprep.subr.mxu0 %v3171
    %v3173 = vand.u32 %v192, 4294901760
    %v3174 = vsub.f32 %v192, %v3173
    %v3175 = vand.u32 %v3174, 4294901760
    %v3176 = vsub.f32 %v3174, %v3175
    %v3177 = vand.u32 %v3176, 4294901760
    %3178 = vmatpush1.msra.mxu0 %v3177
    %v3179 = vand.u32 %v195, 4294901760
    %v3180 = vsub.f32 %v195, %v3179
    %v3181 = vand.u32 %v3180, 4294901760
    %v3182 = vsub.f32 %v3180, %v3181
    %v3183 = vand.u32 %v3182, 4294901760
    %3184 = vmatprep.subr.mxu0 %v3183
    %v3185 = vand.u32 %v194, 4294901760
    %v3186 = vsub.f32 %v194, %v3185
    %v3187 = vand.u32 %v3186, 4294901760
    %v3188 = vsub.f32 %v3186, %v3187
    %v3189 = vand.u32 %v3188, 4294901760
    %3190 = vmatpush1.msra.mxu0 %v3189
    %v3191 = vand.u32 %v197, 4294901760
    %v3192 = vsub.f32 %v197, %v3191
    %v3193 = vand.u32 %v3192, 4294901760
    %v3194 = vsub.f32 %v3192, %v3193
    %v3195 = vand.u32 %v3194, 4294901760
    %3196 = vmatprep.subr.mxu0 %v3195
    %v3197 = vand.u32 %v196, 4294901760
    %v3198 = vsub.f32 %v196, %v3197
    %v3199 = vand.u32 %v3198, 4294901760
    %v3200 = vsub.f32 %v3198, %v3199
    %v3201 = vand.u32 %v3200, 4294901760
    %3202 = vmatpush1.msra.mxu0 %v3201
    %v3203 = vand.u32 %v199, 4294901760
    %v3204 = vsub.f32 %v199, %v3203
    %v3205 = vand.u32 %v3204, 4294901760
    %v3206 = vsub.f32 %v3204, %v3205
    %v3207 = vand.u32 %v3206, 4294901760
    %3208 = vmatprep.subr.mxu0 %v3207
    %v3209 = vand.u32 %v198, 4294901760
    %v3210 = vsub.f32 %v198, %v3209
    %v3211 = vand.u32 %v3210, 4294901760
    %v3212 = vsub.f32 %v3210, %v3211
    %v3213 = vand.u32 %v3212, 4294901760
    %3214 = vmatpush1.msra.mxu0 %v3213
    %v3215 = vand.u32 %v201, 4294901760
    %v3216 = vsub.f32 %v201, %v3215
    %v3217 = vand.u32 %v3216, 4294901760
    %v3218 = vsub.f32 %v3216, %v3217
    %v3219 = vand.u32 %v3218, 4294901760
    %3220 = vmatprep.subr.mxu0 %v3219
    %v3221 = vand.u32 %v200, 4294901760
    %v3222 = vsub.f32 %v200, %v3221
    %v3223 = vand.u32 %v3222, 4294901760
    %v3224 = vsub.f32 %v3222, %v3223
    %v3225 = vand.u32 %v3224, 4294901760
    %3226 = vmatpush1.msra.mxu0 %v3225
    %v3227 = vand.u32 %v203, 4294901760
    %v3228 = vsub.f32 %v203, %v3227
    %v3229 = vand.u32 %v3228, 4294901760
    %v3230 = vsub.f32 %v3228, %v3229
    %v3231 = vand.u32 %v3230, 4294901760
    %3232 = vmatprep.subr.mxu0 %v3231
    %v3233 = vand.u32 %v202, 4294901760
    %v3234 = vsub.f32 %v202, %v3233
    %v3235 = vand.u32 %v3234, 4294901760
    %v3236 = vsub.f32 %v3234, %v3235
    %v3237 = vand.u32 %v3236, 4294901760
    %3238 = vmatpush1.msra.mxu0 %v3237
    %v3239 = vand.u32 %v205, 4294901760
    %v3240 = vsub.f32 %v205, %v3239
    %v3241 = vand.u32 %v3240, 4294901760
    %v3242 = vsub.f32 %v3240, %v3241
    %v3243 = vand.u32 %v3242, 4294901760
    %3244 = vmatprep.subr.mxu0 %v3243
    %v3245 = vand.u32 %v204, 4294901760
    %v3246 = vsub.f32 %v204, %v3245
    %v3247 = vand.u32 %v3246, 4294901760
    %v3248 = vsub.f32 %v3246, %v3247
    %v3249 = vand.u32 %v3248, 4294901760
    %3250 = vmatpush1.msra.mxu0 %v3249
    %v3251 = vand.u32 %v207, 4294901760
    %v3252 = vsub.f32 %v207, %v3251
    %v3253 = vand.u32 %v3252, 4294901760
    %v3254 = vsub.f32 %v3252, %v3253
    %v3255 = vand.u32 %v3254, 4294901760
    %3256 = vmatprep.subr.mxu0 %v3255
    %v3257 = vand.u32 %v206, 4294901760
    %v3258 = vsub.f32 %v206, %v3257
    %v3259 = vand.u32 %v3258, 4294901760
    %v3260 = vsub.f32 %v3258, %v3259
    %v3261 = vand.u32 %v3260, 4294901760
    %3262 = vmatpush1.msra.mxu0 %v3261
    %v3263 = vand.u32 %v209, 4294901760
    %v3264 = vsub.f32 %v209, %v3263
    %v3265 = vand.u32 %v3264, 4294901760
    %v3266 = vsub.f32 %v3264, %v3265
    %v3267 = vand.u32 %v3266, 4294901760
    %3268 = vmatprep.subr.mxu0 %v3267
    %v3269 = vand.u32 %v208, 4294901760
    %v3270 = vsub.f32 %v208, %v3269
    %v3271 = vand.u32 %v3270, 4294901760
    %v3272 = vsub.f32 %v3270, %v3271
    %v3273 = vand.u32 %v3272, 4294901760
    %3274 = vmatpush1.msra.mxu0 %v3273
    %v3275 = vand.u32 %v211, 4294901760
    %v3276 = vsub.f32 %v211, %v3275
    %v3277 = vand.u32 %v3276, 4294901760
    %v3278 = vsub.f32 %v3276, %v3277
    %v3279 = vand.u32 %v3278, 4294901760
    %3280 = vmatprep.subr.mxu0 %v3279
    %v3281 = vand.u32 %v210, 4294901760
    %v3282 = vsub.f32 %v210, %v3281
    %v3283 = vand.u32 %v3282, 4294901760
    %v3284 = vsub.f32 %v3282, %v3283
    %v3285 = vand.u32 %v3284, 4294901760
    %3286 = vmatpush1.msra.mxu0 %v3285
    %v3287 = vand.u32 %v213, 4294901760
    %v3288 = vsub.f32 %v213, %v3287
    %v3289 = vand.u32 %v3288, 4294901760
    %v3290 = vsub.f32 %v3288, %v3289
    %v3291 = vand.u32 %v3290, 4294901760
    %3292 = vmatprep.subr.mxu0 %v3291
    %v3293 = vand.u32 %v212, 4294901760
    %v3294 = vsub.f32 %v212, %v3293
    %v3295 = vand.u32 %v3294, 4294901760
    %v3296 = vsub.f32 %v3294, %v3295
    %v3297 = vand.u32 %v3296, 4294901760
    %3298 = vmatpush1.msra.mxu0 %v3297
    %v3299 = vand.u32 %v215, 4294901760
    %v3300 = vsub.f32 %v215, %v3299
    %v3301 = vand.u32 %v3300, 4294901760
    %v3302 = vsub.f32 %v3300, %v3301
    %v3303 = vand.u32 %v3302, 4294901760
    %3304 = vmatprep.subr.mxu0 %v3303
    %v3305 = vand.u32 %v214, 4294901760
    %v3306 = vsub.f32 %v214, %v3305
    %v3307 = vand.u32 %v3306, 4294901760
    %v3308 = vsub.f32 %v3306, %v3307
    %v3309 = vand.u32 %v3308, 4294901760
    %3310 = vmatpush1.msra.mxu0 %v3309
    %v3311 = vand.u32 %v217, 4294901760
    %v3312 = vsub.f32 %v217, %v3311
    %v3313 = vand.u32 %v3312, 4294901760
    %v3314 = vsub.f32 %v3312, %v3313
    %v3315 = vand.u32 %v3314, 4294901760
    %3316 = vmatprep.subr.mxu0 %v3315
    %v3317 = vand.u32 %v216, 4294901760
    %v3318 = vsub.f32 %v216, %v3317
    %v3319 = vand.u32 %v3318, 4294901760
    %v3320 = vsub.f32 %v3318, %v3319
    %v3321 = vand.u32 %v3320, 4294901760
    %3322 = vmatpush1.msra.mxu0 %v3321
    %v3323 = vand.u32 %v219, 4294901760
    %v3324 = vsub.f32 %v219, %v3323
    %v3325 = vand.u32 %v3324, 4294901760
    %v3326 = vsub.f32 %v3324, %v3325
    %v3327 = vand.u32 %v3326, 4294901760
    %3328 = vmatprep.subr.mxu0 %v3327
    %v3329 = vand.u32 %v218, 4294901760
    %v3330 = vsub.f32 %v218, %v3329
    %v3331 = vand.u32 %v3330, 4294901760
    %v3332 = vsub.f32 %v3330, %v3331
    %v3333 = vand.u32 %v3332, 4294901760
    %3334 = vmatpush1.msra.mxu0 %v3333
    %v3335 = vand.u32 %v221, 4294901760
    %v3336 = vsub.f32 %v221, %v3335
    %v3337 = vand.u32 %v3336, 4294901760
    %v3338 = vsub.f32 %v3336, %v3337
    %v3339 = vand.u32 %v3338, 4294901760
    %3340 = vmatprep.subr.mxu0 %v3339
    %v3341 = vand.u32 %v220, 4294901760
    %v3342 = vsub.f32 %v220, %v3341
    %v3343 = vand.u32 %v3342, 4294901760
    %v3344 = vsub.f32 %v3342, %v3343
    %v3345 = vand.u32 %v3344, 4294901760
    %3346 = vmatpush1.msra.mxu0 %v3345
    %v3347 = vand.u32 %v223, 4294901760
    %v3348 = vsub.f32 %v223, %v3347
    %v3349 = vand.u32 %v3348, 4294901760
    %v3350 = vsub.f32 %v3348, %v3349
    %v3351 = vand.u32 %v3350, 4294901760
    %3352 = vmatprep.subr.mxu0 %v3351
    %v3353 = vand.u32 %v222, 4294901760
    %v3354 = vsub.f32 %v222, %v3353
    %v3355 = vand.u32 %v3354, 4294901760
    %v3356 = vsub.f32 %v3354, %v3355
    %v3357 = vand.u32 %v3356, 4294901760
    %3358 = vmatpush1.msra.mxu0 %v3357
    %v3359 = vand.u32 %v225, 4294901760
    %v3360 = vsub.f32 %v225, %v3359
    %v3361 = vand.u32 %v3360, 4294901760
    %v3362 = vsub.f32 %v3360, %v3361
    %v3363 = vand.u32 %v3362, 4294901760
    %3364 = vmatprep.subr.mxu0 %v3363
    %v3365 = vand.u32 %v224, 4294901760
    %v3366 = vsub.f32 %v224, %v3365
    %v3367 = vand.u32 %v3366, 4294901760
    %v3368 = vsub.f32 %v3366, %v3367
    %v3369 = vand.u32 %v3368, 4294901760
    %3370 = vmatpush1.msra.mxu0 %v3369
    %v3371 = vand.u32 %v227, 4294901760
    %v3372 = vsub.f32 %v227, %v3371
    %v3373 = vand.u32 %v3372, 4294901760
    %v3374 = vsub.f32 %v3372, %v3373
    %v3375 = vand.u32 %v3374, 4294901760
    %3376 = vmatprep.subr.mxu0 %v3375
    %v3377 = vand.u32 %v226, 4294901760
    %v3378 = vsub.f32 %v226, %v3377
    %v3379 = vand.u32 %v3378, 4294901760
    %v3380 = vsub.f32 %v3378, %v3379
    %v3381 = vand.u32 %v3380, 4294901760
    %3382 = vmatpush1.msra.mxu0 %v3381
    %v3383 = vand.u32 %v229, 4294901760
    %v3384 = vsub.f32 %v229, %v3383
    %v3385 = vand.u32 %v3384, 4294901760
    %v3386 = vsub.f32 %v3384, %v3385
    %v3387 = vand.u32 %v3386, 4294901760
    %3388 = vmatprep.subr.mxu0 %v3387
    %v3389 = vand.u32 %v228, 4294901760
    %v3390 = vsub.f32 %v228, %v3389
    %v3391 = vand.u32 %v3390, 4294901760
    %v3392 = vsub.f32 %v3390, %v3391
    %v3393 = vand.u32 %v3392, 4294901760
    %3394 = vmatpush1.msra.mxu0 %v3393
    %v3395 = vand.u32 %v231, 4294901760
    %v3396 = vsub.f32 %v231, %v3395
    %v3397 = vand.u32 %v3396, 4294901760
    %v3398 = vsub.f32 %v3396, %v3397
    %v3399 = vand.u32 %v3398, 4294901760
    %3400 = vmatprep.subr.mxu0 %v3399
    %v3401 = vand.u32 %v230, 4294901760
    %v3402 = vsub.f32 %v230, %v3401
    %v3403 = vand.u32 %v3402, 4294901760
    %v3404 = vsub.f32 %v3402, %v3403
    %v3405 = vand.u32 %v3404, 4294901760
    %3406 = vmatpush1.msra.mxu0 %v3405
    %v3407 = vand.u32 %v233, 4294901760
    %v3408 = vsub.f32 %v233, %v3407
    %v3409 = vand.u32 %v3408, 4294901760
    %v3410 = vsub.f32 %v3408, %v3409
    %v3411 = vand.u32 %v3410, 4294901760
    %3412 = vmatprep.subr.mxu0 %v3411
    %v3413 = vand.u32 %v232, 4294901760
    %v3414 = vsub.f32 %v232, %v3413
    %v3415 = vand.u32 %v3414, 4294901760
    %v3416 = vsub.f32 %v3414, %v3415
    %v3417 = vand.u32 %v3416, 4294901760
    %3418 = vmatpush1.msra.mxu0 %v3417
    %v3419 = vand.u32 %v235, 4294901760
    %v3420 = vsub.f32 %v235, %v3419
    %v3421 = vand.u32 %v3420, 4294901760
    %v3422 = vsub.f32 %v3420, %v3421
    %v3423 = vand.u32 %v3422, 4294901760
    %3424 = vmatprep.subr.mxu0 %v3423
    %v3425 = vand.u32 %v234, 4294901760
    %v3426 = vsub.f32 %v234, %v3425
    %v3427 = vand.u32 %v3426, 4294901760
    %v3428 = vsub.f32 %v3426, %v3427
    %v3429 = vand.u32 %v3428, 4294901760
    %3430 = vmatpush1.msra.mxu0 %v3429
    %v3431 = vand.u32 %v237, 4294901760
    %v3432 = vsub.f32 %v237, %v3431
    %v3433 = vand.u32 %v3432, 4294901760
    %v3434 = vsub.f32 %v3432, %v3433
    %v3435 = vand.u32 %v3434, 4294901760
    %3436 = vmatprep.subr.mxu0 %v3435
    %v3437 = vand.u32 %v236, 4294901760
    %v3438 = vsub.f32 %v236, %v3437
    %v3439 = vand.u32 %v3438, 4294901760
    %v3440 = vsub.f32 %v3438, %v3439
    %v3441 = vand.u32 %v3440, 4294901760
    %3442 = vmatpush1.msra.mxu0 %v3441
    %v3443 = vand.u32 %v336, 4294901760
    %3444 = vmatprep.mubr.f32.mxu0 %v3443
    %v3445 = vand.u32 %v328, 4294901760
    %3446 = vmatmul.mubr.f32.gmra.mrb[0].mxu0 %v3445
    %v3447 = vpop.f32.mrb[0].mxu0
    %v3448 = vadd.f32 %v3055, %v3447
    %v3449 = vpop.f32.mrb[0].mxu0
    %v3450 = vadd.f32 %v3057, %v3449
    %3451 = vdwg.mxu0
    %v3452 = vand.u32 %v175, 4294901760
    %v3453 = vsub.f32 %v175, %v3452
    %3454 = vmatprep.subr.mxu0 %v3453
    %v3455 = vand.u32 %v174, 4294901760
    %v3456 = vsub.f32 %v174, %v3455
    %3457 = vmatpush1.msra.mxu0 %v3456
    %v3458 = vand.u32 %v177, 4294901760
    %v3459 = vsub.f32 %v177, %v3458
    %3460 = vmatprep.subr.mxu0 %v3459
    %v3461 = vand.u32 %v176, 4294901760
    %v3462 = vsub.f32 %v176, %v3461
    %3463 = vmatpush1.msra.mxu0 %v3462
    %v3464 = vand.u32 %v179, 4294901760
    %v3465 = vsub.f32 %v179, %v3464
    %3466 = vmatprep.subr.mxu0 %v3465
    %v3467 = vand.u32 %v178, 4294901760
    %v3468 = vsub.f32 %v178, %v3467
    %3469 = vmatpush1.msra.mxu0 %v3468
    %v3470 = vand.u32 %v181, 4294901760
    %v3471 = vsub.f32 %v181, %v3470
    %3472 = vmatprep.subr.mxu0 %v3471
    %v3473 = vand.u32 %v180, 4294901760
    %v3474 = vsub.f32 %v180, %v3473
    %3475 = vmatpush1.msra.mxu0 %v3474
    %v3476 = vand.u32 %v183, 4294901760
    %v3477 = vsub.f32 %v183, %v3476
    %3478 = vmatprep.subr.mxu0 %v3477
    %v3479 = vand.u32 %v182, 4294901760
    %v3480 = vsub.f32 %v182, %v3479
    %3481 = vmatpush1.msra.mxu0 %v3480
    %v3482 = vand.u32 %v185, 4294901760
    %v3483 = vsub.f32 %v185, %v3482
    %3484 = vmatprep.subr.mxu0 %v3483
    %v3485 = vand.u32 %v184, 4294901760
    %v3486 = vsub.f32 %v184, %v3485
    %3487 = vmatpush1.msra.mxu0 %v3486
    %v3488 = vand.u32 %v187, 4294901760
    %v3489 = vsub.f32 %v187, %v3488
    %3490 = vmatprep.subr.mxu0 %v3489
    %v3491 = vand.u32 %v186, 4294901760
    %v3492 = vsub.f32 %v186, %v3491
    %3493 = vmatpush1.msra.mxu0 %v3492
    %v3494 = vand.u32 %v189, 4294901760
    %v3495 = vsub.f32 %v189, %v3494
    %3496 = vmatprep.subr.mxu0 %v3495
    %v3497 = vand.u32 %v188, 4294901760
    %v3498 = vsub.f32 %v188, %v3497
    %3499 = vmatpush1.msra.mxu0 %v3498
    %v3500 = vand.u32 %v191, 4294901760
    %v3501 = vsub.f32 %v191, %v3500
    %3502 = vmatprep.subr.mxu0 %v3501
    %v3503 = vand.u32 %v190, 4294901760
    %v3504 = vsub.f32 %v190, %v3503
    %3505 = vmatpush1.msra.mxu0 %v3504
    %v3506 = vand.u32 %v193, 4294901760
    %v3507 = vsub.f32 %v193, %v3506
    %3508 = vmatprep.subr.mxu0 %v3507
    %v3509 = vand.u32 %v192, 4294901760
    %v3510 = vsub.f32 %v192, %v3509
    %3511 = vmatpush1.msra.mxu0 %v3510
    %v3512 = vand.u32 %v195, 4294901760
    %v3513 = vsub.f32 %v195, %v3512
    %3514 = vmatprep.subr.mxu0 %v3513
    %v3515 = vand.u32 %v194, 4294901760
    %v3516 = vsub.f32 %v194, %v3515
    %3517 = vmatpush1.msra.mxu0 %v3516
    %v3518 = vand.u32 %v197, 4294901760
    %v3519 = vsub.f32 %v197, %v3518
    %3520 = vmatprep.subr.mxu0 %v3519
    %v3521 = vand.u32 %v196, 4294901760
    %v3522 = vsub.f32 %v196, %v3521
    %3523 = vmatpush1.msra.mxu0 %v3522
    %v3524 = vand.u32 %v199, 4294901760
    %v3525 = vsub.f32 %v199, %v3524
    %3526 = vmatprep.subr.mxu0 %v3525
    %v3527 = vand.u32 %v198, 4294901760
    %v3528 = vsub.f32 %v198, %v3527
    %3529 = vmatpush1.msra.mxu0 %v3528
    %v3530 = vand.u32 %v201, 4294901760
    %v3531 = vsub.f32 %v201, %v3530
    %3532 = vmatprep.subr.mxu0 %v3531
    %v3533 = vand.u32 %v200, 4294901760
    %v3534 = vsub.f32 %v200, %v3533
    %3535 = vmatpush1.msra.mxu0 %v3534
    %v3536 = vand.u32 %v203, 4294901760
    %v3537 = vsub.f32 %v203, %v3536
    %3538 = vmatprep.subr.mxu0 %v3537
    %v3539 = vand.u32 %v202, 4294901760
    %v3540 = vsub.f32 %v202, %v3539
    %3541 = vmatpush1.msra.mxu0 %v3540
    %v3542 = vand.u32 %v205, 4294901760
    %v3543 = vsub.f32 %v205, %v3542
    %3544 = vmatprep.subr.mxu0 %v3543
    %v3545 = vand.u32 %v204, 4294901760
    %v3546 = vsub.f32 %v204, %v3545
    %3547 = vmatpush1.msra.mxu0 %v3546
    %v3548 = vand.u32 %v207, 4294901760
    %v3549 = vsub.f32 %v207, %v3548
    %3550 = vmatprep.subr.mxu0 %v3549
    %v3551 = vand.u32 %v206, 4294901760
    %v3552 = vsub.f32 %v206, %v3551
    %3553 = vmatpush1.msra.mxu0 %v3552
    %v3554 = vand.u32 %v209, 4294901760
    %v3555 = vsub.f32 %v209, %v3554
    %3556 = vmatprep.subr.mxu0 %v3555
    %v3557 = vand.u32 %v208, 4294901760
    %v3558 = vsub.f32 %v208, %v3557
    %3559 = vmatpush1.msra.mxu0 %v3558
    %v3560 = vand.u32 %v211, 4294901760
    %v3561 = vsub.f32 %v211, %v3560
    %3562 = vmatprep.subr.mxu0 %v3561
    %v3563 = vand.u32 %v210, 4294901760
    %v3564 = vsub.f32 %v210, %v3563
    %3565 = vmatpush1.msra.mxu0 %v3564
    %v3566 = vand.u32 %v213, 4294901760
    %v3567 = vsub.f32 %v213, %v3566
    %3568 = vmatprep.subr.mxu0 %v3567
    %v3569 = vand.u32 %v212, 4294901760
    %v3570 = vsub.f32 %v212, %v3569
    %3571 = vmatpush1.msra.mxu0 %v3570
    %v3572 = vand.u32 %v215, 4294901760
    %v3573 = vsub.f32 %v215, %v3572
    %3574 = vmatprep.subr.mxu0 %v3573
    %v3575 = vand.u32 %v214, 4294901760
    %v3576 = vsub.f32 %v214, %v3575
    %3577 = vmatpush1.msra.mxu0 %v3576
    %v3578 = vand.u32 %v217, 4294901760
    %v3579 = vsub.f32 %v217, %v3578
    %3580 = vmatprep.subr.mxu0 %v3579
    %v3581 = vand.u32 %v216, 4294901760
    %v3582 = vsub.f32 %v216, %v3581
    %3583 = vmatpush1.msra.mxu0 %v3582
    %v3584 = vand.u32 %v219, 4294901760
    %v3585 = vsub.f32 %v219, %v3584
    %3586 = vmatprep.subr.mxu0 %v3585
    %v3587 = vand.u32 %v218, 4294901760
    %v3588 = vsub.f32 %v218, %v3587
    %3589 = vmatpush1.msra.mxu0 %v3588
    %v3590 = vand.u32 %v221, 4294901760
    %v3591 = vsub.f32 %v221, %v3590
    %3592 = vmatprep.subr.mxu0 %v3591
    %v3593 = vand.u32 %v220, 4294901760
    %v3594 = vsub.f32 %v220, %v3593
    %3595 = vmatpush1.msra.mxu0 %v3594
    %v3596 = vand.u32 %v223, 4294901760
    %v3597 = vsub.f32 %v223, %v3596
    %3598 = vmatprep.subr.mxu0 %v3597
    %v3599 = vand.u32 %v222, 4294901760
    %v3600 = vsub.f32 %v222, %v3599
    %3601 = vmatpush1.msra.mxu0 %v3600
    %v3602 = vand.u32 %v225, 4294901760
    %v3603 = vsub.f32 %v225, %v3602
    %3604 = vmatprep.subr.mxu0 %v3603
    %v3605 = vand.u32 %v224, 4294901760
    %v3606 = vsub.f32 %v224, %v3605
    %3607 = vmatpush1.msra.mxu0 %v3606
    %v3608 = vand.u32 %v227, 4294901760
    %v3609 = vsub.f32 %v227, %v3608
    %3610 = vmatprep.subr.mxu0 %v3609
    %v3611 = vand.u32 %v226, 4294901760
    %v3612 = vsub.f32 %v226, %v3611
    %3613 = vmatpush1.msra.mxu0 %v3612
    %v3614 = vand.u32 %v229, 4294901760
    %v3615 = vsub.f32 %v229, %v3614
    %3616 = vmatprep.subr.mxu0 %v3615
    %v3617 = vand.u32 %v228, 4294901760
    %v3618 = vsub.f32 %v228, %v3617
    %3619 = vmatpush1.msra.mxu0 %v3618
    %v3620 = vand.u32 %v231, 4294901760
    %v3621 = vsub.f32 %v231, %v3620
    %3622 = vmatprep.subr.mxu0 %v3621
    %v3623 = vand.u32 %v230, 4294901760
    %v3624 = vsub.f32 %v230, %v3623
    %3625 = vmatpush1.msra.mxu0 %v3624
    %v3626 = vand.u32 %v233, 4294901760
    %v3627 = vsub.f32 %v233, %v3626
    %3628 = vmatprep.subr.mxu0 %v3627
    %v3629 = vand.u32 %v232, 4294901760
    %v3630 = vsub.f32 %v232, %v3629
    %3631 = vmatpush1.msra.mxu0 %v3630
    %v3632 = vand.u32 %v235, 4294901760
    %v3633 = vsub.f32 %v235, %v3632
    %3634 = vmatprep.subr.mxu0 %v3633
    %v3635 = vand.u32 %v234, 4294901760
    %v3636 = vsub.f32 %v234, %v3635
    %3637 = vmatpush1.msra.mxu0 %v3636
    %v3638 = vand.u32 %v237, 4294901760
    %v3639 = vsub.f32 %v237, %v3638
    %3640 = vmatprep.subr.mxu0 %v3639
    %v3641 = vand.u32 %v236, 4294901760
    %v3642 = vsub.f32 %v236, %v3641
    %3643 = vmatpush1.msra.mxu0 %v3642
    %v3644 = vand.u32 %v336, 4294901760
    %v3645 = vsub.f32 %v336, %v3644
    %3646 = vmatprep.mubr.f32.mxu0 %v3645
    %v3647 = vand.u32 %v328, 4294901760
    %v3648 = vsub.f32 %v328, %v3647
    %3649 = vmatmul.mubr.f32.gmra.mrb[0].mxu0 %v3648
    %v3650 = vpop.f32.mrb[0].mxu0
    %v3651 = vadd.f32 %v3448, %v3650
    %v3652 = vpop.f32.mrb[0].mxu0
    %v3653 = vadd.f32 %v3450, %v3652
    %3654 = vdwg.mxu0
    %v3655 = vand.u32 %v175, 4294901760
    %3656 = vmatprep.subr.mxu0 %v3655
    %v3657 = vand.u32 %v174, 4294901760
    %3658 = vmatpush1.msra.mxu0 %v3657
    %v3659 = vand.u32 %v177, 4294901760
    %3660 = vmatprep.subr.mxu0 %v3659
    %v3661 = vand.u32 %v176, 4294901760
    %3662 = vmatpush1.msra.mxu0 %v3661
    %v3663 = vand.u32 %v179, 4294901760
    %3664 = vmatprep.subr.mxu0 %v3663
    %v3665 = vand.u32 %v178, 4294901760
    %3666 = vmatpush1.msra.mxu0 %v3665
    %v3667 = vand.u32 %v181, 4294901760
    %3668 = vmatprep.subr.mxu0 %v3667
    %v3669 = vand.u32 %v180, 4294901760
    %3670 = vmatpush1.msra.mxu0 %v3669
    %v3671 = vand.u32 %v183, 4294901760
    %3672 = vmatprep.subr.mxu0 %v3671
    %v3673 = vand.u32 %v182, 4294901760
    %3674 = vmatpush1.msra.mxu0 %v3673
    %v3675 = vand.u32 %v185, 4294901760
    %3676 = vmatprep.subr.mxu0 %v3675
    %v3677 = vand.u32 %v184, 4294901760
    %3678 = vmatpush1.msra.mxu0 %v3677
    %v3679 = vand.u32 %v187, 4294901760
    %3680 = vmatprep.subr.mxu0 %v3679
    %v3681 = vand.u32 %v186, 4294901760
    %3682 = vmatpush1.msra.mxu0 %v3681
    %v3683 = vand.u32 %v189, 4294901760
    %3684 = vmatprep.subr.mxu0 %v3683
    %v3685 = vand.u32 %v188, 4294901760
    %3686 = vmatpush1.msra.mxu0 %v3685
    %v3687 = vand.u32 %v191, 4294901760
    %3688 = vmatprep.subr.mxu0 %v3687
    %v3689 = vand.u32 %v190, 4294901760
    %3690 = vmatpush1.msra.mxu0 %v3689
    %v3691 = vand.u32 %v193, 4294901760
    %3692 = vmatprep.subr.mxu0 %v3691
    %v3693 = vand.u32 %v192, 4294901760
    %3694 = vmatpush1.msra.mxu0 %v3693
    %v3695 = vand.u32 %v195, 4294901760
    %3696 = vmatprep.subr.mxu0 %v3695
    %v3697 = vand.u32 %v194, 4294901760
    %3698 = vmatpush1.msra.mxu0 %v3697
    %v3699 = vand.u32 %v197, 4294901760
    %3700 = vmatprep.subr.mxu0 %v3699
    %v3701 = vand.u32 %v196, 4294901760
    %3702 = vmatpush1.msra.mxu0 %v3701
    %v3703 = vand.u32 %v199, 4294901760
    %3704 = vmatprep.subr.mxu0 %v3703
    %v3705 = vand.u32 %v198, 4294901760
    %3706 = vmatpush1.msra.mxu0 %v3705
    %v3707 = vand.u32 %v201, 4294901760
    %3708 = vmatprep.subr.mxu0 %v3707
    %v3709 = vand.u32 %v200, 4294901760
    %3710 = vmatpush1.msra.mxu0 %v3709
    %v3711 = vand.u32 %v203, 4294901760
    %3712 = vmatprep.subr.mxu0 %v3711
    %v3713 = vand.u32 %v202, 4294901760
    %3714 = vmatpush1.msra.mxu0 %v3713
    %v3715 = vand.u32 %v205, 4294901760
    %3716 = vmatprep.subr.mxu0 %v3715
    %v3717 = vand.u32 %v204, 4294901760
    %3718 = vmatpush1.msra.mxu0 %v3717
    %v3719 = vand.u32 %v207, 4294901760
    %3720 = vmatprep.subr.mxu0 %v3719
    %v3721 = vand.u32 %v206, 4294901760
    %3722 = vmatpush1.msra.mxu0 %v3721
    %v3723 = vand.u32 %v209, 4294901760
    %3724 = vmatprep.subr.mxu0 %v3723
    %v3725 = vand.u32 %v208, 4294901760
    %3726 = vmatpush1.msra.mxu0 %v3725
    %v3727 = vand.u32 %v211, 4294901760
    %3728 = vmatprep.subr.mxu0 %v3727
    %v3729 = vand.u32 %v210, 4294901760
    %3730 = vmatpush1.msra.mxu0 %v3729
    %v3731 = vand.u32 %v213, 4294901760
    %3732 = vmatprep.subr.mxu0 %v3731
    %v3733 = vand.u32 %v212, 4294901760
    %3734 = vmatpush1.msra.mxu0 %v3733
    %v3735 = vand.u32 %v215, 4294901760
    %3736 = vmatprep.subr.mxu0 %v3735
    %v3737 = vand.u32 %v214, 4294901760
    %3738 = vmatpush1.msra.mxu0 %v3737
    %v3739 = vand.u32 %v217, 4294901760
    %3740 = vmatprep.subr.mxu0 %v3739
    %v3741 = vand.u32 %v216, 4294901760
    %3742 = vmatpush1.msra.mxu0 %v3741
    %v3743 = vand.u32 %v219, 4294901760
    %3744 = vmatprep.subr.mxu0 %v3743
    %v3745 = vand.u32 %v218, 4294901760
    %3746 = vmatpush1.msra.mxu0 %v3745
    %v3747 = vand.u32 %v221, 4294901760
    %3748 = vmatprep.subr.mxu0 %v3747
    %v3749 = vand.u32 %v220, 4294901760
    %3750 = vmatpush1.msra.mxu0 %v3749
    %v3751 = vand.u32 %v223, 4294901760
    %3752 = vmatprep.subr.mxu0 %v3751
    %v3753 = vand.u32 %v222, 4294901760
    %3754 = vmatpush1.msra.mxu0 %v3753
    %v3755 = vand.u32 %v225, 4294901760
    %3756 = vmatprep.subr.mxu0 %v3755
    %v3757 = vand.u32 %v224, 4294901760
    %3758 = vmatpush1.msra.mxu0 %v3757
    %v3759 = vand.u32 %v227, 4294901760
    %3760 = vmatprep.subr.mxu0 %v3759
    %v3761 = vand.u32 %v226, 4294901760
    %3762 = vmatpush1.msra.mxu0 %v3761
    %v3763 = vand.u32 %v229, 4294901760
    %3764 = vmatprep.subr.mxu0 %v3763
    %v3765 = vand.u32 %v228, 4294901760
    %3766 = vmatpush1.msra.mxu0 %v3765
    %v3767 = vand.u32 %v231, 4294901760
    %3768 = vmatprep.subr.mxu0 %v3767
    %v3769 = vand.u32 %v230, 4294901760
    %3770 = vmatpush1.msra.mxu0 %v3769
    %v3771 = vand.u32 %v233, 4294901760
    %3772 = vmatprep.subr.mxu0 %v3771
    %v3773 = vand.u32 %v232, 4294901760
    %3774 = vmatpush1.msra.mxu0 %v3773
    %v3775 = vand.u32 %v235, 4294901760
    %3776 = vmatprep.subr.mxu0 %v3775
    %v3777 = vand.u32 %v234, 4294901760
    %3778 = vmatpush1.msra.mxu0 %v3777
    %v3779 = vand.u32 %v237, 4294901760
    %3780 = vmatprep.subr.mxu0 %v3779
    %v3781 = vand.u32 %v236, 4294901760
    %3782 = vmatpush1.msra.mxu0 %v3781
    %v3783 = vand.u32 %v336, 4294901760
    %v3784 = vsub.f32 %v336, %v3783
    %v3785 = vand.u32 %v3784, 4294901760
    %3786 = vmatprep.mubr.f32.mxu0 %v3785
    %v3787 = vand.u32 %v328, 4294901760
    %v3788 = vsub.f32 %v328, %v3787
    %v3789 = vand.u32 %v3788, 4294901760
    %3790 = vmatmul.mubr.f32.gmra.mrb[0].mxu0 %v3789
    %v3791 = vpop.f32.mrb[0].mxu0
    %v3792 = vadd.f32 %v3651, %v3791
    %v3793 = vpop.f32.mrb[0].mxu0
    %v3794 = vadd.f32 %v3653, %v3793
    %3795 = vdwg.mxu0
    %v3796 = vand.u32 %v175, 4294901760
    %v3797 = vsub.f32 %v175, %v3796
    %v3798 = vand.u32 %v3797, 4294901760
    %3799 = vmatprep.subr.mxu0 %v3798
    %v3800 = vand.u32 %v174, 4294901760
    %v3801 = vsub.f32 %v174, %v3800
    %v3802 = vand.u32 %v3801, 4294901760
    %3803 = vmatpush1.msra.mxu0 %v3802
    %v3804 = vand.u32 %v177, 4294901760
    %v3805 = vsub.f32 %v177, %v3804
    %v3806 = vand.u32 %v3805, 4294901760
    %3807 = vmatprep.subr.mxu0 %v3806
    %v3808 = vand.u32 %v176, 4294901760
    %v3809 = vsub.f32 %v176, %v3808
    %v3810 = vand.u32 %v3809, 4294901760
    %3811 = vmatpush1.msra.mxu0 %v3810
    %v3812 = vand.u32 %v179, 4294901760
    %v3813 = vsub.f32 %v179, %v3812
    %v3814 = vand.u32 %v3813, 4294901760
    %3815 = vmatprep.subr.mxu0 %v3814
    %v3816 = vand.u32 %v178, 4294901760
    %v3817 = vsub.f32 %v178, %v3816
    %v3818 = vand.u32 %v3817, 4294901760
    %3819 = vmatpush1.msra.mxu0 %v3818
    %v3820 = vand.u32 %v181, 4294901760
    %v3821 = vsub.f32 %v181, %v3820
    %v3822 = vand.u32 %v3821, 4294901760
    %3823 = vmatprep.subr.mxu0 %v3822
    %v3824 = vand.u32 %v180, 4294901760
    %v3825 = vsub.f32 %v180, %v3824
    %v3826 = vand.u32 %v3825, 4294901760
    %3827 = vmatpush1.msra.mxu0 %v3826
    %v3828 = vand.u32 %v183, 4294901760
    %v3829 = vsub.f32 %v183, %v3828
    %v3830 = vand.u32 %v3829, 4294901760
    %3831 = vmatprep.subr.mxu0 %v3830
    %v3832 = vand.u32 %v182, 4294901760
    %v3833 = vsub.f32 %v182, %v3832
    %v3834 = vand.u32 %v3833, 4294901760
    %3835 = vmatpush1.msra.mxu0 %v3834
    %v3836 = vand.u32 %v185, 4294901760
    %v3837 = vsub.f32 %v185, %v3836
    %v3838 = vand.u32 %v3837, 4294901760
    %3839 = vmatprep.subr.mxu0 %v3838
    %v3840 = vand.u32 %v184, 4294901760
    %v3841 = vsub.f32 %v184, %v3840
    %v3842 = vand.u32 %v3841, 4294901760
    %3843 = vmatpush1.msra.mxu0 %v3842
    %v3844 = vand.u32 %v187, 4294901760
    %v3845 = vsub.f32 %v187, %v3844
    %v3846 = vand.u32 %v3845, 4294901760
    %3847 = vmatprep.subr.mxu0 %v3846
    %v3848 = vand.u32 %v186, 4294901760
    %v3849 = vsub.f32 %v186, %v3848
    %v3850 = vand.u32 %v3849, 4294901760
    %3851 = vmatpush1.msra.mxu0 %v3850
    %v3852 = vand.u32 %v189, 4294901760
    %v3853 = vsub.f32 %v189, %v3852
    %v3854 = vand.u32 %v3853, 4294901760
    %3855 = vmatprep.subr.mxu0 %v3854
    %v3856 = vand.u32 %v188, 4294901760
    %v3857 = vsub.f32 %v188, %v3856
    %v3858 = vand.u32 %v3857, 4294901760
    %3859 = vmatpush1.msra.mxu0 %v3858
    %v3860 = vand.u32 %v191, 4294901760
    %v3861 = vsub.f32 %v191, %v3860
    %v3862 = vand.u32 %v3861, 4294901760
    %3863 = vmatprep.subr.mxu0 %v3862
    %v3864 = vand.u32 %v190, 4294901760
    %v3865 = vsub.f32 %v190, %v3864
    %v3866 = vand.u32 %v3865, 4294901760
    %3867 = vmatpush1.msra.mxu0 %v3866
    %v3868 = vand.u32 %v193, 4294901760
    %v3869 = vsub.f32 %v193, %v3868
    %v3870 = vand.u32 %v3869, 4294901760
    %3871 = vmatprep.subr.mxu0 %v3870
    %v3872 = vand.u32 %v192, 4294901760
    %v3873 = vsub.f32 %v192, %v3872
    %v3874 = vand.u32 %v3873, 4294901760
    %3875 = vmatpush1.msra.mxu0 %v3874
    %v3876 = vand.u32 %v195, 4294901760
    %v3877 = vsub.f32 %v195, %v3876
    %v3878 = vand.u32 %v3877, 4294901760
    %3879 = vmatprep.subr.mxu0 %v3878
    %v3880 = vand.u32 %v194, 4294901760
    %v3881 = vsub.f32 %v194, %v3880
    %v3882 = vand.u32 %v3881, 4294901760
    %3883 = vmatpush1.msra.mxu0 %v3882
    %v3884 = vand.u32 %v197, 4294901760
    %v3885 = vsub.f32 %v197, %v3884
    %v3886 = vand.u32 %v3885, 4294901760
    %3887 = vmatprep.subr.mxu0 %v3886
    %v3888 = vand.u32 %v196, 4294901760
    %v3889 = vsub.f32 %v196, %v3888
    %v3890 = vand.u32 %v3889, 4294901760
    %3891 = vmatpush1.msra.mxu0 %v3890
    %v3892 = vand.u32 %v199, 4294901760
    %v3893 = vsub.f32 %v199, %v3892
    %v3894 = vand.u32 %v3893, 4294901760
    %3895 = vmatprep.subr.mxu0 %v3894
    %v3896 = vand.u32 %v198, 4294901760
    %v3897 = vsub.f32 %v198, %v3896
    %v3898 = vand.u32 %v3897, 4294901760
    %3899 = vmatpush1.msra.mxu0 %v3898
    %v3900 = vand.u32 %v201, 4294901760
    %v3901 = vsub.f32 %v201, %v3900
    %v3902 = vand.u32 %v3901, 4294901760
    %3903 = vmatprep.subr.mxu0 %v3902
    %v3904 = vand.u32 %v200, 4294901760
    %v3905 = vsub.f32 %v200, %v3904
    %v3906 = vand.u32 %v3905, 4294901760
    %3907 = vmatpush1.msra.mxu0 %v3906
    %v3908 = vand.u32 %v203, 4294901760
    %v3909 = vsub.f32 %v203, %v3908
    %v3910 = vand.u32 %v3909, 4294901760
    %3911 = vmatprep.subr.mxu0 %v3910
    %v3912 = vand.u32 %v202, 4294901760
    %v3913 = vsub.f32 %v202, %v3912
    %v3914 = vand.u32 %v3913, 4294901760
    %3915 = vmatpush1.msra.mxu0 %v3914
    %v3916 = vand.u32 %v205, 4294901760
    %v3917 = vsub.f32 %v205, %v3916
    %v3918 = vand.u32 %v3917, 4294901760
    %3919 = vmatprep.subr.mxu0 %v3918
    %v3920 = vand.u32 %v204, 4294901760
    %v3921 = vsub.f32 %v204, %v3920
    %v3922 = vand.u32 %v3921, 4294901760
    %3923 = vmatpush1.msra.mxu0 %v3922
    %v3924 = vand.u32 %v207, 4294901760
    %v3925 = vsub.f32 %v207, %v3924
    %v3926 = vand.u32 %v3925, 4294901760
    %3927 = vmatprep.subr.mxu0 %v3926
    %v3928 = vand.u32 %v206, 4294901760
    %v3929 = vsub.f32 %v206, %v3928
    %v3930 = vand.u32 %v3929, 4294901760
    %3931 = vmatpush1.msra.mxu0 %v3930
    %v3932 = vand.u32 %v209, 4294901760
    %v3933 = vsub.f32 %v209, %v3932
    %v3934 = vand.u32 %v3933, 4294901760
    %3935 = vmatprep.subr.mxu0 %v3934
    %v3936 = vand.u32 %v208, 4294901760
    %v3937 = vsub.f32 %v208, %v3936
    %v3938 = vand.u32 %v3937, 4294901760
    %3939 = vmatpush1.msra.mxu0 %v3938
    %v3940 = vand.u32 %v211, 4294901760
    %v3941 = vsub.f32 %v211, %v3940
    %v3942 = vand.u32 %v3941, 4294901760
    %3943 = vmatprep.subr.mxu0 %v3942
    %v3944 = vand.u32 %v210, 4294901760
    %v3945 = vsub.f32 %v210, %v3944
    %v3946 = vand.u32 %v3945, 4294901760
    %3947 = vmatpush1.msra.mxu0 %v3946
    %v3948 = vand.u32 %v213, 4294901760
    %v3949 = vsub.f32 %v213, %v3948
    %v3950 = vand.u32 %v3949, 4294901760
    %3951 = vmatprep.subr.mxu0 %v3950
    %v3952 = vand.u32 %v212, 4294901760
    %v3953 = vsub.f32 %v212, %v3952
    %v3954 = vand.u32 %v3953, 4294901760
    %3955 = vmatpush1.msra.mxu0 %v3954
    %v3956 = vand.u32 %v215, 4294901760
    %v3957 = vsub.f32 %v215, %v3956
    %v3958 = vand.u32 %v3957, 4294901760
    %3959 = vmatprep.subr.mxu0 %v3958
    %v3960 = vand.u32 %v214, 4294901760
    %v3961 = vsub.f32 %v214, %v3960
    %v3962 = vand.u32 %v3961, 4294901760
    %3963 = vmatpush1.msra.mxu0 %v3962
    %v3964 = vand.u32 %v217, 4294901760
    %v3965 = vsub.f32 %v217, %v3964
    %v3966 = vand.u32 %v3965, 4294901760
    %3967 = vmatprep.subr.mxu0 %v3966
    %v3968 = vand.u32 %v216, 4294901760
    %v3969 = vsub.f32 %v216, %v3968
    %v3970 = vand.u32 %v3969, 4294901760
    %3971 = vmatpush1.msra.mxu0 %v3970
    %v3972 = vand.u32 %v219, 4294901760
    %v3973 = vsub.f32 %v219, %v3972
    %v3974 = vand.u32 %v3973, 4294901760
    %3975 = vmatprep.subr.mxu0 %v3974
    %v3976 = vand.u32 %v218, 4294901760
    %v3977 = vsub.f32 %v218, %v3976
    %v3978 = vand.u32 %v3977, 4294901760
    %3979 = vmatpush1.msra.mxu0 %v3978
    %v3980 = vand.u32 %v221, 4294901760
    %v3981 = vsub.f32 %v221, %v3980
    %v3982 = vand.u32 %v3981, 4294901760
    %3983 = vmatprep.subr.mxu0 %v3982
    %v3984 = vand.u32 %v220, 4294901760
    %v3985 = vsub.f32 %v220, %v3984
    %v3986 = vand.u32 %v3985, 4294901760
    %3987 = vmatpush1.msra.mxu0 %v3986
    %v3988 = vand.u32 %v223, 4294901760
    %v3989 = vsub.f32 %v223, %v3988
    %v3990 = vand.u32 %v3989, 4294901760
    %3991 = vmatprep.subr.mxu0 %v3990
    %v3992 = vand.u32 %v222, 4294901760
    %v3993 = vsub.f32 %v222, %v3992
    %v3994 = vand.u32 %v3993, 4294901760
    %3995 = vmatpush1.msra.mxu0 %v3994
    %v3996 = vand.u32 %v225, 4294901760
    %v3997 = vsub.f32 %v225, %v3996
    %v3998 = vand.u32 %v3997, 4294901760
    %3999 = vmatprep.subr.mxu0 %v3998
    %v4000 = vand.u32 %v224, 4294901760
    %v4001 = vsub.f32 %v224, %v4000
    %v4002 = vand.u32 %v4001, 4294901760
    %4003 = vmatpush1.msra.mxu0 %v4002
    %v4004 = vand.u32 %v227, 4294901760
    %v4005 = vsub.f32 %v227, %v4004
    %v4006 = vand.u32 %v4005, 4294901760
    %4007 = vmatprep.subr.mxu0 %v4006
    %v4008 = vand.u32 %v226, 4294901760
    %v4009 = vsub.f32 %v226, %v4008
    %v4010 = vand.u32 %v4009, 4294901760
    %4011 = vmatpush1.msra.mxu0 %v4010
    %v4012 = vand.u32 %v229, 4294901760
    %v4013 = vsub.f32 %v229, %v4012
    %v4014 = vand.u32 %v4013, 4294901760
    %4015 = vmatprep.subr.mxu0 %v4014
    %v4016 = vand.u32 %v228, 4294901760
    %v4017 = vsub.f32 %v228, %v4016
    %v4018 = vand.u32 %v4017, 4294901760
    %4019 = vmatpush1.msra.mxu0 %v4018
    %v4020 = vand.u32 %v231, 4294901760
    %v4021 = vsub.f32 %v231, %v4020
    %v4022 = vand.u32 %v4021, 4294901760
    %4023 = vmatprep.subr.mxu0 %v4022
    %v4024 = vand.u32 %v230, 4294901760
    %v4025 = vsub.f32 %v230, %v4024
    %v4026 = vand.u32 %v4025, 4294901760
    %4027 = vmatpush1.msra.mxu0 %v4026
    %v4028 = vand.u32 %v233, 4294901760
    %v4029 = vsub.f32 %v233, %v4028
    %v4030 = vand.u32 %v4029, 4294901760
    %4031 = vmatprep.subr.mxu0 %v4030
    %v4032 = vand.u32 %v232, 4294901760
    %v4033 = vsub.f32 %v232, %v4032
    %v4034 = vand.u32 %v4033, 4294901760
    %4035 = vmatpush1.msra.mxu0 %v4034
    %v4036 = vand.u32 %v235, 4294901760
    %v4037 = vsub.f32 %v235, %v4036
    %v4038 = vand.u32 %v4037, 4294901760
    %4039 = vmatprep.subr.mxu0 %v4038
    %v4040 = vand.u32 %v234, 4294901760
    %v4041 = vsub.f32 %v234, %v4040
    %v4042 = vand.u32 %v4041, 4294901760
    %4043 = vmatpush1.msra.mxu0 %v4042
    %v4044 = vand.u32 %v237, 4294901760
    %v4045 = vsub.f32 %v237, %v4044
    %v4046 = vand.u32 %v4045, 4294901760
    %4047 = vmatprep.subr.mxu0 %v4046
    %v4048 = vand.u32 %v236, 4294901760
    %v4049 = vsub.f32 %v236, %v4048
    %v4050 = vand.u32 %v4049, 4294901760
    %4051 = vmatpush1.msra.mxu0 %v4050
    %v4052 = vand.u32 %v336, 4294901760
    %4053 = vmatprep.mubr.f32.mxu0 %v4052
    %v4054 = vand.u32 %v328, 4294901760
    %4055 = vmatmul.mubr.f32.gmra.mrb[0].mxu0 %v4054
    %v4056 = vpop.f32.mrb[0].mxu0
    %v4057 = vadd.f32 %v3792, %v4056
    %v4058 = vpop.f32.mrb[0].mxu0
    %v4059 = vadd.f32 %v3794, %v4058
    %4060 = vdwg.mxu0
    %v4061 = vand.u32 %v175, 4294901760
    %4062 = vmatprep.subr.mxu0 %v4061
    %v4063 = vand.u32 %v174, 4294901760
    %4064 = vmatpush1.msra.mxu0 %v4063
    %v4065 = vand.u32 %v177, 4294901760
    %4066 = vmatprep.subr.mxu0 %v4065
    %v4067 = vand.u32 %v176, 4294901760
    %4068 = vmatpush1.msra.mxu0 %v4067
    %v4069 = vand.u32 %v179, 4294901760
    %4070 = vmatprep.subr.mxu0 %v4069
    %v4071 = vand.u32 %v178, 4294901760
    %4072 = vmatpush1.msra.mxu0 %v4071
    %v4073 = vand.u32 %v181, 4294901760
    %4074 = vmatprep.subr.mxu0 %v4073
    %v4075 = vand.u32 %v180, 4294901760
    %4076 = vmatpush1.msra.mxu0 %v4075
    %v4077 = vand.u32 %v183, 4294901760
    %4078 = vmatprep.subr.mxu0 %v4077
    %v4079 = vand.u32 %v182, 4294901760
    %4080 = vmatpush1.msra.mxu0 %v4079
    %v4081 = vand.u32 %v185, 4294901760
    %4082 = vmatprep.subr.mxu0 %v4081
    %v4083 = vand.u32 %v184, 4294901760
    %4084 = vmatpush1.msra.mxu0 %v4083
    %v4085 = vand.u32 %v187, 4294901760
    %4086 = vmatprep.subr.mxu0 %v4085
    %v4087 = vand.u32 %v186, 4294901760
    %4088 = vmatpush1.msra.mxu0 %v4087
    %v4089 = vand.u32 %v189, 4294901760
    %4090 = vmatprep.subr.mxu0 %v4089
    %v4091 = vand.u32 %v188, 4294901760
    %4092 = vmatpush1.msra.mxu0 %v4091
    %v4093 = vand.u32 %v191, 4294901760
    %4094 = vmatprep.subr.mxu0 %v4093
    %v4095 = vand.u32 %v190, 4294901760
    %4096 = vmatpush1.msra.mxu0 %v4095
    %v4097 = vand.u32 %v193, 4294901760
    %4098 = vmatprep.subr.mxu0 %v4097
    %v4099 = vand.u32 %v192, 4294901760
    %4100 = vmatpush1.msra.mxu0 %v4099
    %v4101 = vand.u32 %v195, 4294901760
    %4102 = vmatprep.subr.mxu0 %v4101
    %v4103 = vand.u32 %v194, 4294901760
    %4104 = vmatpush1.msra.mxu0 %v4103
    %v4105 = vand.u32 %v197, 4294901760
    %4106 = vmatprep.subr.mxu0 %v4105
    %v4107 = vand.u32 %v196, 4294901760
    %4108 = vmatpush1.msra.mxu0 %v4107
    %v4109 = vand.u32 %v199, 4294901760
    %4110 = vmatprep.subr.mxu0 %v4109
    %v4111 = vand.u32 %v198, 4294901760
    %4112 = vmatpush1.msra.mxu0 %v4111
    %v4113 = vand.u32 %v201, 4294901760
    %4114 = vmatprep.subr.mxu0 %v4113
    %v4115 = vand.u32 %v200, 4294901760
    %4116 = vmatpush1.msra.mxu0 %v4115
    %v4117 = vand.u32 %v203, 4294901760
    %4118 = vmatprep.subr.mxu0 %v4117
    %v4119 = vand.u32 %v202, 4294901760
    %4120 = vmatpush1.msra.mxu0 %v4119
    %v4121 = vand.u32 %v205, 4294901760
    %4122 = vmatprep.subr.mxu0 %v4121
    %v4123 = vand.u32 %v204, 4294901760
    %4124 = vmatpush1.msra.mxu0 %v4123
    %v4125 = vand.u32 %v207, 4294901760
    %4126 = vmatprep.subr.mxu0 %v4125
    %v4127 = vand.u32 %v206, 4294901760
    %4128 = vmatpush1.msra.mxu0 %v4127
    %v4129 = vand.u32 %v209, 4294901760
    %4130 = vmatprep.subr.mxu0 %v4129
    %v4131 = vand.u32 %v208, 4294901760
    %4132 = vmatpush1.msra.mxu0 %v4131
    %v4133 = vand.u32 %v211, 4294901760
    %4134 = vmatprep.subr.mxu0 %v4133
    %v4135 = vand.u32 %v210, 4294901760
    %4136 = vmatpush1.msra.mxu0 %v4135
    %v4137 = vand.u32 %v213, 4294901760
    %4138 = vmatprep.subr.mxu0 %v4137
    %v4139 = vand.u32 %v212, 4294901760
    %4140 = vmatpush1.msra.mxu0 %v4139
    %v4141 = vand.u32 %v215, 4294901760
    %4142 = vmatprep.subr.mxu0 %v4141
    %v4143 = vand.u32 %v214, 4294901760
    %4144 = vmatpush1.msra.mxu0 %v4143
    %v4145 = vand.u32 %v217, 4294901760
    %4146 = vmatprep.subr.mxu0 %v4145
    %v4147 = vand.u32 %v216, 4294901760
    %4148 = vmatpush1.msra.mxu0 %v4147
    %v4149 = vand.u32 %v219, 4294901760
    %4150 = vmatprep.subr.mxu0 %v4149
    %v4151 = vand.u32 %v218, 4294901760
    %4152 = vmatpush1.msra.mxu0 %v4151
    %v4153 = vand.u32 %v221, 4294901760
    %4154 = vmatprep.subr.mxu0 %v4153
    %v4155 = vand.u32 %v220, 4294901760
    %4156 = vmatpush1.msra.mxu0 %v4155
    %v4157 = vand.u32 %v223, 4294901760
    %4158 = vmatprep.subr.mxu0 %v4157
    %v4159 = vand.u32 %v222, 4294901760
    %4160 = vmatpush1.msra.mxu0 %v4159
    %v4161 = vand.u32 %v225, 4294901760
    %4162 = vmatprep.subr.mxu0 %v4161
    %v4163 = vand.u32 %v224, 4294901760
    %4164 = vmatpush1.msra.mxu0 %v4163
    %v4165 = vand.u32 %v227, 4294901760
    %4166 = vmatprep.subr.mxu0 %v4165
    %v4167 = vand.u32 %v226, 4294901760
    %4168 = vmatpush1.msra.mxu0 %v4167
    %v4169 = vand.u32 %v229, 4294901760
    %4170 = vmatprep.subr.mxu0 %v4169
    %v4171 = vand.u32 %v228, 4294901760
    %4172 = vmatpush1.msra.mxu0 %v4171
    %v4173 = vand.u32 %v231, 4294901760
    %4174 = vmatprep.subr.mxu0 %v4173
    %v4175 = vand.u32 %v230, 4294901760
    %4176 = vmatpush1.msra.mxu0 %v4175
    %v4177 = vand.u32 %v233, 4294901760
    %4178 = vmatprep.subr.mxu0 %v4177
    %v4179 = vand.u32 %v232, 4294901760
    %4180 = vmatpush1.msra.mxu0 %v4179
    %v4181 = vand.u32 %v235, 4294901760
    %4182 = vmatprep.subr.mxu0 %v4181
    %v4183 = vand.u32 %v234, 4294901760
    %4184 = vmatpush1.msra.mxu0 %v4183
    %v4185 = vand.u32 %v237, 4294901760
    %4186 = vmatprep.subr.mxu0 %v4185
    %v4187 = vand.u32 %v236, 4294901760
    %4188 = vmatpush1.msra.mxu0 %v4187
    %v4189 = vand.u32 %v336, 4294901760
    %4190 = vmatprep.mubr.f32.mxu0 %v4189
    %v4191 = vand.u32 %v328, 4294901760
    %4192 = vmatmul.mubr.f32.gmra.mrb[0].mxu0 %v4191
    %v4193 = vpop.f32.mrb[0].mxu0
    %v4194 = vadd.f32 %v4057, %v4193
    %v4195 = vpop.f32.mrb[0].mxu0
    %v4196 = vadd.f32 %v4059, %v4195
    %4197 = vdwg.mxu0
    %v4198 = vand.u32 %v239, 4294901760
    %4199 = vmatprep.subr.mxu0 %v4198
    %v4200 = vand.u32 %v238, 4294901760
    %4201 = vmatpush1.msra.mxu0 %v4200
    %v4202 = vand.u32 %v241, 4294901760
    %4203 = vmatprep.subr.mxu0 %v4202
    %v4204 = vand.u32 %v240, 4294901760
    %4205 = vmatpush1.msra.mxu0 %v4204
    %v4206 = vand.u32 %v243, 4294901760
    %4207 = vmatprep.subr.mxu0 %v4206
    %v4208 = vand.u32 %v242, 4294901760
    %4209 = vmatpush1.msra.mxu0 %v4208
    %v4210 = vand.u32 %v245, 4294901760
    %4211 = vmatprep.subr.mxu0 %v4210
    %v4212 = vand.u32 %v244, 4294901760
    %4213 = vmatpush1.msra.mxu0 %v4212
    %v4214 = vand.u32 %v247, 4294901760
    %4215 = vmatprep.subr.mxu0 %v4214
    %v4216 = vand.u32 %v246, 4294901760
    %4217 = vmatpush1.msra.mxu0 %v4216
    %v4218 = vand.u32 %v249, 4294901760
    %4219 = vmatprep.subr.mxu0 %v4218
    %v4220 = vand.u32 %v248, 4294901760
    %4221 = vmatpush1.msra.mxu0 %v4220
    %v4222 = vand.u32 %v251, 4294901760
    %4223 = vmatprep.subr.mxu0 %v4222
    %v4224 = vand.u32 %v250, 4294901760
    %4225 = vmatpush1.msra.mxu0 %v4224
    %v4226 = vand.u32 %v253, 4294901760
    %4227 = vmatprep.subr.mxu0 %v4226
    %v4228 = vand.u32 %v252, 4294901760
    %4229 = vmatpush1.msra.mxu0 %v4228
    %v4230 = vand.u32 %v255, 4294901760
    %4231 = vmatprep.subr.mxu0 %v4230
    %v4232 = vand.u32 %v254, 4294901760
    %4233 = vmatpush1.msra.mxu0 %v4232
    %v4234 = vand.u32 %v257, 4294901760
    %4235 = vmatprep.subr.mxu0 %v4234
    %v4236 = vand.u32 %v256, 4294901760
    %4237 = vmatpush1.msra.mxu0 %v4236
    %v4238 = vand.u32 %v259, 4294901760
    %4239 = vmatprep.subr.mxu0 %v4238
    %v4240 = vand.u32 %v258, 4294901760
    %4241 = vmatpush1.msra.mxu0 %v4240
    %v4242 = vand.u32 %v261, 4294901760
    %4243 = vmatprep.subr.mxu0 %v4242
    %v4244 = vand.u32 %v260, 4294901760
    %4245 = vmatpush1.msra.mxu0 %v4244
    %v4246 = vand.u32 %v263, 4294901760
    %4247 = vmatprep.subr.mxu0 %v4246
    %v4248 = vand.u32 %v262, 4294901760
    %4249 = vmatpush1.msra.mxu0 %v4248
    %v4250 = vand.u32 %v265, 4294901760
    %4251 = vmatprep.subr.mxu0 %v4250
    %v4252 = vand.u32 %v264, 4294901760
    %4253 = vmatpush1.msra.mxu0 %v4252
    %v4254 = vand.u32 %v267, 4294901760
    %4255 = vmatprep.subr.mxu0 %v4254
    %v4256 = vand.u32 %v266, 4294901760
    %4257 = vmatpush1.msra.mxu0 %v4256
    %v4258 = vand.u32 %v269, 4294901760
    %4259 = vmatprep.subr.mxu0 %v4258
    %v4260 = vand.u32 %v268, 4294901760
    %4261 = vmatpush1.msra.mxu0 %v4260
    %v4262 = vand.u32 %v271, 4294901760
    %4263 = vmatprep.subr.mxu0 %v4262
    %v4264 = vand.u32 %v270, 4294901760
    %4265 = vmatpush1.msra.mxu0 %v4264
    %v4266 = vand.u32 %v273, 4294901760
    %4267 = vmatprep.subr.mxu0 %v4266
    %v4268 = vand.u32 %v272, 4294901760
    %4269 = vmatpush1.msra.mxu0 %v4268
    %v4270 = vand.u32 %v275, 4294901760
    %4271 = vmatprep.subr.mxu0 %v4270
    %v4272 = vand.u32 %v274, 4294901760
    %4273 = vmatpush1.msra.mxu0 %v4272
    %v4274 = vand.u32 %v277, 4294901760
    %4275 = vmatprep.subr.mxu0 %v4274
    %v4276 = vand.u32 %v276, 4294901760
    %4277 = vmatpush1.msra.mxu0 %v4276
    %v4278 = vand.u32 %v279, 4294901760
    %4279 = vmatprep.subr.mxu0 %v4278
    %v4280 = vand.u32 %v278, 4294901760
    %4281 = vmatpush1.msra.mxu0 %v4280
    %v4282 = vand.u32 %v281, 4294901760
    %4283 = vmatprep.subr.mxu0 %v4282
    %v4284 = vand.u32 %v280, 4294901760
    %4285 = vmatpush1.msra.mxu0 %v4284
    %v4286 = vand.u32 %v283, 4294901760
    %4287 = vmatprep.subr.mxu0 %v4286
    %v4288 = vand.u32 %v282, 4294901760
    %4289 = vmatpush1.msra.mxu0 %v4288
    %v4290 = vand.u32 %v285, 4294901760
    %4291 = vmatprep.subr.mxu0 %v4290
    %v4292 = vand.u32 %v284, 4294901760
    %4293 = vmatpush1.msra.mxu0 %v4292
    %v4294 = vand.u32 %v287, 4294901760
    %4295 = vmatprep.subr.mxu0 %v4294
    %v4296 = vand.u32 %v286, 4294901760
    %4297 = vmatpush1.msra.mxu0 %v4296
    %v4298 = vand.u32 %v289, 4294901760
    %4299 = vmatprep.subr.mxu0 %v4298
    %v4300 = vand.u32 %v288, 4294901760
    %4301 = vmatpush1.msra.mxu0 %v4300
    %v4302 = vand.u32 %v291, 4294901760
    %4303 = vmatprep.subr.mxu0 %v4302
    %v4304 = vand.u32 %v290, 4294901760
    %4305 = vmatpush1.msra.mxu0 %v4304
    %v4306 = vand.u32 %v293, 4294901760
    %4307 = vmatprep.subr.mxu0 %v4306
    %v4308 = vand.u32 %v292, 4294901760
    %4309 = vmatpush1.msra.mxu0 %v4308
    %v4310 = vand.u32 %v295, 4294901760
    %4311 = vmatprep.subr.mxu0 %v4310
    %v4312 = vand.u32 %v294, 4294901760
    %4313 = vmatpush1.msra.mxu0 %v4312
    %v4314 = vand.u32 %v297, 4294901760
    %4315 = vmatprep.subr.mxu0 %v4314
    %v4316 = vand.u32 %v296, 4294901760
    %4317 = vmatpush1.msra.mxu0 %v4316
    %v4318 = vand.u32 %v299, 4294901760
    %4319 = vmatprep.subr.mxu0 %v4318
    %v4320 = vand.u32 %v298, 4294901760
    %4321 = vmatpush1.msra.mxu0 %v4320
    %v4322 = vand.u32 %v301, 4294901760
    %4323 = vmatprep.subr.mxu0 %v4322
    %v4324 = vand.u32 %v300, 4294901760
    %4325 = vmatpush1.msra.mxu0 %v4324
    %v4326 = vand.u32 %v337, 4294901760
    %v4327 = vsub.f32 %v337, %v4326
    %v4328 = vand.u32 %v4327, 4294901760
    %v4329 = vsub.f32 %v4327, %v4328
    %v4330 = vand.u32 %v4329, 4294901760
    %4331 = vmatprep.mubr.f32.mxu0 %v4330
    %v4332 = vand.u32 %v335, 4294901760
    %v4333 = vsub.f32 %v335, %v4332
    %v4334 = vand.u32 %v4333, 4294901760
    %v4335 = vsub.f32 %v4333, %v4334
    %v4336 = vand.u32 %v4335, 4294901760
    %4337 = vmatmul.mubr.f32.gmra.mrb[0].mxu0 %v4336
    %v4338 = vpop.f32.mrb[0].mxu0
    %v4339 = vadd.f32 %v4194, %v4338
    %v4340 = vpop.f32.mrb[0].mxu0
    %v4341 = vadd.f32 %v4196, %v4340
    %4342 = vdwg.mxu0
    %v4343 = vand.u32 %v239, 4294901760
    %v4344 = vsub.f32 %v239, %v4343
    %v4345 = vand.u32 %v4344, 4294901760
    %v4346 = vsub.f32 %v4344, %v4345
    %v4347 = vand.u32 %v4346, 4294901760
    %4348 = vmatprep.subr.mxu0 %v4347
    %v4349 = vand.u32 %v238, 4294901760
    %v4350 = vsub.f32 %v238, %v4349
    %v4351 = vand.u32 %v4350, 4294901760
    %v4352 = vsub.f32 %v4350, %v4351
    %v4353 = vand.u32 %v4352, 4294901760
    %4354 = vmatpush1.msra.mxu0 %v4353
    %v4355 = vand.u32 %v241, 4294901760
    %v4356 = vsub.f32 %v241, %v4355
    %v4357 = vand.u32 %v4356, 4294901760
    %v4358 = vsub.f32 %v4356, %v4357
    %v4359 = vand.u32 %v4358, 4294901760
    %4360 = vmatprep.subr.mxu0 %v4359
    %v4361 = vand.u32 %v240, 4294901760
    %v4362 = vsub.f32 %v240, %v4361
    %v4363 = vand.u32 %v4362, 4294901760
    %v4364 = vsub.f32 %v4362, %v4363
    %v4365 = vand.u32 %v4364, 4294901760
    %4366 = vmatpush1.msra.mxu0 %v4365
    %v4367 = vand.u32 %v243, 4294901760
    %v4368 = vsub.f32 %v243, %v4367
    %v4369 = vand.u32 %v4368, 4294901760
    %v4370 = vsub.f32 %v4368, %v4369
    %v4371 = vand.u32 %v4370, 4294901760
    %4372 = vmatprep.subr.mxu0 %v4371
    %v4373 = vand.u32 %v242, 4294901760
    %v4374 = vsub.f32 %v242, %v4373
    %v4375 = vand.u32 %v4374, 4294901760
    %v4376 = vsub.f32 %v4374, %v4375
    %v4377 = vand.u32 %v4376, 4294901760
    %4378 = vmatpush1.msra.mxu0 %v4377
    %v4379 = vand.u32 %v245, 4294901760
    %v4380 = vsub.f32 %v245, %v4379
    %v4381 = vand.u32 %v4380, 4294901760
    %v4382 = vsub.f32 %v4380, %v4381
    %v4383 = vand.u32 %v4382, 4294901760
    %4384 = vmatprep.subr.mxu0 %v4383
    %v4385 = vand.u32 %v244, 4294901760
    %v4386 = vsub.f32 %v244, %v4385
    %v4387 = vand.u32 %v4386, 4294901760
    %v4388 = vsub.f32 %v4386, %v4387
    %v4389 = vand.u32 %v4388, 4294901760
    %4390 = vmatpush1.msra.mxu0 %v4389
    %v4391 = vand.u32 %v247, 4294901760
    %v4392 = vsub.f32 %v247, %v4391
    %v4393 = vand.u32 %v4392, 4294901760
    %v4394 = vsub.f32 %v4392, %v4393
    %v4395 = vand.u32 %v4394, 4294901760
    %4396 = vmatprep.subr.mxu0 %v4395
    %v4397 = vand.u32 %v246, 4294901760
    %v4398 = vsub.f32 %v246, %v4397
    %v4399 = vand.u32 %v4398, 4294901760
    %v4400 = vsub.f32 %v4398, %v4399
    %v4401 = vand.u32 %v4400, 4294901760
    %4402 = vmatpush1.msra.mxu0 %v4401
    %v4403 = vand.u32 %v249, 4294901760
    %v4404 = vsub.f32 %v249, %v4403
    %v4405 = vand.u32 %v4404, 4294901760
    %v4406 = vsub.f32 %v4404, %v4405
    %v4407 = vand.u32 %v4406, 4294901760
    %4408 = vmatprep.subr.mxu0 %v4407
    %v4409 = vand.u32 %v248, 4294901760
    %v4410 = vsub.f32 %v248, %v4409
    %v4411 = vand.u32 %v4410, 4294901760
    %v4412 = vsub.f32 %v4410, %v4411
    %v4413 = vand.u32 %v4412, 4294901760
    %4414 = vmatpush1.msra.mxu0 %v4413
    %v4415 = vand.u32 %v251, 4294901760
    %v4416 = vsub.f32 %v251, %v4415
    %v4417 = vand.u32 %v4416, 4294901760
    %v4418 = vsub.f32 %v4416, %v4417
    %v4419 = vand.u32 %v4418, 4294901760
    %4420 = vmatprep.subr.mxu0 %v4419
    %v4421 = vand.u32 %v250, 4294901760
    %v4422 = vsub.f32 %v250, %v4421
    %v4423 = vand.u32 %v4422, 4294901760
    %v4424 = vsub.f32 %v4422, %v4423
    %v4425 = vand.u32 %v4424, 4294901760
    %4426 = vmatpush1.msra.mxu0 %v4425
    %v4427 = vand.u32 %v253, 4294901760
    %v4428 = vsub.f32 %v253, %v4427
    %v4429 = vand.u32 %v4428, 4294901760
    %v4430 = vsub.f32 %v4428, %v4429
    %v4431 = vand.u32 %v4430, 4294901760
    %4432 = vmatprep.subr.mxu0 %v4431
    %v4433 = vand.u32 %v252, 4294901760
    %v4434 = vsub.f32 %v252, %v4433
    %v4435 = vand.u32 %v4434, 4294901760
    %v4436 = vsub.f32 %v4434, %v4435
    %v4437 = vand.u32 %v4436, 4294901760
    %4438 = vmatpush1.msra.mxu0 %v4437
    %v4439 = vand.u32 %v255, 4294901760
    %v4440 = vsub.f32 %v255, %v4439
    %v4441 = vand.u32 %v4440, 4294901760
    %v4442 = vsub.f32 %v4440, %v4441
    %v4443 = vand.u32 %v4442, 4294901760
    %4444 = vmatprep.subr.mxu0 %v4443
    %v4445 = vand.u32 %v254, 4294901760
    %v4446 = vsub.f32 %v254, %v4445
    %v4447 = vand.u32 %v4446, 4294901760
    %v4448 = vsub.f32 %v4446, %v4447
    %v4449 = vand.u32 %v4448, 4294901760
    %4450 = vmatpush1.msra.mxu0 %v4449
    %v4451 = vand.u32 %v257, 4294901760
    %v4452 = vsub.f32 %v257, %v4451
    %v4453 = vand.u32 %v4452, 4294901760
    %v4454 = vsub.f32 %v4452, %v4453
    %v4455 = vand.u32 %v4454, 4294901760
    %4456 = vmatprep.subr.mxu0 %v4455
    %v4457 = vand.u32 %v256, 4294901760
    %v4458 = vsub.f32 %v256, %v4457
    %v4459 = vand.u32 %v4458, 4294901760
    %v4460 = vsub.f32 %v4458, %v4459
    %v4461 = vand.u32 %v4460, 4294901760
    %4462 = vmatpush1.msra.mxu0 %v4461
    %v4463 = vand.u32 %v259, 4294901760
    %v4464 = vsub.f32 %v259, %v4463
    %v4465 = vand.u32 %v4464, 4294901760
    %v4466 = vsub.f32 %v4464, %v4465
    %v4467 = vand.u32 %v4466, 4294901760
    %4468 = vmatprep.subr.mxu0 %v4467
    %v4469 = vand.u32 %v258, 4294901760
    %v4470 = vsub.f32 %v258, %v4469
    %v4471 = vand.u32 %v4470, 4294901760
    %v4472 = vsub.f32 %v4470, %v4471
    %v4473 = vand.u32 %v4472, 4294901760
    %4474 = vmatpush1.msra.mxu0 %v4473
    %v4475 = vand.u32 %v261, 4294901760
    %v4476 = vsub.f32 %v261, %v4475
    %v4477 = vand.u32 %v4476, 4294901760
    %v4478 = vsub.f32 %v4476, %v4477
    %v4479 = vand.u32 %v4478, 4294901760
    %4480 = vmatprep.subr.mxu0 %v4479
    %v4481 = vand.u32 %v260, 4294901760
    %v4482 = vsub.f32 %v260, %v4481
    %v4483 = vand.u32 %v4482, 4294901760
    %v4484 = vsub.f32 %v4482, %v4483
    %v4485 = vand.u32 %v4484, 4294901760
    %4486 = vmatpush1.msra.mxu0 %v4485
    %v4487 = vand.u32 %v263, 4294901760
    %v4488 = vsub.f32 %v263, %v4487
    %v4489 = vand.u32 %v4488, 4294901760
    %v4490 = vsub.f32 %v4488, %v4489
    %v4491 = vand.u32 %v4490, 4294901760
    %4492 = vmatprep.subr.mxu0 %v4491
    %v4493 = vand.u32 %v262, 4294901760
    %v4494 = vsub.f32 %v262, %v4493
    %v4495 = vand.u32 %v4494, 4294901760
    %v4496 = vsub.f32 %v4494, %v4495
    %v4497 = vand.u32 %v4496, 4294901760
    %4498 = vmatpush1.msra.mxu0 %v4497
    %v4499 = vand.u32 %v265, 4294901760
    %v4500 = vsub.f32 %v265, %v4499
    %v4501 = vand.u32 %v4500, 4294901760
    %v4502 = vsub.f32 %v4500, %v4501
    %v4503 = vand.u32 %v4502, 4294901760
    %4504 = vmatprep.subr.mxu0 %v4503
    %v4505 = vand.u32 %v264, 4294901760
    %v4506 = vsub.f32 %v264, %v4505
    %v4507 = vand.u32 %v4506, 4294901760
    %v4508 = vsub.f32 %v4506, %v4507
    %v4509 = vand.u32 %v4508, 4294901760
    %4510 = vmatpush1.msra.mxu0 %v4509
    %v4511 = vand.u32 %v267, 4294901760
    %v4512 = vsub.f32 %v267, %v4511
    %v4513 = vand.u32 %v4512, 4294901760
    %v4514 = vsub.f32 %v4512, %v4513
    %v4515 = vand.u32 %v4514, 4294901760
    %4516 = vmatprep.subr.mxu0 %v4515
    %v4517 = vand.u32 %v266, 4294901760
    %v4518 = vsub.f32 %v266, %v4517
    %v4519 = vand.u32 %v4518, 4294901760
    %v4520 = vsub.f32 %v4518, %v4519
    %v4521 = vand.u32 %v4520, 4294901760
    %4522 = vmatpush1.msra.mxu0 %v4521
    %v4523 = vand.u32 %v269, 4294901760
    %v4524 = vsub.f32 %v269, %v4523
    %v4525 = vand.u32 %v4524, 4294901760
    %v4526 = vsub.f32 %v4524, %v4525
    %v4527 = vand.u32 %v4526, 4294901760
    %4528 = vmatprep.subr.mxu0 %v4527
    %v4529 = vand.u32 %v268, 4294901760
    %v4530 = vsub.f32 %v268, %v4529
    %v4531 = vand.u32 %v4530, 4294901760
    %v4532 = vsub.f32 %v4530, %v4531
    %v4533 = vand.u32 %v4532, 4294901760
    %4534 = vmatpush1.msra.mxu0 %v4533
    %v4535 = vand.u32 %v271, 4294901760
    %v4536 = vsub.f32 %v271, %v4535
    %v4537 = vand.u32 %v4536, 4294901760
    %v4538 = vsub.f32 %v4536, %v4537
    %v4539 = vand.u32 %v4538, 4294901760
    %4540 = vmatprep.subr.mxu0 %v4539
    %v4541 = vand.u32 %v270, 4294901760
    %v4542 = vsub.f32 %v270, %v4541
    %v4543 = vand.u32 %v4542, 4294901760
    %v4544 = vsub.f32 %v4542, %v4543
    %v4545 = vand.u32 %v4544, 4294901760
    %4546 = vmatpush1.msra.mxu0 %v4545
    %v4547 = vand.u32 %v273, 4294901760
    %v4548 = vsub.f32 %v273, %v4547
    %v4549 = vand.u32 %v4548, 4294901760
    %v4550 = vsub.f32 %v4548, %v4549
    %v4551 = vand.u32 %v4550, 4294901760
    %4552 = vmatprep.subr.mxu0 %v4551
    %v4553 = vand.u32 %v272, 4294901760
    %v4554 = vsub.f32 %v272, %v4553
    %v4555 = vand.u32 %v4554, 4294901760
    %v4556 = vsub.f32 %v4554, %v4555
    %v4557 = vand.u32 %v4556, 4294901760
    %4558 = vmatpush1.msra.mxu0 %v4557
    %v4559 = vand.u32 %v275, 4294901760
    %v4560 = vsub.f32 %v275, %v4559
    %v4561 = vand.u32 %v4560, 4294901760
    %v4562 = vsub.f32 %v4560, %v4561
    %v4563 = vand.u32 %v4562, 4294901760
    %4564 = vmatprep.subr.mxu0 %v4563
    %v4565 = vand.u32 %v274, 4294901760
    %v4566 = vsub.f32 %v274, %v4565
    %v4567 = vand.u32 %v4566, 4294901760
    %v4568 = vsub.f32 %v4566, %v4567
    %v4569 = vand.u32 %v4568, 4294901760
    %4570 = vmatpush1.msra.mxu0 %v4569
    %v4571 = vand.u32 %v277, 4294901760
    %v4572 = vsub.f32 %v277, %v4571
    %v4573 = vand.u32 %v4572, 4294901760
    %v4574 = vsub.f32 %v4572, %v4573
    %v4575 = vand.u32 %v4574, 4294901760
    %4576 = vmatprep.subr.mxu0 %v4575
    %v4577 = vand.u32 %v276, 4294901760
    %v4578 = vsub.f32 %v276, %v4577
    %v4579 = vand.u32 %v4578, 4294901760
    %v4580 = vsub.f32 %v4578, %v4579
    %v4581 = vand.u32 %v4580, 4294901760
    %4582 = vmatpush1.msra.mxu0 %v4581
    %v4583 = vand.u32 %v279, 4294901760
    %v4584 = vsub.f32 %v279, %v4583
    %v4585 = vand.u32 %v4584, 4294901760
    %v4586 = vsub.f32 %v4584, %v4585
    %v4587 = vand.u32 %v4586, 4294901760
    %4588 = vmatprep.subr.mxu0 %v4587
    %v4589 = vand.u32 %v278, 4294901760
    %v4590 = vsub.f32 %v278, %v4589
    %v4591 = vand.u32 %v4590, 4294901760
    %v4592 = vsub.f32 %v4590, %v4591
    %v4593 = vand.u32 %v4592, 4294901760
    %4594 = vmatpush1.msra.mxu0 %v4593
    %v4595 = vand.u32 %v281, 4294901760
    %v4596 = vsub.f32 %v281, %v4595
    %v4597 = vand.u32 %v4596, 4294901760
    %v4598 = vsub.f32 %v4596, %v4597
    %v4599 = vand.u32 %v4598, 4294901760
    %4600 = vmatprep.subr.mxu0 %v4599
    %v4601 = vand.u32 %v280, 4294901760
    %v4602 = vsub.f32 %v280, %v4601
    %v4603 = vand.u32 %v4602, 4294901760
    %v4604 = vsub.f32 %v4602, %v4603
    %v4605 = vand.u32 %v4604, 4294901760
    %4606 = vmatpush1.msra.mxu0 %v4605
    %v4607 = vand.u32 %v283, 4294901760
    %v4608 = vsub.f32 %v283, %v4607
    %v4609 = vand.u32 %v4608, 4294901760
    %v4610 = vsub.f32 %v4608, %v4609
    %v4611 = vand.u32 %v4610, 4294901760
    %4612 = vmatprep.subr.mxu0 %v4611
    %v4613 = vand.u32 %v282, 4294901760
    %v4614 = vsub.f32 %v282, %v4613
    %v4615 = vand.u32 %v4614, 4294901760
    %v4616 = vsub.f32 %v4614, %v4615
    %v4617 = vand.u32 %v4616, 4294901760
    %4618 = vmatpush1.msra.mxu0 %v4617
    %v4619 = vand.u32 %v285, 4294901760
    %v4620 = vsub.f32 %v285, %v4619
    %v4621 = vand.u32 %v4620, 4294901760
    %v4622 = vsub.f32 %v4620, %v4621
    %v4623 = vand.u32 %v4622, 4294901760
    %4624 = vmatprep.subr.mxu0 %v4623
    %v4625 = vand.u32 %v284, 4294901760
    %v4626 = vsub.f32 %v284, %v4625
    %v4627 = vand.u32 %v4626, 4294901760
    %v4628 = vsub.f32 %v4626, %v4627
    %v4629 = vand.u32 %v4628, 4294901760
    %4630 = vmatpush1.msra.mxu0 %v4629
    %v4631 = vand.u32 %v287, 4294901760
    %v4632 = vsub.f32 %v287, %v4631
    %v4633 = vand.u32 %v4632, 4294901760
    %v4634 = vsub.f32 %v4632, %v4633
    %v4635 = vand.u32 %v4634, 4294901760
    %4636 = vmatprep.subr.mxu0 %v4635
    %v4637 = vand.u32 %v286, 4294901760
    %v4638 = vsub.f32 %v286, %v4637
    %v4639 = vand.u32 %v4638, 4294901760
    %v4640 = vsub.f32 %v4638, %v4639
    %v4641 = vand.u32 %v4640, 4294901760
    %4642 = vmatpush1.msra.mxu0 %v4641
    %v4643 = vand.u32 %v289, 4294901760
    %v4644 = vsub.f32 %v289, %v4643
    %v4645 = vand.u32 %v4644, 4294901760
    %v4646 = vsub.f32 %v4644, %v4645
    %v4647 = vand.u32 %v4646, 4294901760
    %4648 = vmatprep.subr.mxu0 %v4647
    %v4649 = vand.u32 %v288, 4294901760
    %v4650 = vsub.f32 %v288, %v4649
    %v4651 = vand.u32 %v4650, 4294901760
    %v4652 = vsub.f32 %v4650, %v4651
    %v4653 = vand.u32 %v4652, 4294901760
    %4654 = vmatpush1.msra.mxu0 %v4653
    %v4655 = vand.u32 %v291, 4294901760
    %v4656 = vsub.f32 %v291, %v4655
    %v4657 = vand.u32 %v4656, 4294901760
    %v4658 = vsub.f32 %v4656, %v4657
    %v4659 = vand.u32 %v4658, 4294901760
    %4660 = vmatprep.subr.mxu0 %v4659
    %v4661 = vand.u32 %v290, 4294901760
    %v4662 = vsub.f32 %v290, %v4661
    %v4663 = vand.u32 %v4662, 4294901760
    %v4664 = vsub.f32 %v4662, %v4663
    %v4665 = vand.u32 %v4664, 4294901760
    %4666 = vmatpush1.msra.mxu0 %v4665
    %v4667 = vand.u32 %v293, 4294901760
    %v4668 = vsub.f32 %v293, %v4667
    %v4669 = vand.u32 %v4668, 4294901760
    %v4670 = vsub.f32 %v4668, %v4669
    %v4671 = vand.u32 %v4670, 4294901760
    %4672 = vmatprep.subr.mxu0 %v4671
    %v4673 = vand.u32 %v292, 4294901760
    %v4674 = vsub.f32 %v292, %v4673
    %v4675 = vand.u32 %v4674, 4294901760
    %v4676 = vsub.f32 %v4674, %v4675
    %v4677 = vand.u32 %v4676, 4294901760
    %4678 = vmatpush1.msra.mxu0 %v4677
    %v4679 = vand.u32 %v295, 4294901760
    %v4680 = vsub.f32 %v295, %v4679
    %v4681 = vand.u32 %v4680, 4294901760
    %v4682 = vsub.f32 %v4680, %v4681
    %v4683 = vand.u32 %v4682, 4294901760
    %4684 = vmatprep.subr.mxu0 %v4683
    %v4685 = vand.u32 %v294, 4294901760
    %v4686 = vsub.f32 %v294, %v4685
    %v4687 = vand.u32 %v4686, 4294901760
    %v4688 = vsub.f32 %v4686, %v4687
    %v4689 = vand.u32 %v4688, 4294901760
    %4690 = vmatpush1.msra.mxu0 %v4689
    %v4691 = vand.u32 %v297, 4294901760
    %v4692 = vsub.f32 %v297, %v4691
    %v4693 = vand.u32 %v4692, 4294901760
    %v4694 = vsub.f32 %v4692, %v4693
    %v4695 = vand.u32 %v4694, 4294901760
    %4696 = vmatprep.subr.mxu0 %v4695
    %v4697 = vand.u32 %v296, 4294901760
    %v4698 = vsub.f32 %v296, %v4697
    %v4699 = vand.u32 %v4698, 4294901760
    %v4700 = vsub.f32 %v4698, %v4699
    %v4701 = vand.u32 %v4700, 4294901760
    %4702 = vmatpush1.msra.mxu0 %v4701
    %v4703 = vand.u32 %v299, 4294901760
    %v4704 = vsub.f32 %v299, %v4703
    %v4705 = vand.u32 %v4704, 4294901760
    %v4706 = vsub.f32 %v4704, %v4705
    %v4707 = vand.u32 %v4706, 4294901760
    %4708 = vmatprep.subr.mxu0 %v4707
    %v4709 = vand.u32 %v298, 4294901760
    %v4710 = vsub.f32 %v298, %v4709
    %v4711 = vand.u32 %v4710, 4294901760
    %v4712 = vsub.f32 %v4710, %v4711
    %v4713 = vand.u32 %v4712, 4294901760
    %4714 = vmatpush1.msra.mxu0 %v4713
    %v4715 = vand.u32 %v301, 4294901760
    %v4716 = vsub.f32 %v301, %v4715
    %v4717 = vand.u32 %v4716, 4294901760
    %v4718 = vsub.f32 %v4716, %v4717
    %v4719 = vand.u32 %v4718, 4294901760
    %4720 = vmatprep.subr.mxu0 %v4719
    %v4721 = vand.u32 %v300, 4294901760
    %v4722 = vsub.f32 %v300, %v4721
    %v4723 = vand.u32 %v4722, 4294901760
    %v4724 = vsub.f32 %v4722, %v4723
    %v4725 = vand.u32 %v4724, 4294901760
    %4726 = vmatpush1.msra.mxu0 %v4725
    %v4727 = vand.u32 %v337, 4294901760
    %4728 = vmatprep.mubr.f32.mxu0 %v4727
    %v4729 = vand.u32 %v335, 4294901760
    %4730 = vmatmul.mubr.f32.gmra.mrb[0].mxu0 %v4729
    %v4731 = vpop.f32.mrb[0].mxu0
    %v4732 = vadd.f32 %v4339, %v4731
    %v4733 = vpop.f32.mrb[0].mxu0
    %v4734 = vadd.f32 %v4341, %v4733
    %4735 = vdwg.mxu0
    %v4736 = vand.u32 %v239, 4294901760
    %v4737 = vsub.f32 %v239, %v4736
    %4738 = vmatprep.subr.mxu0 %v4737
    %v4739 = vand.u32 %v238, 4294901760
    %v4740 = vsub.f32 %v238, %v4739
    %4741 = vmatpush1.msra.mxu0 %v4740
    %v4742 = vand.u32 %v241, 4294901760
    %v4743 = vsub.f32 %v241, %v4742
    %4744 = vmatprep.subr.mxu0 %v4743
    %v4745 = vand.u32 %v240, 4294901760
    %v4746 = vsub.f32 %v240, %v4745
    %4747 = vmatpush1.msra.mxu0 %v4746
    %v4748 = vand.u32 %v243, 4294901760
    %v4749 = vsub.f32 %v243, %v4748
    %4750 = vmatprep.subr.mxu0 %v4749
    %v4751 = vand.u32 %v242, 4294901760
    %v4752 = vsub.f32 %v242, %v4751
    %4753 = vmatpush1.msra.mxu0 %v4752
    %v4754 = vand.u32 %v245, 4294901760
    %v4755 = vsub.f32 %v245, %v4754
    %4756 = vmatprep.subr.mxu0 %v4755
    %v4757 = vand.u32 %v244, 4294901760
    %v4758 = vsub.f32 %v244, %v4757
    %4759 = vmatpush1.msra.mxu0 %v4758
    %v4760 = vand.u32 %v247, 4294901760
    %v4761 = vsub.f32 %v247, %v4760
    %4762 = vmatprep.subr.mxu0 %v4761
    %v4763 = vand.u32 %v246, 4294901760
    %v4764 = vsub.f32 %v246, %v4763
    %4765 = vmatpush1.msra.mxu0 %v4764
    %v4766 = vand.u32 %v249, 4294901760
    %v4767 = vsub.f32 %v249, %v4766
    %4768 = vmatprep.subr.mxu0 %v4767
    %v4769 = vand.u32 %v248, 4294901760
    %v4770 = vsub.f32 %v248, %v4769
    %4771 = vmatpush1.msra.mxu0 %v4770
    %v4772 = vand.u32 %v251, 4294901760
    %v4773 = vsub.f32 %v251, %v4772
    %4774 = vmatprep.subr.mxu0 %v4773
    %v4775 = vand.u32 %v250, 4294901760
    %v4776 = vsub.f32 %v250, %v4775
    %4777 = vmatpush1.msra.mxu0 %v4776
    %v4778 = vand.u32 %v253, 4294901760
    %v4779 = vsub.f32 %v253, %v4778
    %4780 = vmatprep.subr.mxu0 %v4779
    %v4781 = vand.u32 %v252, 4294901760
    %v4782 = vsub.f32 %v252, %v4781
    %4783 = vmatpush1.msra.mxu0 %v4782
    %v4784 = vand.u32 %v255, 4294901760
    %v4785 = vsub.f32 %v255, %v4784
    %4786 = vmatprep.subr.mxu0 %v4785
    %v4787 = vand.u32 %v254, 4294901760
    %v4788 = vsub.f32 %v254, %v4787
    %4789 = vmatpush1.msra.mxu0 %v4788
    %v4790 = vand.u32 %v257, 4294901760
    %v4791 = vsub.f32 %v257, %v4790
    %4792 = vmatprep.subr.mxu0 %v4791
    %v4793 = vand.u32 %v256, 4294901760
    %v4794 = vsub.f32 %v256, %v4793
    %4795 = vmatpush1.msra.mxu0 %v4794
    %v4796 = vand.u32 %v259, 4294901760
    %v4797 = vsub.f32 %v259, %v4796
    %4798 = vmatprep.subr.mxu0 %v4797
    %v4799 = vand.u32 %v258, 4294901760
    %v4800 = vsub.f32 %v258, %v4799
    %4801 = vmatpush1.msra.mxu0 %v4800
    %v4802 = vand.u32 %v261, 4294901760
    %v4803 = vsub.f32 %v261, %v4802
    %4804 = vmatprep.subr.mxu0 %v4803
    %v4805 = vand.u32 %v260, 4294901760
    %v4806 = vsub.f32 %v260, %v4805
    %4807 = vmatpush1.msra.mxu0 %v4806
    %v4808 = vand.u32 %v263, 4294901760
    %v4809 = vsub.f32 %v263, %v4808
    %4810 = vmatprep.subr.mxu0 %v4809
    %v4811 = vand.u32 %v262, 4294901760
    %v4812 = vsub.f32 %v262, %v4811
    %4813 = vmatpush1.msra.mxu0 %v4812
    %v4814 = vand.u32 %v265, 4294901760
    %v4815 = vsub.f32 %v265, %v4814
    %4816 = vmatprep.subr.mxu0 %v4815
    %v4817 = vand.u32 %v264, 4294901760
    %v4818 = vsub.f32 %v264, %v4817
    %4819 = vmatpush1.msra.mxu0 %v4818
    %v4820 = vand.u32 %v267, 4294901760
    %v4821 = vsub.f32 %v267, %v4820
    %4822 = vmatprep.subr.mxu0 %v4821
    %v4823 = vand.u32 %v266, 4294901760
    %v4824 = vsub.f32 %v266, %v4823
    %4825 = vmatpush1.msra.mxu0 %v4824
    %v4826 = vand.u32 %v269, 4294901760
    %v4827 = vsub.f32 %v269, %v4826
    %4828 = vmatprep.subr.mxu0 %v4827
    %v4829 = vand.u32 %v268, 4294901760
    %v4830 = vsub.f32 %v268, %v4829
    %4831 = vmatpush1.msra.mxu0 %v4830
    %v4832 = vand.u32 %v271, 4294901760
    %v4833 = vsub.f32 %v271, %v4832
    %4834 = vmatprep.subr.mxu0 %v4833
    %v4835 = vand.u32 %v270, 4294901760
    %v4836 = vsub.f32 %v270, %v4835
    %4837 = vmatpush1.msra.mxu0 %v4836
    %v4838 = vand.u32 %v273, 4294901760
    %v4839 = vsub.f32 %v273, %v4838
    %4840 = vmatprep.subr.mxu0 %v4839
    %v4841 = vand.u32 %v272, 4294901760
    %v4842 = vsub.f32 %v272, %v4841
    %4843 = vmatpush1.msra.mxu0 %v4842
    %v4844 = vand.u32 %v275, 4294901760
    %v4845 = vsub.f32 %v275, %v4844
    %4846 = vmatprep.subr.mxu0 %v4845
    %v4847 = vand.u32 %v274, 4294901760
    %v4848 = vsub.f32 %v274, %v4847
    %4849 = vmatpush1.msra.mxu0 %v4848
    %v4850 = vand.u32 %v277, 4294901760
    %v4851 = vsub.f32 %v277, %v4850
    %4852 = vmatprep.subr.mxu0 %v4851
    %v4853 = vand.u32 %v276, 4294901760
    %v4854 = vsub.f32 %v276, %v4853
    %4855 = vmatpush1.msra.mxu0 %v4854
    %v4856 = vand.u32 %v279, 4294901760
    %v4857 = vsub.f32 %v279, %v4856
    %4858 = vmatprep.subr.mxu0 %v4857
    %v4859 = vand.u32 %v278, 4294901760
    %v4860 = vsub.f32 %v278, %v4859
    %4861 = vmatpush1.msra.mxu0 %v4860
    %v4862 = vand.u32 %v281, 4294901760
    %v4863 = vsub.f32 %v281, %v4862
    %4864 = vmatprep.subr.mxu0 %v4863
    %v4865 = vand.u32 %v280, 4294901760
    %v4866 = vsub.f32 %v280, %v4865
    %4867 = vmatpush1.msra.mxu0 %v4866
    %v4868 = vand.u32 %v283, 4294901760
    %v4869 = vsub.f32 %v283, %v4868
    %4870 = vmatprep.subr.mxu0 %v4869
    %v4871 = vand.u32 %v282, 4294901760
    %v4872 = vsub.f32 %v282, %v4871
    %4873 = vmatpush1.msra.mxu0 %v4872
    %v4874 = vand.u32 %v285, 4294901760
    %v4875 = vsub.f32 %v285, %v4874
    %4876 = vmatprep.subr.mxu0 %v4875
    %v4877 = vand.u32 %v284, 4294901760
    %v4878 = vsub.f32 %v284, %v4877
    %4879 = vmatpush1.msra.mxu0 %v4878
    %v4880 = vand.u32 %v287, 4294901760
    %v4881 = vsub.f32 %v287, %v4880
    %4882 = vmatprep.subr.mxu0 %v4881
    %v4883 = vand.u32 %v286, 4294901760
    %v4884 = vsub.f32 %v286, %v4883
    %4885 = vmatpush1.msra.mxu0 %v4884
    %v4886 = vand.u32 %v289, 4294901760
    %v4887 = vsub.f32 %v289, %v4886
    %4888 = vmatprep.subr.mxu0 %v4887
    %v4889 = vand.u32 %v288, 4294901760
    %v4890 = vsub.f32 %v288, %v4889
    %4891 = vmatpush1.msra.mxu0 %v4890
    %v4892 = vand.u32 %v291, 4294901760
    %v4893 = vsub.f32 %v291, %v4892
    %4894 = vmatprep.subr.mxu0 %v4893
    %v4895 = vand.u32 %v290, 4294901760
    %v4896 = vsub.f32 %v290, %v4895
    %4897 = vmatpush1.msra.mxu0 %v4896
    %v4898 = vand.u32 %v293, 4294901760
    %v4899 = vsub.f32 %v293, %v4898
    %4900 = vmatprep.subr.mxu0 %v4899
    %v4901 = vand.u32 %v292, 4294901760
    %v4902 = vsub.f32 %v292, %v4901
    %4903 = vmatpush1.msra.mxu0 %v4902
    %v4904 = vand.u32 %v295, 4294901760
    %v4905 = vsub.f32 %v295, %v4904
    %4906 = vmatprep.subr.mxu0 %v4905
    %v4907 = vand.u32 %v294, 4294901760
    %v4908 = vsub.f32 %v294, %v4907
    %4909 = vmatpush1.msra.mxu0 %v4908
    %v4910 = vand.u32 %v297, 4294901760
    %v4911 = vsub.f32 %v297, %v4910
    %4912 = vmatprep.subr.mxu0 %v4911
    %v4913 = vand.u32 %v296, 4294901760
    %v4914 = vsub.f32 %v296, %v4913
    %4915 = vmatpush1.msra.mxu0 %v4914
    %v4916 = vand.u32 %v299, 4294901760
    %v4917 = vsub.f32 %v299, %v4916
    %4918 = vmatprep.subr.mxu0 %v4917
    %v4919 = vand.u32 %v298, 4294901760
    %v4920 = vsub.f32 %v298, %v4919
    %4921 = vmatpush1.msra.mxu0 %v4920
    %v4922 = vand.u32 %v301, 4294901760
    %v4923 = vsub.f32 %v301, %v4922
    %4924 = vmatprep.subr.mxu0 %v4923
    %v4925 = vand.u32 %v300, 4294901760
    %v4926 = vsub.f32 %v300, %v4925
    %4927 = vmatpush1.msra.mxu0 %v4926
    %v4928 = vand.u32 %v337, 4294901760
    %v4929 = vsub.f32 %v337, %v4928
    %4930 = vmatprep.mubr.f32.mxu0 %v4929
    %v4931 = vand.u32 %v335, 4294901760
    %v4932 = vsub.f32 %v335, %v4931
    %4933 = vmatmul.mubr.f32.gmra.mrb[0].mxu0 %v4932
    %v4934 = vpop.f32.mrb[0].mxu0
    %v4935 = vadd.f32 %v4732, %v4934
    %v4936 = vpop.f32.mrb[0].mxu0
    %v4937 = vadd.f32 %v4734, %v4936
    %4938 = vdwg.mxu0
    %v4939 = vand.u32 %v239, 4294901760
    %4940 = vmatprep.subr.mxu0 %v4939
    %v4941 = vand.u32 %v238, 4294901760
    %4942 = vmatpush1.msra.mxu0 %v4941
    %v4943 = vand.u32 %v241, 4294901760
    %4944 = vmatprep.subr.mxu0 %v4943
    %v4945 = vand.u32 %v240, 4294901760
    %4946 = vmatpush1.msra.mxu0 %v4945
    %v4947 = vand.u32 %v243, 4294901760
    %4948 = vmatprep.subr.mxu0 %v4947
    %v4949 = vand.u32 %v242, 4294901760
    %4950 = vmatpush1.msra.mxu0 %v4949
    %v4951 = vand.u32 %v245, 4294901760
    %4952 = vmatprep.subr.mxu0 %v4951
    %v4953 = vand.u32 %v244, 4294901760
    %4954 = vmatpush1.msra.mxu0 %v4953
    %v4955 = vand.u32 %v247, 4294901760
    %4956 = vmatprep.subr.mxu0 %v4955
    %v4957 = vand.u32 %v246, 4294901760
    %4958 = vmatpush1.msra.mxu0 %v4957
    %v4959 = vand.u32 %v249, 4294901760
    %4960 = vmatprep.subr.mxu0 %v4959
    %v4961 = vand.u32 %v248, 4294901760
    %4962 = vmatpush1.msra.mxu0 %v4961
    %v4963 = vand.u32 %v251, 4294901760
    %4964 = vmatprep.subr.mxu0 %v4963
    %v4965 = vand.u32 %v250, 4294901760
    %4966 = vmatpush1.msra.mxu0 %v4965
    %v4967 = vand.u32 %v253, 4294901760
    %4968 = vmatprep.subr.mxu0 %v4967
    %v4969 = vand.u32 %v252, 4294901760
    %4970 = vmatpush1.msra.mxu0 %v4969
    %v4971 = vand.u32 %v255, 4294901760
    %4972 = vmatprep.subr.mxu0 %v4971
    %v4973 = vand.u32 %v254, 4294901760
    %4974 = vmatpush1.msra.mxu0 %v4973
    %v4975 = vand.u32 %v257, 4294901760
    %4976 = vmatprep.subr.mxu0 %v4975
    %v4977 = vand.u32 %v256, 4294901760
    %4978 = vmatpush1.msra.mxu0 %v4977
    %v4979 = vand.u32 %v259, 4294901760
    %4980 = vmatprep.subr.mxu0 %v4979
    %v4981 = vand.u32 %v258, 4294901760
    %4982 = vmatpush1.msra.mxu0 %v4981
    %v4983 = vand.u32 %v261, 4294901760
    %4984 = vmatprep.subr.mxu0 %v4983
    %v4985 = vand.u32 %v260, 4294901760
    %4986 = vmatpush1.msra.mxu0 %v4985
    %v4987 = vand.u32 %v263, 4294901760
    %4988 = vmatprep.subr.mxu0 %v4987
    %v4989 = vand.u32 %v262, 4294901760
    %4990 = vmatpush1.msra.mxu0 %v4989
    %v4991 = vand.u32 %v265, 4294901760
    %4992 = vmatprep.subr.mxu0 %v4991
    %v4993 = vand.u32 %v264, 4294901760
    %4994 = vmatpush1.msra.mxu0 %v4993
    %v4995 = vand.u32 %v267, 4294901760
    %4996 = vmatprep.subr.mxu0 %v4995
    %v4997 = vand.u32 %v266, 4294901760
    %4998 = vmatpush1.msra.mxu0 %v4997
    %v4999 = vand.u32 %v269, 4294901760
    %5000 = vmatprep.subr.mxu0 %v4999
    %v5001 = vand.u32 %v268, 4294901760
    %5002 = vmatpush1.msra.mxu0 %v5001
    %v5003 = vand.u32 %v271, 4294901760
    %5004 = vmatprep.subr.mxu0 %v5003
    %v5005 = vand.u32 %v270, 4294901760
    %5006 = vmatpush1.msra.mxu0 %v5005
    %v5007 = vand.u32 %v273, 4294901760
    %5008 = vmatprep.subr.mxu0 %v5007
    %v5009 = vand.u32 %v272, 4294901760
    %5010 = vmatpush1.msra.mxu0 %v5009
    %v5011 = vand.u32 %v275, 4294901760
    %5012 = vmatprep.subr.mxu0 %v5011
    %v5013 = vand.u32 %v274, 4294901760
    %5014 = vmatpush1.msra.mxu0 %v5013
    %v5015 = vand.u32 %v277, 4294901760
    %5016 = vmatprep.subr.mxu0 %v5015
    %v5017 = vand.u32 %v276, 4294901760
    %5018 = vmatpush1.msra.mxu0 %v5017
    %v5019 = vand.u32 %v279, 4294901760
    %5020 = vmatprep.subr.mxu0 %v5019
    %v5021 = vand.u32 %v278, 4294901760
    %5022 = vmatpush1.msra.mxu0 %v5021
    %v5023 = vand.u32 %v281, 4294901760
    %5024 = vmatprep.subr.mxu0 %v5023
    %v5025 = vand.u32 %v280, 4294901760
    %5026 = vmatpush1.msra.mxu0 %v5025
    %v5027 = vand.u32 %v283, 4294901760
    %5028 = vmatprep.subr.mxu0 %v5027
    %v5029 = vand.u32 %v282, 4294901760
    %5030 = vmatpush1.msra.mxu0 %v5029
    %v5031 = vand.u32 %v285, 4294901760
    %5032 = vmatprep.subr.mxu0 %v5031
    %v5033 = vand.u32 %v284, 4294901760
    %5034 = vmatpush1.msra.mxu0 %v5033
    %v5035 = vand.u32 %v287, 4294901760
    %5036 = vmatprep.subr.mxu0 %v5035
    %v5037 = vand.u32 %v286, 4294901760
    %5038 = vmatpush1.msra.mxu0 %v5037
    %v5039 = vand.u32 %v289, 4294901760
    %5040 = vmatprep.subr.mxu0 %v5039
    %v5041 = vand.u32 %v288, 4294901760
    %5042 = vmatpush1.msra.mxu0 %v5041
    %v5043 = vand.u32 %v291, 4294901760
    %5044 = vmatprep.subr.mxu0 %v5043
    %v5045 = vand.u32 %v290, 4294901760
    %5046 = vmatpush1.msra.mxu0 %v5045
    %v5047 = vand.u32 %v293, 4294901760
    %5048 = vmatprep.subr.mxu0 %v5047
    %v5049 = vand.u32 %v292, 4294901760
    %5050 = vmatpush1.msra.mxu0 %v5049
    %v5051 = vand.u32 %v295, 4294901760
    %5052 = vmatprep.subr.mxu0 %v5051
    %v5053 = vand.u32 %v294, 4294901760
    %5054 = vmatpush1.msra.mxu0 %v5053
    %v5055 = vand.u32 %v297, 4294901760
    %5056 = vmatprep.subr.mxu0 %v5055
    %v5057 = vand.u32 %v296, 4294901760
    %5058 = vmatpush1.msra.mxu0 %v5057
    %v5059 = vand.u32 %v299, 4294901760
    %5060 = vmatprep.subr.mxu0 %v5059
    %v5061 = vand.u32 %v298, 4294901760
    %5062 = vmatpush1.msra.mxu0 %v5061
    %v5063 = vand.u32 %v301, 4294901760
    %5064 = vmatprep.subr.mxu0 %v5063
    %v5065 = vand.u32 %v300, 4294901760
    %5066 = vmatpush1.msra.mxu0 %v5065
    %v5067 = vand.u32 %v337, 4294901760
    %v5068 = vsub.f32 %v337, %v5067
    %v5069 = vand.u32 %v5068, 4294901760
    %5070 = vmatprep.mubr.f32.mxu0 %v5069
    %v5071 = vand.u32 %v335, 4294901760
    %v5072 = vsub.f32 %v335, %v5071
    %v5073 = vand.u32 %v5072, 4294901760
    %5074 = vmatmul.mubr.f32.gmra.mrb[0].mxu0 %v5073
    %v5075 = vpop.f32.mrb[0].mxu0
    %v5076 = vadd.f32 %v4935, %v5075
    %v5077 = vpop.f32.mrb[0].mxu0
    %v5078 = vadd.f32 %v4937, %v5077
    %5079 = vdwg.mxu0
    %v5080 = vand.u32 %v239, 4294901760
    %v5081 = vsub.f32 %v239, %v5080
    %v5082 = vand.u32 %v5081, 4294901760
    %5083 = vmatprep.subr.mxu0 %v5082
    %v5084 = vand.u32 %v238, 4294901760
    %v5085 = vsub.f32 %v238, %v5084
    %v5086 = vand.u32 %v5085, 4294901760
    %5087 = vmatpush1.msra.mxu0 %v5086
    %v5088 = vand.u32 %v241, 4294901760
    %v5089 = vsub.f32 %v241, %v5088
    %v5090 = vand.u32 %v5089, 4294901760
    %5091 = vmatprep.subr.mxu0 %v5090
    %v5092 = vand.u32 %v240, 4294901760
    %v5093 = vsub.f32 %v240, %v5092
    %v5094 = vand.u32 %v5093, 4294901760
    %5095 = vmatpush1.msra.mxu0 %v5094
    %v5096 = vand.u32 %v243, 4294901760
    %v5097 = vsub.f32 %v243, %v5096
    %v5098 = vand.u32 %v5097, 4294901760
    %5099 = vmatprep.subr.mxu0 %v5098
    %v5100 = vand.u32 %v242, 4294901760
    %v5101 = vsub.f32 %v242, %v5100
    %v5102 = vand.u32 %v5101, 4294901760
    %5103 = vmatpush1.msra.mxu0 %v5102
    %v5104 = vand.u32 %v245, 4294901760
    %v5105 = vsub.f32 %v245, %v5104
    %v5106 = vand.u32 %v5105, 4294901760
    %5107 = vmatprep.subr.mxu0 %v5106
    %v5108 = vand.u32 %v244, 4294901760
    %v5109 = vsub.f32 %v244, %v5108
    %v5110 = vand.u32 %v5109, 4294901760
    %5111 = vmatpush1.msra.mxu0 %v5110
    %v5112 = vand.u32 %v247, 4294901760
    %v5113 = vsub.f32 %v247, %v5112
    %v5114 = vand.u32 %v5113, 4294901760
    %5115 = vmatprep.subr.mxu0 %v5114
    %v5116 = vand.u32 %v246, 4294901760
    %v5117 = vsub.f32 %v246, %v5116
    %v5118 = vand.u32 %v5117, 4294901760
    %5119 = vmatpush1.msra.mxu0 %v5118
    %v5120 = vand.u32 %v249, 4294901760
    %v5121 = vsub.f32 %v249, %v5120
    %v5122 = vand.u32 %v5121, 4294901760
    %5123 = vmatprep.subr.mxu0 %v5122
    %v5124 = vand.u32 %v248, 4294901760
    %v5125 = vsub.f32 %v248, %v5124
    %v5126 = vand.u32 %v5125, 4294901760
    %5127 = vmatpush1.msra.mxu0 %v5126
    %v5128 = vand.u32 %v251, 4294901760
    %v5129 = vsub.f32 %v251, %v5128
    %v5130 = vand.u32 %v5129, 4294901760
    %5131 = vmatprep.subr.mxu0 %v5130
    %v5132 = vand.u32 %v250, 4294901760
    %v5133 = vsub.f32 %v250, %v5132
    %v5134 = vand.u32 %v5133, 4294901760
    %5135 = vmatpush1.msra.mxu0 %v5134
    %v5136 = vand.u32 %v253, 4294901760
    %v5137 = vsub.f32 %v253, %v5136
    %v5138 = vand.u32 %v5137, 4294901760
    %5139 = vmatprep.subr.mxu0 %v5138
    %v5140 = vand.u32 %v252, 4294901760
    %v5141 = vsub.f32 %v252, %v5140
    %v5142 = vand.u32 %v5141, 4294901760
    %5143 = vmatpush1.msra.mxu0 %v5142
    %v5144 = vand.u32 %v255, 4294901760
    %v5145 = vsub.f32 %v255, %v5144
    %v5146 = vand.u32 %v5145, 4294901760
    %5147 = vmatprep.subr.mxu0 %v5146
    %v5148 = vand.u32 %v254, 4294901760
    %v5149 = vsub.f32 %v254, %v5148
    %v5150 = vand.u32 %v5149, 4294901760
    %5151 = vmatpush1.msra.mxu0 %v5150
    %v5152 = vand.u32 %v257, 4294901760
    %v5153 = vsub.f32 %v257, %v5152
    %v5154 = vand.u32 %v5153, 4294901760
    %5155 = vmatprep.subr.mxu0 %v5154
    %v5156 = vand.u32 %v256, 4294901760
    %v5157 = vsub.f32 %v256, %v5156
    %v5158 = vand.u32 %v5157, 4294901760
    %5159 = vmatpush1.msra.mxu0 %v5158
    %v5160 = vand.u32 %v259, 4294901760
    %v5161 = vsub.f32 %v259, %v5160
    %v5162 = vand.u32 %v5161, 4294901760
    %5163 = vmatprep.subr.mxu0 %v5162
    %v5164 = vand.u32 %v258, 4294901760
    %v5165 = vsub.f32 %v258, %v5164
    %v5166 = vand.u32 %v5165, 4294901760
    %5167 = vmatpush1.msra.mxu0 %v5166
    %v5168 = vand.u32 %v261, 4294901760
    %v5169 = vsub.f32 %v261, %v5168
    %v5170 = vand.u32 %v5169, 4294901760
    %5171 = vmatprep.subr.mxu0 %v5170
    %v5172 = vand.u32 %v260, 4294901760
    %v5173 = vsub.f32 %v260, %v5172
    %v5174 = vand.u32 %v5173, 4294901760
    %5175 = vmatpush1.msra.mxu0 %v5174
    %v5176 = vand.u32 %v263, 4294901760
    %v5177 = vsub.f32 %v263, %v5176
    %v5178 = vand.u32 %v5177, 4294901760
    %5179 = vmatprep.subr.mxu0 %v5178
    %v5180 = vand.u32 %v262, 4294901760
    %v5181 = vsub.f32 %v262, %v5180
    %v5182 = vand.u32 %v5181, 4294901760
    %5183 = vmatpush1.msra.mxu0 %v5182
    %v5184 = vand.u32 %v265, 4294901760
    %v5185 = vsub.f32 %v265, %v5184
    %v5186 = vand.u32 %v5185, 4294901760
    %5187 = vmatprep.subr.mxu0 %v5186
    %v5188 = vand.u32 %v264, 4294901760
    %v5189 = vsub.f32 %v264, %v5188
    %v5190 = vand.u32 %v5189, 4294901760
    %5191 = vmatpush1.msra.mxu0 %v5190
    %v5192 = vand.u32 %v267, 4294901760
    %v5193 = vsub.f32 %v267, %v5192
    %v5194 = vand.u32 %v5193, 4294901760
    %5195 = vmatprep.subr.mxu0 %v5194
    %v5196 = vand.u32 %v266, 4294901760
    %v5197 = vsub.f32 %v266, %v5196
    %v5198 = vand.u32 %v5197, 4294901760
    %5199 = vmatpush1.msra.mxu0 %v5198
    %v5200 = vand.u32 %v269, 4294901760
    %v5201 = vsub.f32 %v269, %v5200
    %v5202 = vand.u32 %v5201, 4294901760
    %5203 = vmatprep.subr.mxu0 %v5202
    %v5204 = vand.u32 %v268, 4294901760
    %v5205 = vsub.f32 %v268, %v5204
    %v5206 = vand.u32 %v5205, 4294901760
    %5207 = vmatpush1.msra.mxu0 %v5206
    %v5208 = vand.u32 %v271, 4294901760
    %v5209 = vsub.f32 %v271, %v5208
    %v5210 = vand.u32 %v5209, 4294901760
    %5211 = vmatprep.subr.mxu0 %v5210
    %v5212 = vand.u32 %v270, 4294901760
    %v5213 = vsub.f32 %v270, %v5212
    %v5214 = vand.u32 %v5213, 4294901760
    %5215 = vmatpush1.msra.mxu0 %v5214
    %v5216 = vand.u32 %v273, 4294901760
    %v5217 = vsub.f32 %v273, %v5216
    %v5218 = vand.u32 %v5217, 4294901760
    %5219 = vmatprep.subr.mxu0 %v5218
    %v5220 = vand.u32 %v272, 4294901760
    %v5221 = vsub.f32 %v272, %v5220
    %v5222 = vand.u32 %v5221, 4294901760
    %5223 = vmatpush1.msra.mxu0 %v5222
    %v5224 = vand.u32 %v275, 4294901760
    %v5225 = vsub.f32 %v275, %v5224
    %v5226 = vand.u32 %v5225, 4294901760
    %5227 = vmatprep.subr.mxu0 %v5226
    %v5228 = vand.u32 %v274, 4294901760
    %v5229 = vsub.f32 %v274, %v5228
    %v5230 = vand.u32 %v5229, 4294901760
    %5231 = vmatpush1.msra.mxu0 %v5230
    %v5232 = vand.u32 %v277, 4294901760
    %v5233 = vsub.f32 %v277, %v5232
    %v5234 = vand.u32 %v5233, 4294901760
    %5235 = vmatprep.subr.mxu0 %v5234
    %v5236 = vand.u32 %v276, 4294901760
    %v5237 = vsub.f32 %v276, %v5236
    %v5238 = vand.u32 %v5237, 4294901760
    %5239 = vmatpush1.msra.mxu0 %v5238
    %v5240 = vand.u32 %v279, 4294901760
    %v5241 = vsub.f32 %v279, %v5240
    %v5242 = vand.u32 %v5241, 4294901760
    %5243 = vmatprep.subr.mxu0 %v5242
    %v5244 = vand.u32 %v278, 4294901760
    %v5245 = vsub.f32 %v278, %v5244
    %v5246 = vand.u32 %v5245, 4294901760
    %5247 = vmatpush1.msra.mxu0 %v5246
    %v5248 = vand.u32 %v281, 4294901760
    %v5249 = vsub.f32 %v281, %v5248
    %v5250 = vand.u32 %v5249, 4294901760
    %5251 = vmatprep.subr.mxu0 %v5250
    %v5252 = vand.u32 %v280, 4294901760
    %v5253 = vsub.f32 %v280, %v5252
    %v5254 = vand.u32 %v5253, 4294901760
    %5255 = vmatpush1.msra.mxu0 %v5254
    %v5256 = vand.u32 %v283, 4294901760
    %v5257 = vsub.f32 %v283, %v5256
    %v5258 = vand.u32 %v5257, 4294901760
    %5259 = vmatprep.subr.mxu0 %v5258
    %v5260 = vand.u32 %v282, 4294901760
    %v5261 = vsub.f32 %v282, %v5260
    %v5262 = vand.u32 %v5261, 4294901760
    %5263 = vmatpush1.msra.mxu0 %v5262
    %v5264 = vand.u32 %v285, 4294901760
    %v5265 = vsub.f32 %v285, %v5264
    %v5266 = vand.u32 %v5265, 4294901760
    %5267 = vmatprep.subr.mxu0 %v5266
    %v5268 = vand.u32 %v284, 4294901760
    %v5269 = vsub.f32 %v284, %v5268
    %v5270 = vand.u32 %v5269, 4294901760
    %5271 = vmatpush1.msra.mxu0 %v5270
    %v5272 = vand.u32 %v287, 4294901760
    %v5273 = vsub.f32 %v287, %v5272
    %v5274 = vand.u32 %v5273, 4294901760
    %5275 = vmatprep.subr.mxu0 %v5274
    %v5276 = vand.u32 %v286, 4294901760
    %v5277 = vsub.f32 %v286, %v5276
    %v5278 = vand.u32 %v5277, 4294901760
    %5279 = vmatpush1.msra.mxu0 %v5278
    %v5280 = vand.u32 %v289, 4294901760
    %v5281 = vsub.f32 %v289, %v5280
    %v5282 = vand.u32 %v5281, 4294901760
    %5283 = vmatprep.subr.mxu0 %v5282
    %v5284 = vand.u32 %v288, 4294901760
    %v5285 = vsub.f32 %v288, %v5284
    %v5286 = vand.u32 %v5285, 4294901760
    %5287 = vmatpush1.msra.mxu0 %v5286
    %v5288 = vand.u32 %v291, 4294901760
    %v5289 = vsub.f32 %v291, %v5288
    %v5290 = vand.u32 %v5289, 4294901760
    %5291 = vmatprep.subr.mxu0 %v5290
    %v5292 = vand.u32 %v290, 4294901760
    %v5293 = vsub.f32 %v290, %v5292
    %v5294 = vand.u32 %v5293, 4294901760
    %5295 = vmatpush1.msra.mxu0 %v5294
    %v5296 = vand.u32 %v293, 4294901760
    %v5297 = vsub.f32 %v293, %v5296
    %v5298 = vand.u32 %v5297, 4294901760
    %5299 = vmatprep.subr.mxu0 %v5298
    %v5300 = vand.u32 %v292, 4294901760
    %v5301 = vsub.f32 %v292, %v5300
    %v5302 = vand.u32 %v5301, 4294901760
    %5303 = vmatpush1.msra.mxu0 %v5302
    %v5304 = vand.u32 %v295, 4294901760
    %v5305 = vsub.f32 %v295, %v5304
    %v5306 = vand.u32 %v5305, 4294901760
    %5307 = vmatprep.subr.mxu0 %v5306
    %v5308 = vand.u32 %v294, 4294901760
    %v5309 = vsub.f32 %v294, %v5308
    %v5310 = vand.u32 %v5309, 4294901760
    %5311 = vmatpush1.msra.mxu0 %v5310
    %v5312 = vand.u32 %v297, 4294901760
    %v5313 = vsub.f32 %v297, %v5312
    %v5314 = vand.u32 %v5313, 4294901760
    %5315 = vmatprep.subr.mxu0 %v5314
    %v5316 = vand.u32 %v296, 4294901760
    %v5317 = vsub.f32 %v296, %v5316
    %v5318 = vand.u32 %v5317, 4294901760
    %5319 = vmatpush1.msra.mxu0 %v5318
    %v5320 = vand.u32 %v299, 4294901760
    %v5321 = vsub.f32 %v299, %v5320
    %v5322 = vand.u32 %v5321, 4294901760
    %5323 = vmatprep.subr.mxu0 %v5322
    %v5324 = vand.u32 %v298, 4294901760
    %v5325 = vsub.f32 %v298, %v5324
    %v5326 = vand.u32 %v5325, 4294901760
    %5327 = vmatpush1.msra.mxu0 %v5326
    %v5328 = vand.u32 %v301, 4294901760
    %v5329 = vsub.f32 %v301, %v5328
    %v5330 = vand.u32 %v5329, 4294901760
    %5331 = vmatprep.subr.mxu0 %v5330
    %v5332 = vand.u32 %v300, 4294901760
    %v5333 = vsub.f32 %v300, %v5332
    %v5334 = vand.u32 %v5333, 4294901760
    %5335 = vmatpush1.msra.mxu0 %v5334
    %v5336 = vand.u32 %v337, 4294901760
    %5337 = vmatprep.mubr.f32.mxu0 %v5336
    %v5338 = vand.u32 %v335, 4294901760
    %5339 = vmatmul.mubr.f32.gmra.mrb[0].mxu0 %v5338
    %v5340 = vpop.f32.mrb[0].mxu0
    %v5341 = vadd.f32 %v5076, %v5340
    %v5342 = vpop.f32.mrb[0].mxu0
    %v5343 = vadd.f32 %v5078, %v5342
    %5344 = vdwg.mxu0
    %v5345 = vand.u32 %v239, 4294901760
    %5346 = vmatprep.subr.mxu0 %v5345
    %v5347 = vand.u32 %v238, 4294901760
    %5348 = vmatpush1.msra.mxu0 %v5347
    %v5349 = vand.u32 %v241, 4294901760
    %5350 = vmatprep.subr.mxu0 %v5349
    %v5351 = vand.u32 %v240, 4294901760
    %5352 = vmatpush1.msra.mxu0 %v5351
    %v5353 = vand.u32 %v243, 4294901760
    %5354 = vmatprep.subr.mxu0 %v5353
    %v5355 = vand.u32 %v242, 4294901760
    %5356 = vmatpush1.msra.mxu0 %v5355
    %v5357 = vand.u32 %v245, 4294901760
    %5358 = vmatprep.subr.mxu0 %v5357
    %v5359 = vand.u32 %v244, 4294901760
    %5360 = vmatpush1.msra.mxu0 %v5359
    %v5361 = vand.u32 %v247, 4294901760
    %5362 = vmatprep.subr.mxu0 %v5361
    %v5363 = vand.u32 %v246, 4294901760
    %5364 = vmatpush1.msra.mxu0 %v5363
    %v5365 = vand.u32 %v249, 4294901760
    %5366 = vmatprep.subr.mxu0 %v5365
    %v5367 = vand.u32 %v248, 4294901760
    %5368 = vmatpush1.msra.mxu0 %v5367
    %v5369 = vand.u32 %v251, 4294901760
    %5370 = vmatprep.subr.mxu0 %v5369
    %v5371 = vand.u32 %v250, 4294901760
    %5372 = vmatpush1.msra.mxu0 %v5371
    %v5373 = vand.u32 %v253, 4294901760
    %5374 = vmatprep.subr.mxu0 %v5373
    %v5375 = vand.u32 %v252, 4294901760
    %5376 = vmatpush1.msra.mxu0 %v5375
    %v5377 = vand.u32 %v255, 4294901760
    %5378 = vmatprep.subr.mxu0 %v5377
    %v5379 = vand.u32 %v254, 4294901760
    %5380 = vmatpush1.msra.mxu0 %v5379
    %v5381 = vand.u32 %v257, 4294901760
    %5382 = vmatprep.subr.mxu0 %v5381
    %v5383 = vand.u32 %v256, 4294901760
    %5384 = vmatpush1.msra.mxu0 %v5383
    %v5385 = vand.u32 %v259, 4294901760
    %5386 = vmatprep.subr.mxu0 %v5385
    %v5387 = vand.u32 %v258, 4294901760
    %5388 = vmatpush1.msra.mxu0 %v5387
    %v5389 = vand.u32 %v261, 4294901760
    %5390 = vmatprep.subr.mxu0 %v5389
    %v5391 = vand.u32 %v260, 4294901760
    %5392 = vmatpush1.msra.mxu0 %v5391
    %v5393 = vand.u32 %v263, 4294901760
    %5394 = vmatprep.subr.mxu0 %v5393
    %v5395 = vand.u32 %v262, 4294901760
    %5396 = vmatpush1.msra.mxu0 %v5395
    %v5397 = vand.u32 %v265, 4294901760
    %5398 = vmatprep.subr.mxu0 %v5397
    %v5399 = vand.u32 %v264, 4294901760
    %5400 = vmatpush1.msra.mxu0 %v5399
    %v5401 = vand.u32 %v267, 4294901760
    %5402 = vmatprep.subr.mxu0 %v5401
    %v5403 = vand.u32 %v266, 4294901760
    %5404 = vmatpush1.msra.mxu0 %v5403
    %v5405 = vand.u32 %v269, 4294901760
    %5406 = vmatprep.subr.mxu0 %v5405
    %v5407 = vand.u32 %v268, 4294901760
    %5408 = vmatpush1.msra.mxu0 %v5407
    %v5409 = vand.u32 %v271, 4294901760
    %5410 = vmatprep.subr.mxu0 %v5409
    %v5411 = vand.u32 %v270, 4294901760
    %5412 = vmatpush1.msra.mxu0 %v5411
    %v5413 = vand.u32 %v273, 4294901760
    %5414 = vmatprep.subr.mxu0 %v5413
    %v5415 = vand.u32 %v272, 4294901760
    %5416 = vmatpush1.msra.mxu0 %v5415
    %v5417 = vand.u32 %v275, 4294901760
    %5418 = vmatprep.subr.mxu0 %v5417
    %v5419 = vand.u32 %v274, 4294901760
    %5420 = vmatpush1.msra.mxu0 %v5419
    %v5421 = vand.u32 %v277, 4294901760
    %5422 = vmatprep.subr.mxu0 %v5421
    %v5423 = vand.u32 %v276, 4294901760
    %5424 = vmatpush1.msra.mxu0 %v5423
    %v5425 = vand.u32 %v279, 4294901760
    %5426 = vmatprep.subr.mxu0 %v5425
    %v5427 = vand.u32 %v278, 4294901760
    %5428 = vmatpush1.msra.mxu0 %v5427
    %v5429 = vand.u32 %v281, 4294901760
    %5430 = vmatprep.subr.mxu0 %v5429
    %v5431 = vand.u32 %v280, 4294901760
    %5432 = vmatpush1.msra.mxu0 %v5431
    %v5433 = vand.u32 %v283, 4294901760
    %5434 = vmatprep.subr.mxu0 %v5433
    %v5435 = vand.u32 %v282, 4294901760
    %5436 = vmatpush1.msra.mxu0 %v5435
    %v5437 = vand.u32 %v285, 4294901760
    %5438 = vmatprep.subr.mxu0 %v5437
    %v5439 = vand.u32 %v284, 4294901760
    %5440 = vmatpush1.msra.mxu0 %v5439
    %v5441 = vand.u32 %v287, 4294901760
    %5442 = vmatprep.subr.mxu0 %v5441
    %v5443 = vand.u32 %v286, 4294901760
    %5444 = vmatpush1.msra.mxu0 %v5443
    %v5445 = vand.u32 %v289, 4294901760
    %5446 = vmatprep.subr.mxu0 %v5445
    %v5447 = vand.u32 %v288, 4294901760
    %5448 = vmatpush1.msra.mxu0 %v5447
    %v5449 = vand.u32 %v291, 4294901760
    %5450 = vmatprep.subr.mxu0 %v5449
    %v5451 = vand.u32 %v290, 4294901760
    %5452 = vmatpush1.msra.mxu0 %v5451
    %v5453 = vand.u32 %v293, 4294901760
    %5454 = vmatprep.subr.mxu0 %v5453
    %v5455 = vand.u32 %v292, 4294901760
    %5456 = vmatpush1.msra.mxu0 %v5455
    %v5457 = vand.u32 %v295, 4294901760
    %5458 = vmatprep.subr.mxu0 %v5457
    %v5459 = vand.u32 %v294, 4294901760
    %5460 = vmatpush1.msra.mxu0 %v5459
    %v5461 = vand.u32 %v297, 4294901760
    %5462 = vmatprep.subr.mxu0 %v5461
    %v5463 = vand.u32 %v296, 4294901760
    %5464 = vmatpush1.msra.mxu0 %v5463
    %v5465 = vand.u32 %v299, 4294901760
    %5466 = vmatprep.subr.mxu0 %v5465
    %v5467 = vand.u32 %v298, 4294901760
    %5468 = vmatpush1.msra.mxu0 %v5467
    %v5469 = vand.u32 %v301, 4294901760
    %5470 = vmatprep.subr.mxu0 %v5469
    %v5471 = vand.u32 %v300, 4294901760
    %5472 = vmatpush1.msra.mxu0 %v5471
    %v5473 = vand.u32 %v337, 4294901760
    %5474 = vmatprep.mubr.f32.mxu0 %v5473
    %v5475 = vand.u32 %v335, 4294901760
    %5476 = vmatmul.mubr.f32.gmra.mrb[0].mxu0 %v5475
    %v5477 = vpop.f32.mrb[0].mxu0
    %v5478 = vadd.f32 %v5341, %v5477
    %v5479 = vpop.f32.mrb[0].mxu0
    %v5480 = vadd.f32 %v5343, %v5479
    %5481 = vdwg.mxu0
    %v5482 = vld [vmem:[%s2] sm:$0x3]
    %v5484 = vlaneseq
    %v5485 = vshrl.u32 %v5484, 7
    %v5486 = vsub.s32 0, %v5485
    %v5487 = vrot.slane %v5482, %v5486
    %v5488 = vlaneseq
    %v5489 = vshrl.u32 %v5488, 7
    %v5490 = vsub.s32 1, %v5489
    %v5491 = vrot.slane %v5482, %v5490
    %v5494 = vmul.f32 %v5478, %v5487
    %v5495 = vmul.f32 %v5480, %v5491
    %v5496 = vld [vmem:[%s3] sm:$0x3]
    %v5498 = vlaneseq
    %v5499 = vshrl.u32 %v5498, 7
    %v5500 = vsub.s32 0, %v5499
    %v5501 = vrot.slane %v5496, %v5500
    %v5502 = vlaneseq
    %v5503 = vshrl.u32 %v5502, 7
    %v5504 = vsub.s32 1, %v5503
    %v5505 = vrot.slane %v5496, %v5504
    %v5508 = vadd.f32 %v5494, %v5501
    %v5509 = vadd.f32 %v5495, %v5505
    %v5512 = vcombine.low %v5508, %v5509
    %v5514 = vunpack.c.l.s4 1983009808
    %v5515 = vunpack.c.0.s8 %v5514
    %v5516 = vlaneseq
    %v5517 = vshrl.u32 %v5516, 7
    %v5518 = vsub.s32 %v5515, %v5517
    %v5519 = vrot.slane %v5512, %v5518
    %5521 = vst [vmem:[#allocation7] sm:$0xf] %v5519
    // Predicated region
    $region26: #{tpu_custom_call.1} parent=1 // pred_check
      _
    $region27: #{tpu_custom_call.1} parent=1 // pred_check_branch
      %5523 = sbr.rel (0) target = $region29
    $region28: #{tpu_custom_call.1} parent=1 // pred_region
      %s5525 = ssub.s32 64, 64
      %5526 = vsyncadd [#allocation4], %s5525
      %s5528 = sshll.u32 [#allocation7], 4
      %s5529 = int_to_ptr.vmem [resolvable:$true] %s5528
      %5531 = dma.vmem_to_hbm [thread:$0]  %s5529, 64, %s4, [#allocation4]
    $region29: #{tpu_custom_call.1} parent=1 // pred_fallthru
      _
    // Predicated region
    $region30: #{tpu_custom_call.1} parent=1 // pred_check
      _
    $region31: #{tpu_custom_call.1} parent=1 // pred_check_branch
      %5533 = sbr.rel (0) target = $region33
    $region32: #{tpu_custom_call.1} parent=1 // pred_region
      %5534 = dma.done [#allocation4], 64
    $region33: #{tpu_custom_call.1} parent=1 // pred_fallthru
      _
    %5535 = vsyncpa [#allocation3], 1
    %5536 = vsyncpa [#allocation6], 1
    %5537 = vsyncpa [#allocation4], 1

</llo_original>
